<compile_context>
chip_gen: v7x
topology: tpu7x:2x2x1
jax: 0.10.0
libtpu: 0.0.40
codegen_flags: <defaults>
</compile_context>

<pallas_src>
import functools

import jax
import jax.numpy as jnp
from jax import lax
from jax.experimental import pallas as pl
from jax.experimental.pallas import tpu as pltpu

EPS = 1e-5  # torch.nn.LayerNorm default eps


def _layernorm(h, gamma, beta):
    mu = jnp.mean(h, axis=-1, keepdims=True)
    var = jnp.mean(jnp.square(h - mu), axis=-1, keepdims=True)
    return (h - mu) * lax.rsqrt(var + EPS) * gamma + beta


# ---------------------------------------------------------------------------
# Fused kernel: input projection (layer 0 only) + one TransformerBlock per
# grid step along the layer axis.  Activation is carried in o_ref.
# ---------------------------------------------------------------------------
def _fused_block_kernel(x_ref, pw_ref, pb_ref,
                        wq_ref, wk_ref, wv_ref, wo_ref, bo_ref,
                        g1_ref, be1_ref, w1_ref, b1_ref, w2_ref, b2_ref,
                        g2_ref, be2_ref, o_ref, *, heads, head_dim, embed_size):
    H, D, E = heads, head_dim, embed_size
    l = pl.program_id(1)

    # Layer 0: initialize the carried activation with the input projection.
    @pl.when(l == 0)
    def _():
        o_ref[0] = (jnp.dot(x_ref[0], pw_ref[...],
                            preferred_element_type=jnp.float32)
                    + pb_ref[...]).astype(o_ref.dtype)

    h = o_ref[0]                                           # (S, E) activation

    # ---- multi-head self-attention (heads batched, no concat) ----
    # Q/K/V: lane-dense (S,E)@(E,E) matmuls with block-diagonal per-head
    # weights (same (D,D) weight replicated on the diagonal, built host-side).
    q2 = jnp.dot(h, wq_ref[0], preferred_element_type=jnp.float32)   # (S, E)
    k2 = jnp.dot(h, wk_ref[0], preferred_element_type=jnp.float32)
    v2 = jnp.dot(h, wv_ref[0], preferred_element_type=jnp.float32)

    def split_heads(t):          # (S, E) -> (H, S, D) via static lane slices
        return jnp.stack([t[:, i * D:(i + 1) * D] for i in range(H)], axis=0)

    q, k, v = split_heads(q2), split_heads(k2), split_heads(v2)

    scale = 1.0 / (E ** 0.5)     # PyTorch model scales by embed_size ** 0.5
    e = jnp.einsum('hqd,hkd->hqk', q, k,
                   preferred_element_type=jnp.float32) * scale        # (H,S,S)
    e = e - jnp.max(e, axis=-1, keepdims=True)
    p = jnp.exp(e)
    a = p * pl.reciprocal(jnp.sum(p, axis=-1, keepdims=True), approx=True)
    av = jnp.einsum('hqk,hkd->hqd', a, v,
                    preferred_element_type=jnp.float32)               # (H,S,D)
    # Fold the output projection per head and reduce over heads
    # (wo_ref[0] is wo.T reshaped to (H, D, E) on the host).
    attn = jnp.einsum('hqd,hde->hqe', av, wo_ref[0],
                      preferred_element_type=jnp.float32).sum(axis=0) \
        + bo_ref[0]                                                    # (S, E)

    # residual + LayerNorm 1   (dropout = identity at inference)
    x1 = _layernorm(attn + h, g1_ref[0], be1_ref[0])

    # feed forward: Linear -> ReLU -> Linear  (weights pre-transposed host-side)
    ff = jnp.maximum(jnp.dot(x1, w1_ref[0],
                             preferred_element_type=jnp.float32) + b1_ref[0], 0.0)
    ff = jnp.dot(ff, w2_ref[0], preferred_element_type=jnp.float32) + b2_ref[0]

    # residual + LayerNorm 2 -> carry for next layer / final output
    o_ref[0] = _layernorm(ff + x1, g2_ref[0], be2_ref[0]).astype(o_ref.dtype)


def fused_transformer_pallas(x, kp, *, heads, embed_size):
    N, S, In = x.shape
    E = embed_size
    H = heads
    D = E // H
    L = kp['wq_bd'].shape[0]
    F = kp['w1T'].shape[2]

    batch3 = lambda n, l: (n, 0, 0)
    layer3 = lambda n, l: (l, 0, 0)
    layer4 = lambda n, l: (l, 0, 0, 0)
    const2 = lambda n, l: (0, 0)

    in_specs = [
        pl.BlockSpec((1, S, In), batch3),          # raw input x
        pl.BlockSpec((In, E), const2),             # proj_wT (in, out)
        pl.BlockSpec((1, E), const2),              # proj_b
        pl.BlockSpec((1, E, E), layer3),           # wq block-diag
        pl.BlockSpec((1, E, E), layer3),           # wk block-diag
        pl.BlockSpec((1, E, E), layer3),           # wv block-diag
        pl.BlockSpec((1, H, D, E), layer4),        # wo (per-head folded)
        pl.BlockSpec((1, 1, E), layer3),           # bo
        pl.BlockSpec((1, 1, E), layer3),           # ln1 gamma
        pl.BlockSpec((1, 1, E), layer3),           # ln1 beta
        pl.BlockSpec((1, E, F), layer3),           # w1T (in, out)
        pl.BlockSpec((1, 1, F), layer3),           # b1
        pl.BlockSpec((1, F, E), layer3),           # w2T (in, out)
        pl.BlockSpec((1, 1, E), layer3),           # b2
        pl.BlockSpec((1, 1, E), layer3),           # ln2 gamma
        pl.BlockSpec((1, 1, E), layer3),           # ln2 beta
    ]

    kernel = functools.partial(_fused_block_kernel,
                               heads=H, head_dim=D, embed_size=E)

    return pl.pallas_call(
        kernel,
        out_shape=jax.ShapeDtypeStruct((N, S, E), jnp.float32),
        grid=(N, L),
        in_specs=in_specs,
        out_specs=pl.BlockSpec((1, S, E), batch3),   # same block across l -> carry
        compiler_params=pltpu.CompilerParams(
            dimension_semantics=("parallel", "arbitrary")),
    )(x, kp['proj_wT'], kp['proj_b'],
      kp['wq_bd'], kp['wk_bd'], kp['wv_bd'],
      kp['wo_h'], kp['bo'], kp['g1'], kp['be1'],
      kp['w1T'], kp['b1'], kp['w2T'], kp['b2'], kp['g2'], kp['be2'])


# ---------------------------------------------------------------------------
# Tiled linear (fc_out):  y = x @ wT + b, K-pipelined with f32 accumulator.
# ---------------------------------------------------------------------------
def _linear_kernel(x_ref, w_ref, b_ref, o_ref, acc_ref):
    @pl.when(pl.program_id(2) == 0)
    def _():
        acc_ref[...] = jnp.zeros_like(acc_ref)

    acc_ref[...] += jnp.dot(x_ref[...], w_ref[...],
                            preferred_element_type=jnp.float32)

    @pl.when(pl.program_id(2) == pl.num_programs(2) - 1)
    def _():
        o_ref[...] = (acc_ref[...] + b_ref[...]).astype(o_ref.dtype)


def linear_pallas(x2d, wT, b, *, tk=512):
    M, K = x2d.shape
    O = wT.shape[1]
    tk = tk if (K >= tk and K % tk == 0) else K
    tm, tn = M, O
    return pl.pallas_call(
        _linear_kernel,
        out_shape=jax.ShapeDtypeStruct((M, O), jnp.float32),
        grid=(M // tm, O // tn, K // tk),
        in_specs=[pl.BlockSpec((tm, tk), lambda i, j, k: (i, k)),
                  pl.BlockSpec((tk, tn), lambda i, j, k: (k, j)),
                  pl.BlockSpec((1, tn), lambda i, j, k: (0, j))],
        out_specs=pl.BlockSpec((tm, tn), lambda i, j, k: (i, j)),
        scratch_shapes=[pltpu.VMEM((tm, tn), jnp.float32)],
        compiler_params=pltpu.CompilerParams(
            dimension_semantics=("parallel", "parallel", "arbitrary")),
    )(x2d, wT, b)


# ---------------------------------------------------------------------------
# Parameters (PyTorch-style) + host-side repacking for the kernels
# ---------------------------------------------------------------------------
def init_params(key, input_dim, embed_size, num_layers, heads,
                forward_expansion, max_length, num_classes):
    D = embed_size // heads
    F = forward_expansion * embed_size

    def w(k, shape, scale=0.05):
        return (scale * jax.random.normal(k, shape)).astype(jnp.float32)

    keys = jax.random.split(key, 2 + num_layers)
    params = {
        'proj_w': w(keys[0], (embed_size, input_dim)),
        'proj_b': jnp.zeros((embed_size,), jnp.float32),
        'fc_w': w(keys[1], (num_classes, max_length * embed_size)),
        'fc_b': jnp.zeros((num_classes,), jnp.float32),
        'layers': [],
    }
    for l in range(num_layers):
        lk = jax.random.split(keys[2 + l], 8)
        params['layers'].append({
            'wq': w(lk[0], (D, D)), 'wk': w(lk[1], (D, D)), 'wv': w(lk[2], (D, D)),
            'wo': w(lk[3], (embed_size, embed_size)),
            'bo': w(lk[4], (embed_size,)),
            'g1': jnp.ones((embed_size,), jnp.float32),
            'be1': jnp.zeros((embed_size,), jnp.float32),
            'w1': w(lk[5], (F, embed_size)),
            'b1': w(lk[6], (F,)),
            'w2': w(lk[7], (embed_size, F)),
            'b2': jnp.zeros((embed_size,), jnp.float32),
            'g2': jnp.ones((embed_size,), jnp.float32),
            'be2': jnp.zeros((embed_size,), jnp.float32),
        })
    return params


def prepare_kernel_params(params, heads):
    """Host-side, one-time weight repacking: pre-transpose ((in,out) layout),
    block-diagonalize the shared per-head Q/K/V weights, fold wo per head,
    and stack all per-layer tensors along a leading layer axis."""
    E = params['proj_w'].shape[0]
    D = E // heads
    eyeH = jnp.eye(heads, dtype=jnp.float32)

    def stack(fn):
        return jnp.stack([fn(lp) for lp in params['layers']], axis=0)

    return {
        'proj_wT': params['proj_w'].T,                                  # (In, E)
        'proj_b': params['proj_b'].reshape(1, E),
        'wq_bd': stack(lambda lp: jnp.kron(eyeH, lp['wq'].T)),          # (L, E, E)
        'wk_bd': stack(lambda lp: jnp.kron(eyeH, lp['wk'].T)),
        'wv_bd': stack(lambda lp: jnp.kron(eyeH, lp['wv'].T)),
        'wo_h': stack(lambda lp: lp['wo'].T.reshape(heads, D, E)),      # (L, H, D, E)
        'bo': stack(lambda lp: lp['bo'].reshape(1, E)),
        'g1': stack(lambda lp: lp['g1'].reshape(1, E)),
        'be1': stack(lambda lp: lp['be1'].reshape(1, E)),
        'w1T': stack(lambda lp: lp['w1'].T),                            # (L, E, F)
        'b1': stack(lambda lp: lp['b1'].reshape(1, -1)),
        'w2T': stack(lambda lp: lp['w2'].T),                            # (L, F, E)
        'b2': stack(lambda lp: lp['b2'].reshape(1, E)),
        'g2': stack(lambda lp: lp['g2'].reshape(1, E)),
        'be2': stack(lambda lp: lp['be2'].reshape(1, E)),
        'fc_wT': params['fc_w'].T,                                      # (S*E, C)
        'fc_b': params['fc_b'].reshape(1, -1),
    }


def classifier_forward(params, x, *, heads):
    N, S, _ = x.shape
    E = params['proj_w'].shape[0]
    kp = prepare_kernel_params(params, heads)
    h = fused_transformer_pallas(x, kp, heads=heads, embed_size=E)   # (N, S, E)
    flat = h.reshape(N, S * E)
    # final dropout is identity at inference
    return linear_pallas(flat, kp['fc_wT'], kp['fc_b'])


# ---------------------------------------------------------------------------
# Pure-JAX reference (mirrors the PyTorch forward) for verification
# ---------------------------------------------------------------------------
def classifier_ref(params, x, heads):
    def linear(y, w, b):
        return y @ w.T + b

    def ln(h, g, b):
        mu = h.mean(-1, keepdims=True)
        var = ((h - mu) ** 2).mean(-1, keepdims=True)
        return (h - mu) / jnp.sqrt(var + EPS) * g + b

    N, S, _ = x.shape
    E = params['proj_w'].shape[0]
    D = E // heads
    h = linear(x, params['proj_w'], params['proj_b'])
    for lp in params['layers']:
        xh = h.reshape(N, S, heads, D)
        q = jnp.einsum('nshd,od->nsho', xh, lp['wq'])
        k = jnp.einsum('nshd,od->nsho', xh, lp['wk'])
        v = jnp.einsum('nshd,od->nsho', xh, lp['wv'])
        energy = jnp.einsum('nqhd,nkhd->nhqk', q, k) / (E ** 0.5)
        attn = jax.nn.softmax(energy, axis=-1)
        out = jnp.einsum('nhql,nlhd->nqhd', attn, v).reshape(N, S, E)
        out = linear(out, lp['wo'], lp['bo'])
        x1 = ln(out + h, lp['g1'], lp['be1'])
        ff = jax.nn.relu(linear(x1, lp['w1'], lp['b1']))
        ff = linear(ff, lp['w2'], lp['b2'])
        h = ln(ff + x1, lp['g2'], lp['be2'])
    return linear(h.reshape(N, S * E), params['fc_w'], params['fc_b'])


if __name__ == "__main__":
    import numpy as np

    # Small, shape-consistent config (seq == max_length); E=128 keeps the
    # carried activation block lane-dense.
    N, S = 2, 8
    input_dim, embed_size, num_layers, heads = 16, 128, 2, 4
    forward_expansion, num_classes = 4, 8

    key = jax.random.PRNGKey(0)
    kx, kparam = jax.random.split(key)
    x = jax.random.normal(kx, (N, S, input_dim), dtype=jnp.float32)
    params = init_params(kparam, input_dim, embed_size, num_layers, heads,
                         forward_expansion, S, num_classes)

    fwd = jax.jit(functools.partial(classifier_forward, heads=heads))
    out = jax.block_until_ready(fwd(params, x))

    ref = classifier_ref(params, x, heads)
    # Tolerance accounts for the approximate (EUP) softmax reciprocal.
    np.testing.assert_allclose(np.asarray(out), np.asarray(ref),
                               rtol=1e-2, atol=1e-2)
    print("KERNEL_OK")
</pallas_src>

<mosaic_0001>
module attributes {stable_mosaic.version = 11 : i64} {
  func.func @_fused_block_kernel(%arg0: i32, %arg1: i32, %arg2: memref<1x8x16xf32, #tpu.memory_space<vmem>>, %arg3: memref<16x128xf32, #tpu.memory_space<vmem>>, %arg4: memref<1x128xf32, #tpu.memory_space<vmem>>, %arg5: memref<1x128x128xf32, #tpu.memory_space<vmem>>, %arg6: memref<1x128x128xf32, #tpu.memory_space<vmem>>, %arg7: memref<1x128x128xf32, #tpu.memory_space<vmem>>, %arg8: memref<1x4x32x128xf32, #tpu.memory_space<vmem>>, %arg9: memref<1x1x128xf32, #tpu.memory_space<vmem>>, %arg10: memref<1x1x128xf32, #tpu.memory_space<vmem>>, %arg11: memref<1x1x128xf32, #tpu.memory_space<vmem>>, %arg12: memref<1x128x512xf32, #tpu.memory_space<vmem>>, %arg13: memref<1x1x512xf32, #tpu.memory_space<vmem>>, %arg14: memref<1x512x128xf32, #tpu.memory_space<vmem>>, %arg15: memref<1x1x128xf32, #tpu.memory_space<vmem>>, %arg16: memref<1x1x128xf32, #tpu.memory_space<vmem>>, %arg17: memref<1x1x128xf32, #tpu.memory_space<vmem>>, %arg18: memref<1x8x128xf32, #tpu.memory_space<vmem>>) attributes {dimension_semantics = [#tpu.dimension_semantics<parallel>, #tpu.dimension_semantics<arbitrary>], iteration_bounds = array<i64: 2, 2>, scalar_prefetch = 0 : i64, scratch_operands = 0 : i64, tpu.core_type = #tpu.core_type<tc>, window_params = [{transform_indices = @transform_0, window_bounds = array<i64: 1, 8, 16>}, {pipeline_mode = #tpu.pipeline_mode<synchronous>, transform_indices = @transform_1, window_bounds = array<i64: 16, 128>}, {pipeline_mode = #tpu.pipeline_mode<synchronous>, transform_indices = @transform_2, window_bounds = array<i64: 1, 128>}, {transform_indices = @transform_3, window_bounds = array<i64: 1, 128, 128>}, {transform_indices = @transform_4, window_bounds = array<i64: 1, 128, 128>}, {transform_indices = @transform_5, window_bounds = array<i64: 1, 128, 128>}, {transform_indices = @transform_6, window_bounds = array<i64: 1, 4, 32, 128>}, {transform_indices = @transform_7, window_bounds = array<i64: 1, 1, 128>}, {transform_indices = @transform_8, window_bounds = array<i64: 1, 1, 128>}, {transform_indices = @transform_9, window_bounds = array<i64: 1, 1, 128>}, {transform_indices = @transform_10, window_bounds = array<i64: 1, 128, 512>}, {transform_indices = @transform_11, window_bounds = array<i64: 1, 1, 512>}, {transform_indices = @transform_12, window_bounds = array<i64: 1, 512, 128>}, {transform_indices = @transform_13, window_bounds = array<i64: 1, 1, 128>}, {transform_indices = @transform_14, window_bounds = array<i64: 1, 1, 128>}, {transform_indices = @transform_15, window_bounds = array<i64: 1, 1, 128>}, {transform_indices = @transform_16, window_bounds = array<i64: 1, 8, 128>}]} {
    %c0_i32 = arith.constant 0 : i32
    %0 = arith.cmpi eq, %arg1, %c0_i32 : i32
    %1 = arith.extui %0 : i1 to i32
    %c0_i32_0 = arith.constant 0 : i32
    %2 = arith.cmpi ne, %1, %c0_i32_0 : i32
    scf.if %2 {
      %c0_68 = arith.constant 0 : index
      %c0_69 = arith.constant 0 : index
      %c0_70 = arith.constant 0 : index
      %136 = vector.load %arg2[%c0_68, %c0_69, %c0_70] : memref<1x8x16xf32, #tpu.memory_space<vmem>>, vector<1x8x16xf32>
      %137 = vector.shape_cast %136 : vector<1x8x16xf32> to vector<8x16xf32>
      %c0_71 = arith.constant 0 : index
      %c0_72 = arith.constant 0 : index
      %138 = vector.load %arg3[%c0_71, %c0_72] : memref<16x128xf32, #tpu.memory_space<vmem>>, vector<16x128xf32>
      %cst_73 = arith.constant dense<0.000000e+00> : vector<8x128xf32>
      %139 = tpu.matmul %137, %138, %cst_73 {dimension_numbers = #tpu.dot_dimension_numbers<[1], [0], [0], [1], [0, 0, 1, 1], [], []>} : vector<8x16xf32>, vector<16x128xf32>, vector<8x128xf32> -> vector<8x128xf32>
      %c0_74 = arith.constant 0 : index
      %c0_75 = arith.constant 0 : index
      %140 = vector.load %arg4[%c0_74, %c0_75] : memref<1x128xf32, #tpu.memory_space<vmem>>, vector<1x128xf32>
      %141 = vector.broadcast %140 : vector<1x128xf32> to vector<8x128xf32>
      %142 = arith.addf %139, %141 : vector<8x128xf32>
      %c0_76 = arith.constant 0 : index
      %c0_77 = arith.constant 0 : index
      %c0_78 = arith.constant 0 : index
      %143 = vector.load %arg18[%c0_76, %c0_77, %c0_78] : memref<1x8x128xf32, #tpu.memory_space<vmem>>, vector<1x8x128xf32>
      %144 = vector.shape_cast %143 : vector<1x8x128xf32> to vector<8x128xf32>
      %145 = vector.shape_cast %142 : vector<8x128xf32> to vector<1x8x128xf32>
      tpu.vector_store %arg18[%c0_76, %c0_77, %c0_78], %145 {strides = array<i32>} : memref<1x8x128xf32, #tpu.memory_space<vmem>>, vector<1x8x128xf32>,
    } else {
    }
    %c0 = arith.constant 0 : index
    %c0_1 = arith.constant 0 : index
    %c0_2 = arith.constant 0 : index
    %3 = vector.load %arg18[%c0, %c0_1, %c0_2] : memref<1x8x128xf32, #tpu.memory_space<vmem>>, vector<1x8x128xf32>
    %4 = vector.shape_cast %3 : vector<1x8x128xf32> to vector<8x128xf32>
    %c0_3 = arith.constant 0 : index
    %c0_4 = arith.constant 0 : index
    %c0_5 = arith.constant 0 : index
    %5 = vector.load %arg5[%c0_3, %c0_4, %c0_5] : memref<1x128x128xf32, #tpu.memory_space<vmem>>, vector<1x128x128xf32>
    %6 = vector.shape_cast %5 : vector<1x128x128xf32> to vector<128x128xf32>
    %cst = arith.constant dense<0.000000e+00> : vector<8x128xf32>
    %7 = tpu.matmul %4, %6, %cst {dimension_numbers = #tpu.dot_dimension_numbers<[1], [0], [0], [1], [0, 0, 1, 1], [], []>} : vector<8x128xf32>, vector<128x128xf32>, vector<8x128xf32> -> vector<8x128xf32>
    %c0_6 = arith.constant 0 : index
    %c0_7 = arith.constant 0 : index
    %c0_8 = arith.constant 0 : index
    %8 = vector.load %arg6[%c0_6, %c0_7, %c0_8] : memref<1x128x128xf32, #tpu.memory_space<vmem>>, vector<1x128x128xf32>
    %9 = vector.shape_cast %8 : vector<1x128x128xf32> to vector<128x128xf32>
    %cst_9 = arith.constant dense<0.000000e+00> : vector<8x128xf32>
    %10 = tpu.matmul %4, %9, %cst_9 {dimension_numbers = #tpu.dot_dimension_numbers<[1], [0], [0], [1], [0, 0, 1, 1], [], []>} : vector<8x128xf32>, vector<128x128xf32>, vector<8x128xf32> -> vector<8x128xf32>
    %c0_10 = arith.constant 0 : index
    %c0_11 = arith.constant 0 : index
    %c0_12 = arith.constant 0 : index
    %11 = vector.load %arg7[%c0_10, %c0_11, %c0_12] : memref<1x128x128xf32, #tpu.memory_space<vmem>>, vector<1x128x128xf32>
    %12 = vector.shape_cast %11 : vector<1x128x128xf32> to vector<128x128xf32>
    %cst_13 = arith.constant dense<0.000000e+00> : vector<8x128xf32>
    %13 = tpu.matmul %4, %12, %cst_13 {dimension_numbers = #tpu.dot_dimension_numbers<[1], [0], [0], [1], [0, 0, 1, 1], [], []>} : vector<8x128xf32>, vector<128x128xf32>, vector<8x128xf32> -> vector<8x128xf32>
    %14 = vector.extract_strided_slice %7 {offsets = [0, 0], sizes = [8, 32], strides = [1, 1]} : vector<8x128xf32> to vector<8x32xf32>
    %15 = vector.extract_strided_slice %7 {offsets = [0, 32], sizes = [8, 32], strides = [1, 1]} : vector<8x128xf32> to vector<8x32xf32>
    %16 = vector.extract_strided_slice %7 {offsets = [0, 64], sizes = [8, 32], strides = [1, 1]} : vector<8x128xf32> to vector<8x32xf32>
    %17 = vector.extract_strided_slice %7 {offsets = [0, 96], sizes = [8, 32], strides = [1, 1]} : vector<8x128xf32> to vector<8x32xf32>
    %18 = vector.shape_cast %14 : vector<8x32xf32> to vector<1x8x32xf32>
    %19 = vector.shape_cast %15 : vector<8x32xf32> to vector<1x8x32xf32>
    %20 = vector.shape_cast %16 : vector<8x32xf32> to vector<1x8x32xf32>
    %21 = vector.shape_cast %17 : vector<8x32xf32> to vector<1x8x32xf32>
    %22 = tpu.concatenate %18, %19, %20, %21 in 0 : vector<1x8x32xf32>, vector<1x8x32xf32>, vector<1x8x32xf32>, vector<1x8x32xf32> -> vector<4x8x32xf32>
    %23 = vector.extract_strided_slice %10 {offsets = [0, 0], sizes = [8, 32], strides = [1, 1]} : vector<8x128xf32> to vector<8x32xf32>
    %24 = vector.extract_strided_slice %10 {offsets = [0, 32], sizes = [8, 32], strides = [1, 1]} : vector<8x128xf32> to vector<8x32xf32>
    %25 = vector.extract_strided_slice %10 {offsets = [0, 64], sizes = [8, 32], strides = [1, 1]} : vector<8x128xf32> to vector<8x32xf32>
    %26 = vector.extract_strided_slice %10 {offsets = [0, 96], sizes = [8, 32], strides = [1, 1]} : vector<8x128xf32> to vector<8x32xf32>
    %27 = vector.shape_cast %23 : vector<8x32xf32> to vector<1x8x32xf32>
    %28 = vector.shape_cast %24 : vector<8x32xf32> to vector<1x8x32xf32>
    %29 = vector.shape_cast %25 : vector<8x32xf32> to vector<1x8x32xf32>
    %30 = vector.shape_cast %26 : vector<8x32xf32> to vector<1x8x32xf32>
    %31 = tpu.concatenate %27, %28, %29, %30 in 0 : vector<1x8x32xf32>, vector<1x8x32xf32>, vector<1x8x32xf32>, vector<1x8x32xf32> -> vector<4x8x32xf32>
    %32 = vector.extract_strided_slice %13 {offsets = [0, 0], sizes = [8, 32], strides = [1, 1]} : vector<8x128xf32> to vector<8x32xf32>
    %33 = vector.extract_strided_slice %13 {offsets = [0, 32], sizes = [8, 32], strides = [1, 1]} : vector<8x128xf32> to vector<8x32xf32>
    %34 = vector.extract_strided_slice %13 {offsets = [0, 64], sizes = [8, 32], strides = [1, 1]} : vector<8x128xf32> to vector<8x32xf32>
    %35 = vector.extract_strided_slice %13 {offsets = [0, 96], sizes = [8, 32], strides = [1, 1]} : vector<8x128xf32> to vector<8x32xf32>
    %36 = vector.shape_cast %32 : vector<8x32xf32> to vector<1x8x32xf32>
    %37 = vector.shape_cast %33 : vector<8x32xf32> to vector<1x8x32xf32>
    %38 = vector.shape_cast %34 : vector<8x32xf32> to vector<1x8x32xf32>
    %39 = vector.shape_cast %35 : vector<8x32xf32> to vector<1x8x32xf32>
    %40 = tpu.concatenate %36, %37, %38, %39 in 0 : vector<1x8x32xf32>, vector<1x8x32xf32>, vector<1x8x32xf32>, vector<1x8x32xf32> -> vector<4x8x32xf32>
    "tpu.trace_start"() <{level = 10 : i32, message = "hqd,hkd->hqk"}> : () -> ()
    %cst_14 = arith.constant dense<0.000000e+00> : vector<4x8x8xf32>
    %41 = tpu.matmul %22, %31, %cst_14 {dimension_numbers = #tpu.dot_dimension_numbers<[2], [2], [1], [1], [0, 0, 0, 1, 1, 1], [0], [0]>} : vector<4x8x32xf32>, vector<4x8x32xf32>, vector<4x8x8xf32> -> vector<4x8x8xf32>
    "tpu.trace_stop"() : () -> ()
    %cst_15 = arith.constant 0.0883883461 : f32
    %42 = vector.broadcast %cst_15 : f32 to vector<4x8x8xf32>
    %43 = arith.mulf %41, %42 : vector<4x8x8xf32>
    %cst_16 = arith.constant dense<0xFF800000> : vector<4x8xf32>
    %44 = vector.multi_reduction <maximumf>, %43, %cst_16 [2] : vector<4x8x8xf32> to vector<4x8xf32>
    %45 = vector.shape_cast %44 : vector<4x8xf32> to vector<4x8x1xf32>
    %46 = vector.broadcast %45 : vector<4x8x1xf32> to vector<4x8x8xf32>
    %47 = arith.subf %43, %46 : vector<4x8x8xf32>
    %48 = math.exp %47 : vector<4x8x8xf32>
    %cst_17 = arith.constant dense<0.000000e+00> : vector<4x8xf32>
    %49 = vector.multi_reduction <add>, %48, %cst_17 [2] : vector<4x8x8xf32> to vector<4x8xf32>
    %50 = vector.shape_cast %49 : vector<4x8xf32> to vector<4x8x1xf32>
    %51 = tpu.reciprocal %50 {approx = true} : vector<4x8x1xf32> -> vector<4x8x1xf32>
    %52 = vector.broadcast %51 : vector<4x8x1xf32> to vector<4x8x8xf32>
    %53 = arith.mulf %48, %52 : vector<4x8x8xf32>
    "tpu.trace_start"() <{level = 10 : i32, message = "hqk,hkd->hqd"}> : () -> ()
    %cst_18 = arith.constant dense<0.000000e+00> : vector<4x8x32xf32>
    %54 = tpu.matmul %53, %40, %cst_18 {dimension_numbers = #tpu.dot_dimension_numbers<[2], [1], [1], [2], [0, 0, 0, 1, 1, 2], [0], [0]>} : vector<4x8x8xf32>, vector<4x8x32xf32>, vector<4x8x32xf32> -> vector<4x8x32xf32>
    "tpu.trace_stop"() : () -> ()
    %c0_19 = arith.constant 0 : index
    %c0_20 = arith.constant 0 : index
    %c0_21 = arith.constant 0 : index
    %c0_22 = arith.constant 0 : index
    %55 = vector.load %arg8[%c0_19, %c0_20, %c0_21, %c0_22] : memref<1x4x32x128xf32, #tpu.memory_space<vmem>>, vector<1x4x32x128xf32>
    %56 = vector.shape_cast %55 : vector<1x4x32x128xf32> to vector<4x32x128xf32>
    "tpu.trace_start"() <{level = 10 : i32, message = "hqd,hde->hqe"}> : () -> ()
    %cst_23 = arith.constant dense<0.000000e+00> : vector<4x8x128xf32>
    %57 = tpu.matmul %54, %56, %cst_23 {dimension_numbers = #tpu.dot_dimension_numbers<[2], [1], [1], [2], [0, 0, 0, 1, 1, 2], [0], [0]>} : vector<4x8x32xf32>, vector<4x32x128xf32>, vector<4x8x128xf32> -> vector<4x8x128xf32>
    "tpu.trace_stop"() : () -> ()
    %cst_24 = arith.constant dense<0.000000e+00> : vector<8x128xf32>
    %58 = vector.multi_reduction <add>, %57, %cst_24 [0] : vector<4x8x128xf32> to vector<8x128xf32>
    %c0_25 = arith.constant 0 : index
    %c0_26 = arith.constant 0 : index
    %c0_27 = arith.constant 0 : index
    %59 = vector.load %arg9[%c0_25, %c0_26, %c0_27] : memref<1x1x128xf32, #tpu.memory_space<vmem>>, vector<1x1x128xf32>
    %60 = vector.shape_cast %59 : vector<1x1x128xf32> to vector<1x128xf32>
    %61 = vector.broadcast %60 : vector<1x128xf32> to vector<8x128xf32>
    %62 = arith.addf %58, %61 : vector<8x128xf32>
    %63 = arith.addf %62, %4 : vector<8x128xf32>
    %c0_28 = arith.constant 0 : index
    %c0_29 = arith.constant 0 : index
    %c0_30 = arith.constant 0 : index
    %64 = vector.load %arg10[%c0_28, %c0_29, %c0_30] : memref<1x1x128xf32, #tpu.memory_space<vmem>>, vector<1x1x128xf32>
    %65 = vector.shape_cast %64 : vector<1x1x128xf32> to vector<1x128xf32>
    %c0_31 = arith.constant 0 : index
    %c0_32 = arith.constant 0 : index
    %c0_33 = arith.constant 0 : index
    %66 = vector.load %arg11[%c0_31, %c0_32, %c0_33] : memref<1x1x128xf32, #tpu.memory_space<vmem>>, vector<1x1x128xf32>
    %67 = vector.shape_cast %66 : vector<1x1x128xf32> to vector<1x128xf32>
    %cst_34 = arith.constant dense<0.000000e+00> : vector<8xf32>
    %68 = vector.multi_reduction <add>, %63, %cst_34 [1] : vector<8x128xf32> to vector<8xf32>
    %69 = vector.shape_cast %68 : vector<8xf32> to vector<8x1xf32>
    %cst_35 = arith.constant 1.280000e+02 : f32
    %70 = vector.broadcast %cst_35 : f32 to vector<8x1xf32>
    %71 = arith.divf %69, %70 : vector<8x1xf32>
    %72 = vector.broadcast %71 : vector<8x1xf32> to vector<8x128xf32>
    %73 = arith.subf %63, %72 : vector<8x128xf32>
    %74 = arith.mulf %73, %73 : vector<8x128xf32>
    %cst_36 = arith.constant dense<0.000000e+00> : vector<8xf32>
    %75 = vector.multi_reduction <add>, %74, %cst_36 [1] : vector<8x128xf32> to vector<8xf32>
    %76 = vector.shape_cast %75 : vector<8xf32> to vector<8x1xf32>
    %cst_37 = arith.constant 1.280000e+02 : f32
    %77 = vector.broadcast %cst_37 : f32 to vector<8x1xf32>
    %78 = arith.divf %76, %77 : vector<8x1xf32>
    %79 = vector.broadcast %71 : vector<8x1xf32> to vector<8x128xf32>
    %80 = arith.subf %63, %79 : vector<8x128xf32>
    %cst_38 = arith.constant 9.99999974E-6 : f32
    %81 = vector.broadcast %cst_38 : f32 to vector<8x1xf32>
    %82 = arith.addf %78, %81 : vector<8x1xf32>
    %83 = math.rsqrt %82 : vector<8x1xf32>
    %84 = vector.broadcast %83 : vector<8x1xf32> to vector<8x128xf32>
    %85 = arith.mulf %80, %84 : vector<8x128xf32>
    %86 = vector.broadcast %65 : vector<1x128xf32> to vector<8x128xf32>
    %87 = arith.mulf %85, %86 : vector<8x128xf32>
    %88 = vector.broadcast %67 : vector<1x128xf32> to vector<8x128xf32>
    %89 = arith.addf %87, %88 : vector<8x128xf32>
    %c0_39 = arith.constant 0 : index
    %c0_40 = arith.constant 0 : index
    %c0_41 = arith.constant 0 : index
    %90 = vector.load %arg12[%c0_39, %c0_40, %c0_41] : memref<1x128x512xf32, #tpu.memory_space<vmem>>, vector<1x128x512xf32>
    %91 = vector.shape_cast %90 : vector<1x128x512xf32> to vector<128x512xf32>
    %cst_42 = arith.constant dense<0.000000e+00> : vector<8x512xf32>
    %92 = tpu.matmul %89, %91, %cst_42 {dimension_numbers = #tpu.dot_dimension_numbers<[1], [0], [0], [1], [0, 0, 1, 1], [], []>} : vector<8x128xf32>, vector<128x512xf32>, vector<8x512xf32> -> vector<8x512xf32>
    %c0_43 = arith.constant 0 : index
    %c0_44 = arith.constant 0 : index
    %c0_45 = arith.constant 0 : index
    %93 = vector.load %arg13[%c0_43, %c0_44, %c0_45] : memref<1x1x512xf32, #tpu.memory_space<vmem>>, vector<1x1x512xf32>
    %94 = vector.shape_cast %93 : vector<1x1x512xf32> to vector<1x512xf32>
    %95 = vector.broadcast %94 : vector<1x512xf32> to vector<8x512xf32>
    %96 = arith.addf %92, %95 : vector<8x512xf32>
    %cst_46 = arith.constant 0.000000e+00 : f32
    %97 = vector.broadcast %cst_46 : f32 to vector<8x512xf32>
    %98 = arith.maximumf %96, %97 : vector<8x512xf32>
    %c0_47 = arith.constant 0 : index
    %c0_48 = arith.constant 0 : index
    %c0_49 = arith.constant 0 : index
    %99 = vector.load %arg14[%c0_47, %c0_48, %c0_49] : memref<1x512x128xf32, #tpu.memory_space<vmem>>, vector<1x512x128xf32>
    %100 = vector.shape_cast %99 : vector<1x512x128xf32> to vector<512x128xf32>
    %cst_50 = arith.constant dense<0.000000e+00> : vector<8x128xf32>
    %101 = tpu.matmul %98, %100, %cst_50 {dimension_numbers = #tpu.dot_dimension_numbers<[1], [0], [0], [1], [0, 0, 1, 1], [], []>} : vector<8x512xf32>, vector<512x128xf32>, vector<8x128xf32> -> vector<8x128xf32>
    %c0_51 = arith.constant 0 : index
    %c0_52 = arith.constant 0 : index
    %c0_53 = arith.constant 0 : index
    %102 = vector.load %arg15[%c0_51, %c0_52, %c0_53] : memref<1x1x128xf32, #tpu.memory_space<vmem>>, vector<1x1x128xf32>
    %103 = vector.shape_cast %102 : vector<1x1x128xf32> to vector<1x128xf32>
    %104 = vector.broadcast %103 : vector<1x128xf32> to vector<8x128xf32>
    %105 = arith.addf %101, %104 : vector<8x128xf32>
    %106 = arith.addf %105, %89 : vector<8x128xf32>
    %c0_54 = arith.constant 0 : index
    %c0_55 = arith.constant 0 : index
    %c0_56 = arith.constant 0 : index
    %107 = vector.load %arg16[%c0_54, %c0_55, %c0_56] : memref<1x1x128xf32, #tpu.memory_space<vmem>>, vector<1x1x128xf32>
    %108 = vector.shape_cast %107 : vector<1x1x128xf32> to vector<1x128xf32>
    %c0_57 = arith.constant 0 : index
    %c0_58 = arith.constant 0 : index
    %c0_59 = arith.constant 0 : index
    %109 = vector.load %arg17[%c0_57, %c0_58, %c0_59] : memref<1x1x128xf32, #tpu.memory_space<vmem>>, vector<1x1x128xf32>
    %110 = vector.shape_cast %109 : vector<1x1x128xf32> to vector<1x128xf32>
    %cst_60 = arith.constant dense<0.000000e+00> : vector<8xf32>
    %111 = vector.multi_reduction <add>, %106, %cst_60 [1] : vector<8x128xf32> to vector<8xf32>
    %112 = vector.shape_cast %111 : vector<8xf32> to vector<8x1xf32>
    %cst_61 = arith.constant 1.280000e+02 : f32
    %113 = vector.broadcast %cst_61 : f32 to vector<8x1xf32>
    %114 = arith.divf %112, %113 : vector<8x1xf32>
    %115 = vector.broadcast %114 : vector<8x1xf32> to vector<8x128xf32>
    %116 = arith.subf %106, %115 : vector<8x128xf32>
    %117 = arith.mulf %116, %116 : vector<8x128xf32>
    %cst_62 = arith.constant dense<0.000000e+00> : vector<8xf32>
    %118 = vector.multi_reduction <add>, %117, %cst_62 [1] : vector<8x128xf32> to vector<8xf32>
    %119 = vector.shape_cast %118 : vector<8xf32> to vector<8x1xf32>
    %cst_63 = arith.constant 1.280000e+02 : f32
    %120 = vector.broadcast %cst_63 : f32 to vector<8x1xf32>
    %121 = arith.divf %119, %120 : vector<8x1xf32>
    %122 = vector.broadcast %114 : vector<8x1xf32> to vector<8x128xf32>
    %123 = arith.subf %106, %122 : vector<8x128xf32>
    %cst_64 = arith.constant 9.99999974E-6 : f32
    %124 = vector.broadcast %cst_64 : f32 to vector<8x1xf32>
    %125 = arith.addf %121, %124 : vector<8x1xf32>
    %126 = math.rsqrt %125 : vector<8x1xf32>
    %127 = vector.broadcast %126 : vector<8x1xf32> to vector<8x128xf32>
    %128 = arith.mulf %123, %127 : vector<8x128xf32>
    %129 = vector.broadcast %108 : vector<1x128xf32> to vector<8x128xf32>
    %130 = arith.mulf %128, %129 : vector<8x128xf32>
    %131 = vector.broadcast %110 : vector<1x128xf32> to vector<8x128xf32>
    %132 = arith.addf %130, %131 : vector<8x128xf32>
    %c0_65 = arith.constant 0 : index
    %c0_66 = arith.constant 0 : index
    %c0_67 = arith.constant 0 : index
    %133 = vector.load %arg18[%c0_65, %c0_66, %c0_67] : memref<1x8x128xf32, #tpu.memory_space<vmem>>, vector<1x8x128xf32>
    %134 = vector.shape_cast %133 : vector<1x8x128xf32> to vector<8x128xf32>
    %135 = vector.shape_cast %132 : vector<8x128xf32> to vector<1x8x128xf32>
    tpu.vector_store %arg18[%c0_65, %c0_66, %c0_67], %135 {strides = array<i32>} : memref<1x8x128xf32, #tpu.memory_space<vmem>>, vector<1x8x128xf32>,
    return
  }
  func.func @transform_0(%arg0: i32, %arg1: i32) -> (i32, i32, i32) {
    %c0_i32 = arith.constant 0 : i32
    %c0_i32_0 = arith.constant 0 : i32
    %c0_i32_1 = arith.constant 0 : i32
    return %arg0, %c0_i32, %c0_i32_0 : i32, i32, i32
  }
  func.func @transform_1(%arg0: i32, %arg1: i32) -> (i32, i32) {
    %c0_i32 = arith.constant 0 : i32
    %c0_i32_0 = arith.constant 0 : i32
    %c0_i32_1 = arith.constant 0 : i32
    return %c0_i32, %c0_i32_0 : i32, i32
  }
  func.func @transform_2(%arg0: i32, %arg1: i32) -> (i32, i32) {
    %c0_i32 = arith.constant 0 : i32
    %c0_i32_0 = arith.constant 0 : i32
    %c0_i32_1 = arith.constant 0 : i32
    return %c0_i32, %c0_i32_0 : i32, i32
  }
  func.func @transform_3(%arg0: i32, %arg1: i32) -> (i32, i32, i32) {
    %c0_i32 = arith.constant 0 : i32
    %c0_i32_0 = arith.constant 0 : i32
    %c0_i32_1 = arith.constant 0 : i32
    return %arg1, %c0_i32, %c0_i32_0 : i32, i32, i32
  }
  func.func @transform_4(%arg0: i32, %arg1: i32) -> (i32, i32, i32) {
    %c0_i32 = arith.constant 0 : i32
    %c0_i32_0 = arith.constant 0 : i32
    %c0_i32_1 = arith.constant 0 : i32
    return %arg1, %c0_i32, %c0_i32_0 : i32, i32, i32
  }
  func.func @transform_5(%arg0: i32, %arg1: i32) -> (i32, i32, i32) {
    %c0_i32 = arith.constant 0 : i32
    %c0_i32_0 = arith.constant 0 : i32
    %c0_i32_1 = arith.constant 0 : i32
    return %arg1, %c0_i32, %c0_i32_0 : i32, i32, i32
  }
  func.func @transform_6(%arg0: i32, %arg1: i32) -> (i32, i32, i32, i32) {
    %c0_i32 = arith.constant 0 : i32
    %c0_i32_0 = arith.constant 0 : i32
    %c0_i32_1 = arith.constant 0 : i32
    %c0_i32_2 = arith.constant 0 : i32
    return %arg1, %c0_i32, %c0_i32_0, %c0_i32_1 : i32, i32, i32, i32
  }
  func.func @transform_7(%arg0: i32, %arg1: i32) -> (i32, i32, i32) {
    %c0_i32 = arith.constant 0 : i32
    %c0_i32_0 = arith.constant 0 : i32
    %c0_i32_1 = arith.constant 0 : i32
    return %arg1, %c0_i32, %c0_i32_0 : i32, i32, i32
  }
  func.func @transform_8(%arg0: i32, %arg1: i32) -> (i32, i32, i32) {
    %c0_i32 = arith.constant 0 : i32
    %c0_i32_0 = arith.constant 0 : i32
    %c0_i32_1 = arith.constant 0 : i32
    return %arg1, %c0_i32, %c0_i32_0 : i32, i32, i32
  }
  func.func @transform_9(%arg0: i32, %arg1: i32) -> (i32, i32, i32) {
    %c0_i32 = arith.constant 0 : i32
    %c0_i32_0 = arith.constant 0 : i32
    %c0_i32_1 = arith.constant 0 : i32
    return %arg1, %c0_i32, %c0_i32_0 : i32, i32, i32
  }
  func.func @transform_10(%arg0: i32, %arg1: i32) -> (i32, i32, i32) {
    %c0_i32 = arith.constant 0 : i32
    %c0_i32_0 = arith.constant 0 : i32
    %c0_i32_1 = arith.constant 0 : i32
    return %arg1, %c0_i32, %c0_i32_0 : i32, i32, i32
  }
  func.func @transform_11(%arg0: i32, %arg1: i32) -> (i32, i32, i32) {
    %c0_i32 = arith.constant 0 : i32
    %c0_i32_0 = arith.constant 0 : i32
    %c0_i32_1 = arith.constant 0 : i32
    return %arg1, %c0_i32, %c0_i32_0 : i32, i32, i32
  }
  func.func @transform_12(%arg0: i32, %arg1: i32) -> (i32, i32, i32) {
    %c0_i32 = arith.constant 0 : i32
    %c0_i32_0 = arith.constant 0 : i32
    %c0_i32_1 = arith.constant 0 : i32
    return %arg1, %c0_i32, %c0_i32_0 : i32, i32, i32
  }
  func.func @transform_13(%arg0: i32, %arg1: i32) -> (i32, i32, i32) {
    %c0_i32 = arith.constant 0 : i32
    %c0_i32_0 = arith.constant 0 : i32
    %c0_i32_1 = arith.constant 0 : i32
    return %arg1, %c0_i32, %c0_i32_0 : i32, i32, i32
  }
  func.func @transform_14(%arg0: i32, %arg1: i32) -> (i32, i32, i32) {
    %c0_i32 = arith.constant 0 : i32
    %c0_i32_0 = arith.constant 0 : i32
    %c0_i32_1 = arith.constant 0 : i32
    return %arg1, %c0_i32, %c0_i32_0 : i32, i32, i32
  }
  func.func @transform_15(%arg0: i32, %arg1: i32) -> (i32, i32, i32) {
    %c0_i32 = arith.constant 0 : i32
    %c0_i32_0 = arith.constant 0 : i32
    %c0_i32_1 = arith.constant 0 : i32
    return %arg1, %c0_i32, %c0_i32_0 : i32, i32, i32
  }
  func.func @transform_16(%arg0: i32, %arg1: i32) -> (i32, i32, i32) {
    %c0_i32 = arith.constant 0 : i32
    %c0_i32_0 = arith.constant 0 : i32
    %c0_i32_1 = arith.constant 0 : i32
    return %arg0, %c0_i32, %c0_i32_0 : i32, i32, i32
  }
}

module attributes {stable_mosaic.version = 11 : i64} {
  func.func @_linear_kernel(%arg0: i32, %arg1: i32, %arg2: i32, %arg3: memref<2x512xf32, #tpu.memory_space<vmem>>, %arg4: memref<512x8xf32, #tpu.memory_space<vmem>>, %arg5: memref<1x8xf32, #tpu.memory_space<vmem>>, %arg6: memref<2x8xf32, #tpu.memory_space<vmem>>, %arg7: memref<2x8xf32, #tpu.memory_space<vmem>>) attributes {dimension_semantics = [#tpu.dimension_semantics<parallel>, #tpu.dimension_semantics<parallel>, #tpu.dimension_semantics<arbitrary>], iteration_bounds = array<i64: 1, 1, 2>, scalar_prefetch = 0 : i64, scratch_operands = 1 : i64, tpu.core_type = #tpu.core_type<tc>, window_params = [{transform_indices = @transform_0, window_bounds = array<i64: 2, 512>}, {transform_indices = @transform_1, window_bounds = array<i64: 512, 8>}, {transform_indices = @transform_2, window_bounds = array<i64: 1, 8>}, {transform_indices = @transform_3, window_bounds = array<i64: 2, 8>}]} {
    %c0_i32 = arith.constant 0 : i32
    %0 = arith.cmpi eq, %arg2, %c0_i32 : i32
    %1 = arith.extui %0 : i1 to i32
    %c0_i32_0 = arith.constant 0 : i32
    %2 = arith.cmpi ne, %1, %c0_i32_0 : i32
    scf.if %2 {
      %cst_9 = arith.constant 0.000000e+00 : f32
      %12 = vector.broadcast %cst_9 : f32 to vector<2x8xf32>
      %c0_10 = arith.constant 0 : index
      %c0_11 = arith.constant 0 : index
      %13 = vector.load %arg7[%c0_10, %c0_11] : memref<2x8xf32, #tpu.memory_space<vmem>>, vector<2x8xf32>
      tpu.vector_store %arg7[%c0_10, %c0_11], %12 {strides = array<i32>} : memref<2x8xf32, #tpu.memory_space<vmem>>, vector<2x8xf32>,
    } else {
    }
    %c0 = arith.constant 0 : index
    %c0_1 = arith.constant 0 : index
    %3 = vector.load %arg7[%c0, %c0_1] : memref<2x8xf32, #tpu.memory_space<vmem>>, vector<2x8xf32>
    %c0_2 = arith.constant 0 : index
    %c0_3 = arith.constant 0 : index
    %4 = vector.load %arg3[%c0_2, %c0_3] : memref<2x512xf32, #tpu.memory_space<vmem>>, vector<2x512xf32>
    %c0_4 = arith.constant 0 : index
    %c0_5 = arith.constant 0 : index
    %5 = vector.load %arg4[%c0_4, %c0_5] : memref<512x8xf32, #tpu.memory_space<vmem>>, vector<512x8xf32>
    %cst = arith.constant dense<0.000000e+00> : vector<2x8xf32>
    %6 = tpu.matmul %4, %5, %cst {dimension_numbers = #tpu.dot_dimension_numbers<[1], [0], [0], [1], [0, 0, 1, 1], [], []>} : vector<2x512xf32>, vector<512x8xf32>, vector<2x8xf32> -> vector<2x8xf32>
    %7 = arith.addf %3, %6 : vector<2x8xf32>
    %c0_6 = arith.constant 0 : index
    %c0_7 = arith.constant 0 : index
    %8 = vector.load %arg7[%c0_6, %c0_7] : memref<2x8xf32, #tpu.memory_space<vmem>>, vector<2x8xf32>
    tpu.vector_store %arg7[%c0_6, %c0_7], %7 {strides = array<i32>} : memref<2x8xf32, #tpu.memory_space<vmem>>, vector<2x8xf32>,
    %c1_i32 = arith.constant 1 : i32
    %9 = arith.cmpi eq, %arg2, %c1_i32 : i32
    %10 = arith.extui %9 : i1 to i32
    %c0_i32_8 = arith.constant 0 : i32
    %11 = arith.cmpi ne, %10, %c0_i32_8 : i32
    scf.if %11 {
      %c0_9 = arith.constant 0 : index
      %c0_10 = arith.constant 0 : index
      %12 = vector.load %arg7[%c0_9, %c0_10] : memref<2x8xf32, #tpu.memory_space<vmem>>, vector<2x8xf32>
      %c0_11 = arith.constant 0 : index
      %c0_12 = arith.constant 0 : index
      %13 = vector.load %arg5[%c0_11, %c0_12] : memref<1x8xf32, #tpu.memory_space<vmem>>, vector<1x8xf32>
      %14 = vector.broadcast %13 : vector<1x8xf32> to vector<2x8xf32>
      %15 = arith.addf %12, %14 : vector<2x8xf32>
      %c0_13 = arith.constant 0 : index
      %c0_14 = arith.constant 0 : index
      %16 = vector.load %arg6[%c0_13, %c0_14] : memref<2x8xf32, #tpu.memory_space<vmem>>, vector<2x8xf32>
      tpu.vector_store %arg6[%c0_13, %c0_14], %15 {strides = array<i32>} : memref<2x8xf32, #tpu.memory_space<vmem>>, vector<2x8xf32>,
    } else {
    }
    return
  }
  func.func @transform_0(%arg0: i32, %arg1: i32, %arg2: i32) -> (i32, i32) {
    %c0_i32 = arith.constant 0 : i32
    return %arg0, %arg2 : i32, i32
  }
  func.func @transform_1(%arg0: i32, %arg1: i32, %arg2: i32) -> (i32, i32) {
    %c0_i32 = arith.constant 0 : i32
    return %arg2, %arg1 : i32, i32
  }
  func.func @transform_2(%arg0: i32, %arg1: i32, %arg2: i32) -> (i32, i32) {
    %c0_i32 = arith.constant 0 : i32
    %c0_i32_0 = arith.constant 0 : i32
    return %c0_i32, %arg1 : i32, i32
  }
  func.func @transform_3(%arg0: i32, %arg1: i32, %arg2: i32) -> (i32, i32) {
    %c0_i32 = arith.constant 0 : i32
    return %arg0, %arg1 : i32, i32
  }
}

</mosaic_0001>

<llo_original>
// kernel: classifier_forward.3
$region0: #{classifier_forward.3}
  #allocation0 [shape = 'u32[]', space=smem, size = 0x4, offset = 0x4, fixed_abs, tag = 'smem constant byte address 0x4 - core index']
  #allocation1 [shape = 'u32[144,128]{1,0:T(1,128)}', space=vmem, size = 0x12000, scoped, tag = 'internal scratch']
  #allocation2 [shape = 'f32[2,8]{1,0:T(2,128)}', space=vmem, size = 0x400, scoped, tag = 'scratch operand']
  %s0 = inlined_call_operand.vmem [shape: f32[2,1024], index: 0, kind: input, shape index: {}]
  %s1 = inlined_call_operand.vmem [shape: f32[1024,8], index: 1, kind: input, shape index: {}]
  %s2 = inlined_call_operand.vmem [shape: f32[1,8], index: 2, kind: input, shape index: {}]
  %s3 = inlined_call_operand.hbm [shape: f32[2,8], index: 3, kind: output, shape index: {}]
  %s4 = sld [smem:[#allocation0]]
  $region53: #{classifier_forward.3} parent=0
    _
  %s6 = ssub.s32 1, %s4
  %s7 = scalar_select 0, %s6, %s4
  $region1: #{classifier_forward.3} parent=0
    #allocation3 [shape = 'u8[1024]{0}', space=vmem, size = 0x400, scoped, tag = 'output window, operand 0, single buffered']
    #allocation4 [shape = 's32[2]{0}', space=sflag, size = 0x8, scoped, tag = 'scoped memory for classifier_forward.3']
    %8 = vsyncpa [#allocation4], 0
    loop: start=0, step=1, limit=4
    $region2: #{classifier_forward.3} parent=1 // loop_pre_header
      _
    $region3: #{classifier_forward.3} parent=1 // loop_header
      %s10 = sphi 0, %s14
      %p11 = scmp.ge.s32.totalorder %s10, 4
      %s17 = sphi 0, %s36
      %s18 = sphi 0, %s32
      %s19 = sphi 0, %s28
      %s20 = sphi 0, %s17
      %s21 = sphi 0, %s18
      %s22 = sphi 0, %s19
      %s23 = sphi 0, %s20
      %s24 = sphi 0, %s21
      %s25 = sphi 0, %s22
      %s41 = sphi 0, %s43
      %s44 = sphi 0, %s41
      %s45 = sphi 0, %s44
      %s61 = sphi 0, %s45
      %s69 = sphi 0, %s71
      %s72 = sphi 0, %s69
      %s73 = sphi 0, %s72
      %s89 = sphi 0, %s73
      %s95 = sphi 0, %s97
      %s98 = sphi 0, %s95
      %s99 = sphi 0, %s98
      %s115 = sphi 0, %s99
      %s123 = sphi 0, %s125
      %s126 = sphi 0, %s123
      %s127 = sphi 0, %s126
      %s143 = sphi 0, %s127
    $region4: #{classifier_forward.3} parent=1 // loop_header_branch
      %13 = sbr.rel (%p11) target = $region8
    $region5: #{classifier_forward.3} parent=1 // loop_body
      %s15 = ssub.s32 %s10, 1
      %s16 = ssub.s32 %s10, 2
      %s26 = sadd.s32 1, %s19
      %p27 = scmp.ge.s32.totalorder %s26, 2
      %s28 = scalar_select %p27, 0, %s26
      %s29 = sadd.s32 1, %s18
      %s30 = scalar_select %p27, %s29, %s18
      %p31 = scmp.ge.s32.totalorder %s30, 1
      %s32 = scalar_select %p31, 0, %s30
      %s33 = sadd.s32 1, %s17
      %s34 = scalar_select %p31, %s33, %s17
      %p35 = scmp.ge.s32.totalorder %s34, 1
      %s36 = scalar_select %p35, 0, %s34
      %s37 = ssub.s32 %s17, %s36
      %s38 = ssub.s32 %s19, %s28
      %s39 = sor.u32 %s37, %s38
      %p40 = scmp.eq.s32.totalorder %s39, 0
      %s42 = sadd.s32 %s41, 1
      %s43 = scalar_select %p40, %s41, %s42
      %p46 = pneg %p40
      %p47 = scmp.eq.s32.totalorder %s10, 1
      %p48 = por %p46, %p47
      %p49 = scmp.ne.s32.totalorder %s41, %s44
      %p50 = scmp.eq.s32.totalorder %s10, 0
      %p51 = por %p49, %p50
      %p52 = scmp.ne.s32.totalorder %s41, %s44
      %p53 = scmp.eq.s32.totalorder %s15, 1
      %p54 = por %p52, %p53
      %p55 = scmp.ne.s32.totalorder %s44, %s45
      %p56 = scmp.eq.s32.totalorder %s15, 0
      %p57 = por %p55, %p56
      %p58 = scmp.ne.s32.totalorder %s44, %s45
      %p59 = scmp.eq.s32.totalorder %s16, 1
      %p60 = por %p58, %p59
      %p62 = scmp.ne.s32.totalorder %s45, %s61
      %p63 = scmp.eq.s32.totalorder %s16, 0
      %p64 = por %p62, %p63
      %s65 = ssub.s32 %s19, %s28
      %s66 = ssub.s32 %s18, %s32
      %s67 = sor.u32 %s65, %s66
      %p68 = scmp.eq.s32.totalorder %s67, 0
      %s70 = sadd.s32 %s69, 1
      %s71 = scalar_select %p68, %s69, %s70
      %p74 = pneg %p68
      %p75 = scmp.eq.s32.totalorder %s10, 1
      %p76 = por %p74, %p75
      %p77 = scmp.ne.s32.totalorder %s69, %s72
      %p78 = scmp.eq.s32.totalorder %s10, 0
      %p79 = por %p77, %p78
      %p80 = scmp.ne.s32.totalorder %s69, %s72
      %p81 = scmp.eq.s32.totalorder %s15, 1
      %p82 = por %p80, %p81
      %p83 = scmp.ne.s32.totalorder %s72, %s73
      %p84 = scmp.eq.s32.totalorder %s15, 0
      %p85 = por %p83, %p84
      %p86 = scmp.ne.s32.totalorder %s72, %s73
      %p87 = scmp.eq.s32.totalorder %s16, 1
      %p88 = por %p86, %p87
      %p90 = scmp.ne.s32.totalorder %s73, %s89
      %p91 = scmp.eq.s32.totalorder %s16, 0
      %p92 = por %p90, %p91
      %s93 = ssub.s32 %s18, %s32
      %p94 = scmp.eq.s32.totalorder %s93, 0
      %s96 = sadd.s32 %s95, 1
      %s97 = scalar_select %p94, %s95, %s96
      %p100 = pneg %p94
      %p101 = scmp.eq.s32.totalorder %s10, 1
      %p102 = por %p100, %p101
      %p103 = scmp.ne.s32.totalorder %s95, %s98
      %p104 = scmp.eq.s32.totalorder %s10, 0
      %p105 = por %p103, %p104
      %p106 = scmp.ne.s32.totalorder %s95, %s98
      %p107 = scmp.eq.s32.totalorder %s15, 1
      %p108 = por %p106, %p107
      %p109 = scmp.ne.s32.totalorder %s98, %s99
      %p110 = scmp.eq.s32.totalorder %s15, 0
      %p111 = por %p109, %p110
      %p112 = scmp.ne.s32.totalorder %s98, %s99
      %p113 = scmp.eq.s32.totalorder %s16, 1
      %p114 = por %p112, %p113
      %p116 = scmp.ne.s32.totalorder %s99, %s115
      %p117 = scmp.eq.s32.totalorder %s16, 0
      %p118 = por %p116, %p117
      %s119 = ssub.s32 %s17, %s36
      %s120 = ssub.s32 %s18, %s32
      %s121 = sor.u32 %s119, %s120
      %p122 = scmp.eq.s32.totalorder %s121, 0
      %s124 = sadd.s32 %s123, 1
      %s125 = scalar_select %p122, %s123, %s124
      %p128 = pneg %p122
      %p129 = scmp.eq.s32.totalorder %s10, 1
      %p130 = por %p128, %p129
      %p131 = scmp.ne.s32.totalorder %s123, %s126
      %p132 = scmp.eq.s32.totalorder %s10, 0
      %p133 = por %p131, %p132
      %p134 = scmp.ne.s32.totalorder %s123, %s126
      %p135 = scmp.eq.s32.totalorder %s15, 1
      %p136 = por %p134, %p135
      %p137 = scmp.ne.s32.totalorder %s126, %s127
      %p138 = scmp.eq.s32.totalorder %s15, 0
      %p139 = por %p137, %p138
      %p140 = scmp.ne.s32.totalorder %s126, %s127
      %p141 = scmp.eq.s32.totalorder %s16, 1
      %p142 = por %p140, %p141
      %p144 = scmp.ne.s32.totalorder %s127, %s143
      %p145 = scmp.eq.s32.totalorder %s16, 0
      %p146 = por %p144, %p145
      %p147 = scmp.le.s32.totalorder 1, %s10
      %p148 = scmp.lt.s32.totalorder %s10, 3
      %p149 = pnand %p147, %p148
      %p150 = pneg %p149
      // Predicated region
      $region9: #{classifier_forward.3} parent=5 // pred_check
        _
      $region10: #{classifier_forward.3} parent=5 // pred_check_branch
        %152 = sbr.rel (%p149) target = $region12
      $region11: #{classifier_forward.3} parent=5 // pred_region
        %s153 = ssub.s32 %s10, 1
        // Predicated region
        $region13: #{classifier_forward.3} parent=11 // pred_check
          %p154 = pneg %p111
        $region14: #{classifier_forward.3} parent=11 // pred_check_branch
          %156 = sbr.rel (%p154) target = $region16
        $region15: #{classifier_forward.3} parent=11 // pred_region
          %p157 = scmp.lt.s32.totalorder %s21, 0
          %s158 = scalar_select %p157, %s21, 0
          %s159 = scalar_lea.vmem %s2, %s158
        $region16: #{classifier_forward.3} parent=11 // pred_fallthru
          _
      $region12: #{classifier_forward.3} parent=5 // pred_fallthru
        _
      %p160 = scmp.lt.s32.totalorder %s10, 2
      // Predicated region
      $region17: #{classifier_forward.3} parent=5 // pred_check
        %p161 = pneg %p160
      $region18: #{classifier_forward.3} parent=5 // pred_check_branch
        %163 = sbr.rel (%p161) target = $region20
      $region19: #{classifier_forward.3} parent=5 // pred_region
        // Predicated region
        $region21: #{classifier_forward.3} parent=19 // pred_check
          %p164 = pneg %p51
        $region22: #{classifier_forward.3} parent=19 // pred_check_branch
          %166 = sbr.rel (%p164) target = $region24
        $region23: #{classifier_forward.3} parent=19 // pred_region
          %s167 = smul.u32 4, %s19
          %p168 = scmp.lt.s32.totalorder %s17, 0
          %s169 = scalar_select %p168, %s17, 0
          %p170 = scmp.lt.s32.totalorder %s167, 7
          %s171 = scalar_select %p170, %s167, 7
          %s172 = smul.addr %s169, 8
          %s173 = sadd.s32 %s171, %s172
          %s174 = smul.addr %s173, 2
          %s175 = scalar_lea.vmem %s0, %s174
          %s176 = smul.u32 4, %s19
        $region24: #{classifier_forward.3} parent=19 // pred_fallthru
          _
        // Predicated region
        $region25: #{classifier_forward.3} parent=19 // pred_check
          %p177 = pneg %p79
        $region26: #{classifier_forward.3} parent=19 // pred_check_branch
          %179 = sbr.rel (%p177) target = $region28
        $region27: #{classifier_forward.3} parent=19 // pred_region
          %s180 = smul.u32 64, %s19
          %p181 = scmp.lt.s32.totalorder %s180, 127
          %s182 = scalar_select %p181, %s180, 127
          %p183 = scmp.lt.s32.totalorder %s18, 0
          %s184 = scalar_select %p183, %s18, 0
          %s185 = sadd.s32 %s184, %s182
          %s186 = smul.addr %s185, 8
          %s187 = scalar_lea.vmem %s1, %s186
          %s188 = smul.u32 64, %s19
        $region28: #{classifier_forward.3} parent=19 // pred_fallthru
          _
      $region20: #{classifier_forward.3} parent=5 // pred_fallthru
        _
      %p189 = scmp.le.s32.totalorder 1, %s10
      %p190 = scmp.lt.s32.totalorder %s10, 3
      %p191 = pnand %p189, %p190
      %p192 = pneg %p191
      // Predicated region
      $region29: #{classifier_forward.3} parent=5 // pred_check
        _
      $region30: #{classifier_forward.3} parent=5 // pred_check_branch
        %194 = sbr.rel (%p191) target = $region32
      $region31: #{classifier_forward.3} parent=5 // pred_region
        %s195 = ssub.s32 %s10, 1
        %s196 = smul.u32 4, %s22
        %p197 = scmp.lt.s32.totalorder %s20, 0
        %s198 = scalar_select %p197, %s20, 0
        %p199 = scmp.lt.s32.totalorder %s196, 7
        %s200 = scalar_select %p199, %s196, 7
        %s201 = smul.addr %s198, 8
        %s202 = sadd.s32 %s200, %s201
        %s203 = smul.addr %s202, 2
        %s204 = scalar_lea.vmem %s0, %s203
        %p205 = pneg %p57
        %p206 = pneg %p54
        %s207 = smul.u32 64, %s22
        %p208 = scmp.lt.s32.totalorder %s207, 127
        %s209 = scalar_select %p208, %s207, 127
        %p210 = scmp.lt.s32.totalorder %s21, 0
        %s211 = scalar_select %p210, %s21, 0
        %s212 = sadd.s32 %s211, %s209
        %s213 = smul.addr %s212, 8
        %s214 = scalar_lea.vmem %s1, %s213
        %p215 = pneg %p85
        %p216 = pneg %p82
        %p217 = scmp.lt.s32.totalorder %s21, 0
        %s218 = scalar_select %p217, %s21, 0
        %s219 = scalar_lea.vmem %s2, %s218
        %p220 = pneg %p111
        %p221 = pneg %p108
        %p222 = pneg %p139
        %p223 = pneg %p136
        %s224 = smul.u32 4, %s22
        %p225 = scmp.lt.s32.totalorder %s20, 0
        %s226 = scalar_select %p225, %s20, 0
        %p227 = scmp.lt.s32.totalorder %s224, 7
        %s228 = scalar_select %p227, %s224, 7
        %s229 = smul.addr %s226, 8
        %s230 = sadd.s32 %s228, %s229
        %s231 = smul.addr %s230, 2
        %s232 = scalar_lea.vmem %s0, %s231
        %s233 = smul.u32 4, %s22
        %s234 = smul.u32 64, %s22
        %p235 = scmp.lt.s32.totalorder %s234, 127
        %s236 = scalar_select %p235, %s234, 127
        %p237 = scmp.lt.s32.totalorder %s21, 0
        %s238 = scalar_select %p237, %s21, 0
        %s239 = sadd.s32 %s238, %s236
        %s240 = smul.addr %s239, 8
        %s241 = scalar_lea.vmem %s1, %s240
        %s242 = smul.u32 64, %s22
        %p243 = scmp.lt.s32.totalorder %s21, 0
        %s244 = scalar_select %p243, %s21, 0
        %s245 = scalar_lea.vmem %s2, %s244
        %p246 = scmp.eq.s32.totalorder %s22, 0
        // Predicated region
        $region33: #{classifier_forward.3} parent=31 // pred_check
          %p247 = pneg %p246
        $region34: #{classifier_forward.3} parent=31 // pred_check_branch
          %249 = sbr.rel (%p247) target = $region36
        $region35: #{classifier_forward.3} parent=31 // pred_region
          %vm250 = vcmask 58368
          %251 = vst.msk [vmem:[#allocation2] sm:$0x3] %vm250, 0.0
        $region36: #{classifier_forward.3} parent=31 // pred_fallthru
          _
        %v252 = vld [vmem:[#allocation2] sm:$0x3]
        %v253 = vld [vmem:[%s232] sm:$0xff]
        %v254 = vld [vmem:[%s241] sm:$0xff]
        %v255 = vld [vmem:[%s241 + $0x8] sm:$0xff]
        %v256 = vld [vmem:[%s241 + $0x10] sm:$0xff]
        %v257 = vld [vmem:[%s241 + $0x18] sm:$0xff]
        %v258 = vld [vmem:[%s241 + $0x20] sm:$0xff]
        %v259 = vld [vmem:[%s241 + $0x28] sm:$0xff]
        %v260 = vld [vmem:[%s241 + $0x30] sm:$0xff]
        %v261 = vld [vmem:[%s241 + $0x38] sm:$0xff]
        %v262 = vld [vmem:[%s241 + $0x40] sm:$0xff]
        %v263 = vld [vmem:[%s241 + $0x48] sm:$0xff]
        %v264 = vld [vmem:[%s241 + $0x50] sm:$0xff]
        %v265 = vld [vmem:[%s241 + $0x58] sm:$0xff]
        %v266 = vld [vmem:[%s241 + $0x60] sm:$0xff]
        %v267 = vld [vmem:[%s241 + $0x68] sm:$0xff]
        %v268 = vld [vmem:[%s241 + $0x70] sm:$0xff]
        %v269 = vld [vmem:[%s241 + $0x78] sm:$0xff]
        %v270 = vld [vmem:[%s241 + $0x80] sm:$0xff]
        %v271 = vld [vmem:[%s241 + $0x88] sm:$0xff]
        %v272 = vld [vmem:[%s241 + $0x90] sm:$0xff]
        %v273 = vld [vmem:[%s241 + $0x98] sm:$0xff]
        %v274 = vld [vmem:[%s241 + $0xa0] sm:$0xff]
        %v275 = vld [vmem:[%s241 + $0xa8] sm:$0xff]
        %v276 = vld [vmem:[%s241 + $0xb0] sm:$0xff]
        %v277 = vld [vmem:[%s241 + $0xb8] sm:$0xff]
        %v278 = vld [vmem:[%s241 + $0xc0] sm:$0xff]
        %v279 = vld [vmem:[%s241 + $0xc8] sm:$0xff]
        %v280 = vld [vmem:[%s241 + $0xd0] sm:$0xff]
        %v281 = vld [vmem:[%s241 + $0xd8] sm:$0xff]
        %v282 = vld [vmem:[%s241 + $0xe0] sm:$0xff]
        %v283 = vld [vmem:[%s241 + $0xe8] sm:$0xff]
        %v284 = vld [vmem:[%s241 + $0xf0] sm:$0xff]
        %v285 = vld [vmem:[%s241 + $0xf8] sm:$0xff]
        %v286 = vld [vmem:[%s241 + $0x100] sm:$0xff]
        %v287 = vld [vmem:[%s241 + $0x108] sm:$0xff]
        %v288 = vld [vmem:[%s241 + $0x110] sm:$0xff]
        %v289 = vld [vmem:[%s241 + $0x118] sm:$0xff]
        %v290 = vld [vmem:[%s241 + $0x120] sm:$0xff]
        %v291 = vld [vmem:[%s241 + $0x128] sm:$0xff]
        %v292 = vld [vmem:[%s241 + $0x130] sm:$0xff]
        %v293 = vld [vmem:[%s241 + $0x138] sm:$0xff]
        %v294 = vld [vmem:[%s241 + $0x140] sm:$0xff]
        %v295 = vld [vmem:[%s241 + $0x148] sm:$0xff]
        %v296 = vld [vmem:[%s241 + $0x150] sm:$0xff]
        %v297 = vld [vmem:[%s241 + $0x158] sm:$0xff]
        %v298 = vld [vmem:[%s241 + $0x160] sm:$0xff]
        %v299 = vld [vmem:[%s241 + $0x168] sm:$0xff]
        %v300 = vld [vmem:[%s241 + $0x170] sm:$0xff]
        %v301 = vld [vmem:[%s241 + $0x178] sm:$0xff]
        %v302 = vld [vmem:[%s241 + $0x180] sm:$0xff]
        %v303 = vld [vmem:[%s241 + $0x188] sm:$0xff]
        %v304 = vld [vmem:[%s241 + $0x190] sm:$0xff]
        %v305 = vld [vmem:[%s241 + $0x198] sm:$0xff]
        %v306 = vld [vmem:[%s241 + $0x1a0] sm:$0xff]
        %v307 = vld [vmem:[%s241 + $0x1a8] sm:$0xff]
        %v308 = vld [vmem:[%s241 + $0x1b0] sm:$0xff]
        %v309 = vld [vmem:[%s241 + $0x1b8] sm:$0xff]
        %v310 = vld [vmem:[%s241 + $0x1c0] sm:$0xff]
        %v311 = vld [vmem:[%s241 + $0x1c8] sm:$0xff]
        %v312 = vld [vmem:[%s241 + $0x1d0] sm:$0xff]
        %v313 = vld [vmem:[%s241 + $0x1d8] sm:$0xff]
        %v314 = vld [vmem:[%s241 + $0x1e0] sm:$0xff]
        %v315 = vld [vmem:[%s241 + $0x1e8] sm:$0xff]
        %v316 = vld [vmem:[%s241 + $0x1f0] sm:$0xff]
        %v317 = vld [vmem:[%s241 + $0x1f8] sm:$0xff]
        %v319 = vcombine.high %v253, %v253
        %v321 = vunpack.c.l.s4 1983009808
        %v322 = vunpack.c.0.s8 %v321
        %v323 = vlaneseq
        %v324 = vshrl.u32 %v323, 7
        %v325 = vsub.s32 %v322, %v324
        %v326 = vrot.slane %v253, %v325
        %v328 = vunpack.c.l.s4 1983009808
        %v329 = vunpack.c.0.s8 %v328
        %v330 = vlaneseq
        %v331 = vshrl.u32 %v330, 7
        %v332 = vsub.s32 %v329, %v331
        %v333 = vrot.slane %v319, %v332
        %v334 = vcombine.high %v326, %v326
        %v335 = vcombine.high %v333, %v333
        %340 = vmatprep.subr.mxu0 0.0
        %341 = vmatpush1.msra.mxu0 %v254
        %342 = vmatprep.subr.mxu0 0.0
        %343 = vmatpush1.msra.mxu0 %v255
        %344 = vmatprep.subr.mxu0 0.0
        %345 = vmatpush1.msra.mxu0 %v256
        %346 = vmatprep.subr.mxu0 0.0
        %347 = vmatpush1.msra.mxu0 %v257
        %348 = vmatprep.subr.mxu0 0.0
        %349 = vmatpush1.msra.mxu0 %v258
        %350 = vmatprep.subr.mxu0 0.0
        %351 = vmatpush1.msra.mxu0 %v259
        %352 = vmatprep.subr.mxu0 0.0
        %353 = vmatpush1.msra.mxu0 %v260
        %354 = vmatprep.subr.mxu0 0.0
        %355 = vmatpush1.msra.mxu0 %v261
        %356 = vmatprep.subr.mxu0 0.0
        %357 = vmatpush1.msra.mxu0 %v262
        %358 = vmatprep.subr.mxu0 0.0
        %359 = vmatpush1.msra.mxu0 %v263
        %360 = vmatprep.subr.mxu0 0.0
        %361 = vmatpush1.msra.mxu0 %v264
        %362 = vmatprep.subr.mxu0 0.0
        %363 = vmatpush1.msra.mxu0 %v265
        %364 = vmatprep.subr.mxu0 0.0
        %365 = vmatpush1.msra.mxu0 %v266
        %366 = vmatprep.subr.mxu0 0.0
        %367 = vmatpush1.msra.mxu0 %v267
        %368 = vmatprep.subr.mxu0 0.0
        %369 = vmatpush1.msra.mxu0 %v268
        %370 = vmatprep.subr.mxu0 0.0
        %371 = vmatpush1.msra.mxu0 %v269
        %372 = vmatprep.subr.mxu0 0.0
        %373 = vmatpush1.msra.mxu0 %v270
        %374 = vmatprep.subr.mxu0 0.0
        %375 = vmatpush1.msra.mxu0 %v271
        %376 = vmatprep.subr.mxu0 0.0
        %377 = vmatpush1.msra.mxu0 %v272
        %378 = vmatprep.subr.mxu0 0.0
        %379 = vmatpush1.msra.mxu0 %v273
        %380 = vmatprep.subr.mxu0 0.0
        %381 = vmatpush1.msra.mxu0 %v274
        %382 = vmatprep.subr.mxu0 0.0
        %383 = vmatpush1.msra.mxu0 %v275
        %384 = vmatprep.subr.mxu0 0.0
        %385 = vmatpush1.msra.mxu0 %v276
        %386 = vmatprep.subr.mxu0 0.0
        %387 = vmatpush1.msra.mxu0 %v277
        %388 = vmatprep.subr.mxu0 0.0
        %389 = vmatpush1.msra.mxu0 %v278
        %390 = vmatprep.subr.mxu0 0.0
        %391 = vmatpush1.msra.mxu0 %v279
        %392 = vmatprep.subr.mxu0 0.0
        %393 = vmatpush1.msra.mxu0 %v280
        %394 = vmatprep.subr.mxu0 0.0
        %395 = vmatpush1.msra.mxu0 %v281
        %396 = vmatprep.subr.mxu0 0.0
        %397 = vmatpush1.msra.mxu0 %v282
        %398 = vmatprep.subr.mxu0 0.0
        %399 = vmatpush1.msra.mxu0 %v283
        %400 = vmatprep.subr.mxu0 0.0
        %401 = vmatpush1.msra.mxu0 %v284
        %402 = vmatprep.subr.mxu0 0.0
        %403 = vmatpush1.msra.mxu0 %v285
        %404 = vmatprep.mubr.f32.mxu0 %v334
        %405 = vmatmul.mubr.f32.gmra.mrb[0].mxu0 %v326
        %v406 = vpop.f32.mrb[0].mxu0
        %v407 = vadd.f32 0.0, %v406
        %v408 = vpop.f32.mrb[0].mxu0
        %409 = vdwg.mxu0
        %410 = vmatprep.subr.mxu0 0.0
        %411 = vmatpush1.msra.mxu0 %v286
        %412 = vmatprep.subr.mxu0 0.0
        %413 = vmatpush1.msra.mxu0 %v287
        %414 = vmatprep.subr.mxu0 0.0
        %415 = vmatpush1.msra.mxu0 %v288
        %416 = vmatprep.subr.mxu0 0.0
        %417 = vmatpush1.msra.mxu0 %v289
        %418 = vmatprep.subr.mxu0 0.0
        %419 = vmatpush1.msra.mxu0 %v290
        %420 = vmatprep.subr.mxu0 0.0
        %421 = vmatpush1.msra.mxu0 %v291
        %422 = vmatprep.subr.mxu0 0.0
        %423 = vmatpush1.msra.mxu0 %v292
        %424 = vmatprep.subr.mxu0 0.0
        %425 = vmatpush1.msra.mxu0 %v293
        %426 = vmatprep.subr.mxu0 0.0
        %427 = vmatpush1.msra.mxu0 %v294
        %428 = vmatprep.subr.mxu0 0.0
        %429 = vmatpush1.msra.mxu0 %v295
        %430 = vmatprep.subr.mxu0 0.0
        %431 = vmatpush1.msra.mxu0 %v296
        %432 = vmatprep.subr.mxu0 0.0
        %433 = vmatpush1.msra.mxu0 %v297
        %434 = vmatprep.subr.mxu0 0.0
        %435 = vmatpush1.msra.mxu0 %v298
        %436 = vmatprep.subr.mxu0 0.0
        %437 = vmatpush1.msra.mxu0 %v299
        %438 = vmatprep.subr.mxu0 0.0
        %439 = vmatpush1.msra.mxu0 %v300
        %440 = vmatprep.subr.mxu0 0.0
        %441 = vmatpush1.msra.mxu0 %v301
        %442 = vmatprep.subr.mxu0 0.0
        %443 = vmatpush1.msra.mxu0 %v302
        %444 = vmatprep.subr.mxu0 0.0
        %445 = vmatpush1.msra.mxu0 %v303
        %446 = vmatprep.subr.mxu0 0.0
        %447 = vmatpush1.msra.mxu0 %v304
        %448 = vmatprep.subr.mxu0 0.0
        %449 = vmatpush1.msra.mxu0 %v305
        %450 = vmatprep.subr.mxu0 0.0
        %451 = vmatpush1.msra.mxu0 %v306
        %452 = vmatprep.subr.mxu0 0.0
        %453 = vmatpush1.msra.mxu0 %v307
        %454 = vmatprep.subr.mxu0 0.0
        %455 = vmatpush1.msra.mxu0 %v308
        %456 = vmatprep.subr.mxu0 0.0
        %457 = vmatpush1.msra.mxu0 %v309
        %458 = vmatprep.subr.mxu0 0.0
        %459 = vmatpush1.msra.mxu0 %v310
        %460 = vmatprep.subr.mxu0 0.0
        %461 = vmatpush1.msra.mxu0 %v311
        %462 = vmatprep.subr.mxu0 0.0
        %463 = vmatpush1.msra.mxu0 %v312
        %464 = vmatprep.subr.mxu0 0.0
        %465 = vmatpush1.msra.mxu0 %v313
        %466 = vmatprep.subr.mxu0 0.0
        %467 = vmatpush1.msra.mxu0 %v314
        %468 = vmatprep.subr.mxu0 0.0
        %469 = vmatpush1.msra.mxu0 %v315
        %470 = vmatprep.subr.mxu0 0.0
        %471 = vmatpush1.msra.mxu0 %v316
        %472 = vmatprep.subr.mxu0 0.0
        %473 = vmatpush1.msra.mxu0 %v317
        %474 = vmatprep.mubr.f32.mxu0 %v335
        %475 = vmatmul.mubr.f32.gmra.mrb[0].mxu0 %v333
        %v476 = vpop.f32.mrb[0].mxu0
        %v477 = vadd.f32 %v407, %v476
        %v478 = vpop.f32.mrb[0].mxu0
        %479 = vdwg.mxu0
        %v480 = vadd.f32 %v252, %v477
        %vm481 = vcmask 58368
        %482 = vst.msk [vmem:[#allocation2] sm:$0x3] %vm481, %v480
        %p483 = scmp.eq.s32.totalorder %s22, 1
        // Predicated region
        $region37: #{classifier_forward.3} parent=31 // pred_check
          %p484 = pneg %p483
        $region38: #{classifier_forward.3} parent=31 // pred_check_branch
          %486 = sbr.rel (%p484) target = $region40
        $region39: #{classifier_forward.3} parent=31 // pred_region
          %v487 = vld [vmem:[#allocation2] sm:$0x3]
          %v488 = vld [vmem:[%s245] sm:$0x1]
          %v490 = vlaneseq
          %v491 = vshrl.u32 %v490, 7
          %v492 = vsub.s32 0, %v491
          %v493 = vrot.slane %v488, %v492
          %v495 = vadd.f32 %v487, %v493
          %496 = vst.msk [vmem:[#allocation3] sm:$0x3] %vm481, %v495
        $region40: #{classifier_forward.3} parent=31 // pred_fallthru
          _
        // Predicated region
        $region41: #{classifier_forward.3} parent=31 // pred_check
          %p497 = pneg %p136
        $region42: #{classifier_forward.3} parent=31 // pred_check_branch
          %499 = sbr.rel (%p497) target = $region44
        $region43: #{classifier_forward.3} parent=31 // pred_region
          %s501 = ssub.s32 32, 32
          %502 = vsyncadd [#allocation4], %s501
          %s503 = sadd.s32 %s21, %s20
          %s504 = smul.addr %s503, 32
          %s505 = scalar_lea.hbm %s3, %s504
          %s507 = sshll.u32 [#allocation3], 4
          %s508 = int_to_ptr.vmem [resolvable:$true] %s507
          %510 = dma.vmem_to_hbm [thread:$0]  %s508, 32, %s505, [#allocation4]
        $region44: #{classifier_forward.3} parent=31 // pred_fallthru
          _
        // Predicated region
        $region45: #{classifier_forward.3} parent=31 // pred_check
          %p511 = pneg %p136
        $region46: #{classifier_forward.3} parent=31 // pred_check_branch
          %513 = sbr.rel (%p511) target = $region48
        $region47: #{classifier_forward.3} parent=31 // pred_region
          %514 = dma.done [#allocation4], 32
        $region48: #{classifier_forward.3} parent=31 // pred_fallthru
          _
      $region32: #{classifier_forward.3} parent=5 // pred_fallthru
        _
      %p515 = scmp.le.s32.totalorder 2, %s10
      // Predicated region
      $region49: #{classifier_forward.3} parent=5 // pred_check
        %p516 = pneg %p515
      $region50: #{classifier_forward.3} parent=5 // pred_check_branch
        %518 = sbr.rel (%p516) target = $region52
      $region51: #{classifier_forward.3} parent=5 // pred_region
        %s519 = ssub.s32 %s10, 2
      $region52: #{classifier_forward.3} parent=5 // pred_fallthru
        _
    $region6: #{classifier_forward.3} parent=1 // loop_footer
      %s14 = sadd.s32 1, %s10
    $region7: #{classifier_forward.3} parent=1 // loop_footer_branch
      %9 = sbr.rel target = $region3
    $region8: #{classifier_forward.3} parent=1 // loop_exit
      _
    %520 = vsyncpa [#allocation4], 1
    %s521 = scalar_lea.sflag [#allocation4], 1
    %522 = vsyncpa %s521, 1

// kernel: classifier_forward.2
$region0: #{classifier_forward.2}
  #allocation0 [shape = 'u32[]', space=smem, size = 0x4, offset = 0x4, fixed_abs, tag = 'smem constant byte address 0x4 - core index']
  #allocation1 [shape = 'u32[144,128]{1,0:T(1,128)}', space=vmem, size = 0x12000, scoped, tag = 'internal scratch']
  %s0 = inlined_call_operand.vmem [shape: f32[2,8,16], index: 0, kind: input, shape index: {}]
  %s1 = inlined_call_operand.vmem [shape: f32[16,128], index: 1, kind: input, shape index: {}]
  %s2 = inlined_call_operand.vmem [shape: f32[1,128], index: 2, kind: input, shape index: {}]
  %s3 = inlined_call_operand.vmem [shape: f32[2,128,128], index: 3, kind: input, shape index: {}]
  %s4 = inlined_call_operand.vmem [shape: f32[2,128,128], index: 4, kind: input, shape index: {}]
  %s5 = inlined_call_operand.vmem [shape: f32[2,128,128], index: 5, kind: input, shape index: {}]
  %s6 = inlined_call_operand.vmem [shape: f32[2,4,32,128], index: 6, kind: input, shape index: {}]
  %s7 = inlined_call_operand.vmem [shape: f32[2,1,128], index: 7, kind: input, shape index: {}]
  %s8 = inlined_call_operand.vmem [shape: f32[2,1,128], index: 8, kind: input, shape index: {}]
  %s9 = inlined_call_operand.vmem [shape: f32[2,1,128], index: 9, kind: input, shape index: {}]
  %s10 = inlined_call_operand.vmem [shape: f32[2,128,512], index: 10, kind: input, shape index: {}]
  %s11 = inlined_call_operand.vmem [shape: f32[2,1,512], index: 11, kind: input, shape index: {}]
  %s12 = inlined_call_operand.vmem [shape: f32[2,512,128], index: 12, kind: input, shape index: {}]
  %s13 = inlined_call_operand.vmem [shape: f32[2,1,128], index: 13, kind: input, shape index: {}]
  %s14 = inlined_call_operand.vmem [shape: f32[2,1,128], index: 14, kind: input, shape index: {}]
  %s15 = inlined_call_operand.vmem [shape: f32[2,1,128], index: 15, kind: input, shape index: {}]
  %s16 = inlined_call_operand.vmem [shape: f32[2,8,128], index: 16, kind: output, shape index: {}]
  %s17 = sld [smem:[#allocation0]]
  $region101: #{classifier_forward.2} parent=0
    _
  %s19 = ssub.s32 1, %s17
  %s20 = scalar_select 0, %s19, %s17
  loop: start=0, step=1, limit=6
  $region2: #{classifier_forward.2} parent=0 // loop_pre_header
    _
  $region3: #{classifier_forward.2} parent=0 // loop_header
    %s22 = sphi 0, %s26
    %p23 = scmp.ge.s32.totalorder %s22, 6
    %s29 = sphi 0, %s41
    %s30 = sphi 0, %s37
    %s31 = sphi 0, %s29
    %s32 = sphi 0, %s30
    %s33 = sphi 0, %s31
    %s34 = sphi 0, %s32
    %s44 = sphi 0, %s46
    %s47 = sphi 0, %s44
    %s48 = sphi 0, %s47
    %s64 = sphi 0, %s48
    %s68 = sphi 0, %s68
    %s70 = sphi 0, %s68
    %s71 = sphi 0, %s70
    %s85 = sphi 0, %s71
    %s89 = sphi 0, %s89
    %s91 = sphi 0, %s89
    %s92 = sphi 0, %s91
    %s106 = sphi 0, %s92
    %s112 = sphi 0, %s114
    %s115 = sphi 0, %s112
    %s116 = sphi 0, %s115
    %s132 = sphi 0, %s116
    %s138 = sphi 0, %s140
    %s141 = sphi 0, %s138
    %s142 = sphi 0, %s141
    %s158 = sphi 0, %s142
    %s164 = sphi 0, %s166
    %s167 = sphi 0, %s164
    %s168 = sphi 0, %s167
    %s184 = sphi 0, %s168
    %s190 = sphi 0, %s192
    %s193 = sphi 0, %s190
    %s194 = sphi 0, %s193
    %s210 = sphi 0, %s194
    %s216 = sphi 0, %s218
    %s219 = sphi 0, %s216
    %s220 = sphi 0, %s219
    %s236 = sphi 0, %s220
    %s242 = sphi 0, %s244
    %s245 = sphi 0, %s242
    %s246 = sphi 0, %s245
    %s262 = sphi 0, %s246
    %s268 = sphi 0, %s270
    %s271 = sphi 0, %s268
    %s272 = sphi 0, %s271
    %s288 = sphi 0, %s272
    %s294 = sphi 0, %s296
    %s297 = sphi 0, %s294
    %s298 = sphi 0, %s297
    %s314 = sphi 0, %s298
    %s320 = sphi 0, %s322
    %s323 = sphi 0, %s320
    %s324 = sphi 0, %s323
    %s340 = sphi 0, %s324
    %s346 = sphi 0, %s348
    %s349 = sphi 0, %s346
    %s350 = sphi 0, %s349
    %s366 = sphi 0, %s350
    %s372 = sphi 0, %s374
    %s375 = sphi 0, %s372
    %s376 = sphi 0, %s375
    %s392 = sphi 0, %s376
    %s398 = sphi 0, %s400
    %s401 = sphi 0, %s398
    %s402 = sphi 0, %s401
    %s418 = sphi 0, %s402
    %s424 = sphi 0, %s426
    %s427 = sphi 0, %s424
    %s428 = sphi 0, %s427
    %s444 = sphi 0, %s428
    %s450 = sphi 0, %s452
    %s453 = sphi 0, %s450
    %s454 = sphi 0, %s453
    %s470 = sphi 0, %s454
  $region4: #{classifier_forward.2} parent=0 // loop_header_branch
    %25 = sbr.rel (%p23) target = $region8
  $region5: #{classifier_forward.2} parent=0 // loop_body
    %s27 = ssub.s32 %s22, 1
    %s28 = ssub.s32 %s22, 2
    %s35 = sadd.s32 1, %s30
    %p36 = scmp.ge.s32.totalorder %s35, 2
    %s37 = scalar_select %p36, 0, %s35
    %s38 = sadd.s32 1, %s29
    %s39 = scalar_select %p36, %s38, %s29
    %p40 = scmp.ge.s32.totalorder %s39, 2
    %s41 = scalar_select %p40, 0, %s39
    %s42 = ssub.s32 %s29, %s41
    %p43 = scmp.eq.s32.totalorder %s42, 0
    %s45 = sadd.s32 %s44, 1
    %s46 = scalar_select %p43, %s44, %s45
    %p49 = pneg %p43
    %p50 = scmp.eq.s32.totalorder %s22, 3
    %p51 = por %p49, %p50
    %p52 = scmp.ne.s32.totalorder %s44, %s47
    %p53 = scmp.eq.s32.totalorder %s22, 0
    %p54 = por %p52, %p53
    %p55 = scmp.ne.s32.totalorder %s44, %s47
    %p56 = scmp.eq.s32.totalorder %s27, 3
    %p57 = por %p55, %p56
    %p58 = scmp.ne.s32.totalorder %s47, %s48
    %p59 = scmp.eq.s32.totalorder %s27, 0
    %p60 = por %p58, %p59
    %p61 = scmp.ne.s32.totalorder %s47, %s48
    %p62 = scmp.eq.s32.totalorder %s28, 3
    %p63 = por %p61, %p62
    %p65 = scmp.ne.s32.totalorder %s48, %s64
    %p66 = scmp.eq.s32.totalorder %s28, 0
    %p67 = por %p65, %p66
    %s69 = sadd.s32 %s68, 1
    %p72 = scmp.eq.s32.totalorder %s22, 3
    %p73 = scmp.ne.s32.totalorder %s68, %s70
    %p74 = scmp.eq.s32.totalorder %s22, 0
    %p75 = por %p73, %p74
    %p76 = scmp.ne.s32.totalorder %s68, %s70
    %p77 = scmp.eq.s32.totalorder %s27, 3
    %p78 = por %p76, %p77
    %p79 = scmp.ne.s32.totalorder %s70, %s71
    %p80 = scmp.eq.s32.totalorder %s27, 0
    %p81 = por %p79, %p80
    %p82 = scmp.ne.s32.totalorder %s70, %s71
    %p83 = scmp.eq.s32.totalorder %s28, 3
    %p84 = por %p82, %p83
    %p86 = scmp.ne.s32.totalorder %s71, %s85
    %p87 = scmp.eq.s32.totalorder %s28, 0
    %p88 = por %p86, %p87
    %s90 = sadd.s32 %s89, 1
    %p93 = scmp.eq.s32.totalorder %s22, 3
    %p94 = scmp.ne.s32.totalorder %s89, %s91
    %p95 = scmp.eq.s32.totalorder %s22, 0
    %p96 = por %p94, %p95
    %p97 = scmp.ne.s32.totalorder %s89, %s91
    %p98 = scmp.eq.s32.totalorder %s27, 3
    %p99 = por %p97, %p98
    %p100 = scmp.ne.s32.totalorder %s91, %s92
    %p101 = scmp.eq.s32.totalorder %s27, 0
    %p102 = por %p100, %p101
    %p103 = scmp.ne.s32.totalorder %s91, %s92
    %p104 = scmp.eq.s32.totalorder %s28, 3
    %p105 = por %p103, %p104
    %p107 = scmp.ne.s32.totalorder %s92, %s106
    %p108 = scmp.eq.s32.totalorder %s28, 0
    %p109 = por %p107, %p108
    %s110 = ssub.s32 %s30, %s37
    %p111 = scmp.eq.s32.totalorder %s110, 0
    %s113 = sadd.s32 %s112, 1
    %s114 = scalar_select %p111, %s112, %s113
    %p117 = pneg %p111
    %p118 = scmp.eq.s32.totalorder %s22, 3
    %p119 = por %p117, %p118
    %p120 = scmp.ne.s32.totalorder %s112, %s115
    %p121 = scmp.eq.s32.totalorder %s22, 0
    %p122 = por %p120, %p121
    %p123 = scmp.ne.s32.totalorder %s112, %s115
    %p124 = scmp.eq.s32.totalorder %s27, 3
    %p125 = por %p123, %p124
    %p126 = scmp.ne.s32.totalorder %s115, %s116
    %p127 = scmp.eq.s32.totalorder %s27, 0
    %p128 = por %p126, %p127
    %p129 = scmp.ne.s32.totalorder %s115, %s116
    %p130 = scmp.eq.s32.totalorder %s28, 3
    %p131 = por %p129, %p130
    %p133 = scmp.ne.s32.totalorder %s116, %s132
    %p134 = scmp.eq.s32.totalorder %s28, 0
    %p135 = por %p133, %p134
    %s136 = ssub.s32 %s30, %s37
    %p137 = scmp.eq.s32.totalorder %s136, 0
    %s139 = sadd.s32 %s138, 1
    %s140 = scalar_select %p137, %s138, %s139
    %p143 = pneg %p137
    %p144 = scmp.eq.s32.totalorder %s22, 3
    %p145 = por %p143, %p144
    %p146 = scmp.ne.s32.totalorder %s138, %s141
    %p147 = scmp.eq.s32.totalorder %s22, 0
    %p148 = por %p146, %p147
    %p149 = scmp.ne.s32.totalorder %s138, %s141
    %p150 = scmp.eq.s32.totalorder %s27, 3
    %p151 = por %p149, %p150
    %p152 = scmp.ne.s32.totalorder %s141, %s142
    %p153 = scmp.eq.s32.totalorder %s27, 0
    %p154 = por %p152, %p153
    %p155 = scmp.ne.s32.totalorder %s141, %s142
    %p156 = scmp.eq.s32.totalorder %s28, 3
    %p157 = por %p155, %p156
    %p159 = scmp.ne.s32.totalorder %s142, %s158
    %p160 = scmp.eq.s32.totalorder %s28, 0
    %p161 = por %p159, %p160
    %s162 = ssub.s32 %s30, %s37
    %p163 = scmp.eq.s32.totalorder %s162, 0
    %s165 = sadd.s32 %s164, 1
    %s166 = scalar_select %p163, %s164, %s165
    %p169 = pneg %p163
    %p170 = scmp.eq.s32.totalorder %s22, 3
    %p171 = por %p169, %p170
    %p172 = scmp.ne.s32.totalorder %s164, %s167
    %p173 = scmp.eq.s32.totalorder %s22, 0
    %p174 = por %p172, %p173
    %p175 = scmp.ne.s32.totalorder %s164, %s167
    %p176 = scmp.eq.s32.totalorder %s27, 3
    %p177 = por %p175, %p176
    %p178 = scmp.ne.s32.totalorder %s167, %s168
    %p179 = scmp.eq.s32.totalorder %s27, 0
    %p180 = por %p178, %p179
    %p181 = scmp.ne.s32.totalorder %s167, %s168
    %p182 = scmp.eq.s32.totalorder %s28, 3
    %p183 = por %p181, %p182
    %p185 = scmp.ne.s32.totalorder %s168, %s184
    %p186 = scmp.eq.s32.totalorder %s28, 0
    %p187 = por %p185, %p186
    %s188 = ssub.s32 %s30, %s37
    %p189 = scmp.eq.s32.totalorder %s188, 0
    %s191 = sadd.s32 %s190, 1
    %s192 = scalar_select %p189, %s190, %s191
    %p195 = pneg %p189
    %p196 = scmp.eq.s32.totalorder %s22, 3
    %p197 = por %p195, %p196
    %p198 = scmp.ne.s32.totalorder %s190, %s193
    %p199 = scmp.eq.s32.totalorder %s22, 0
    %p200 = por %p198, %p199
    %p201 = scmp.ne.s32.totalorder %s190, %s193
    %p202 = scmp.eq.s32.totalorder %s27, 3
    %p203 = por %p201, %p202
    %p204 = scmp.ne.s32.totalorder %s193, %s194
    %p205 = scmp.eq.s32.totalorder %s27, 0
    %p206 = por %p204, %p205
    %p207 = scmp.ne.s32.totalorder %s193, %s194
    %p208 = scmp.eq.s32.totalorder %s28, 3
    %p209 = por %p207, %p208
    %p211 = scmp.ne.s32.totalorder %s194, %s210
    %p212 = scmp.eq.s32.totalorder %s28, 0
    %p213 = por %p211, %p212
    %s214 = ssub.s32 %s30, %s37
    %p215 = scmp.eq.s32.totalorder %s214, 0
    %s217 = sadd.s32 %s216, 1
    %s218 = scalar_select %p215, %s216, %s217
    %p221 = pneg %p215
    %p222 = scmp.eq.s32.totalorder %s22, 3
    %p223 = por %p221, %p222
    %p224 = scmp.ne.s32.totalorder %s216, %s219
    %p225 = scmp.eq.s32.totalorder %s22, 0
    %p226 = por %p224, %p225
    %p227 = scmp.ne.s32.totalorder %s216, %s219
    %p228 = scmp.eq.s32.totalorder %s27, 3
    %p229 = por %p227, %p228
    %p230 = scmp.ne.s32.totalorder %s219, %s220
    %p231 = scmp.eq.s32.totalorder %s27, 0
    %p232 = por %p230, %p231
    %p233 = scmp.ne.s32.totalorder %s219, %s220
    %p234 = scmp.eq.s32.totalorder %s28, 3
    %p235 = por %p233, %p234
    %p237 = scmp.ne.s32.totalorder %s220, %s236
    %p238 = scmp.eq.s32.totalorder %s28, 0
    %p239 = por %p237, %p238
    %s240 = ssub.s32 %s30, %s37
    %p241 = scmp.eq.s32.totalorder %s240, 0
    %s243 = sadd.s32 %s242, 1
    %s244 = scalar_select %p241, %s242, %s243
    %p247 = pneg %p241
    %p248 = scmp.eq.s32.totalorder %s22, 3
    %p249 = por %p247, %p248
    %p250 = scmp.ne.s32.totalorder %s242, %s245
    %p251 = scmp.eq.s32.totalorder %s22, 0
    %p252 = por %p250, %p251
    %p253 = scmp.ne.s32.totalorder %s242, %s245
    %p254 = scmp.eq.s32.totalorder %s27, 3
    %p255 = por %p253, %p254
    %p256 = scmp.ne.s32.totalorder %s245, %s246
    %p257 = scmp.eq.s32.totalorder %s27, 0
    %p258 = por %p256, %p257
    %p259 = scmp.ne.s32.totalorder %s245, %s246
    %p260 = scmp.eq.s32.totalorder %s28, 3
    %p261 = por %p259, %p260
    %p263 = scmp.ne.s32.totalorder %s246, %s262
    %p264 = scmp.eq.s32.totalorder %s28, 0
    %p265 = por %p263, %p264
    %s266 = ssub.s32 %s30, %s37
    %p267 = scmp.eq.s32.totalorder %s266, 0
    %s269 = sadd.s32 %s268, 1
    %s270 = scalar_select %p267, %s268, %s269
    %p273 = pneg %p267
    %p274 = scmp.eq.s32.totalorder %s22, 3
    %p275 = por %p273, %p274
    %p276 = scmp.ne.s32.totalorder %s268, %s271
    %p277 = scmp.eq.s32.totalorder %s22, 0
    %p278 = por %p276, %p277
    %p279 = scmp.ne.s32.totalorder %s268, %s271
    %p280 = scmp.eq.s32.totalorder %s27, 3
    %p281 = por %p279, %p280
    %p282 = scmp.ne.s32.totalorder %s271, %s272
    %p283 = scmp.eq.s32.totalorder %s27, 0
    %p284 = por %p282, %p283
    %p285 = scmp.ne.s32.totalorder %s271, %s272
    %p286 = scmp.eq.s32.totalorder %s28, 3
    %p287 = por %p285, %p286
    %p289 = scmp.ne.s32.totalorder %s272, %s288
    %p290 = scmp.eq.s32.totalorder %s28, 0
    %p291 = por %p289, %p290
    %s292 = ssub.s32 %s30, %s37
    %p293 = scmp.eq.s32.totalorder %s292, 0
    %s295 = sadd.s32 %s294, 1
    %s296 = scalar_select %p293, %s294, %s295
    %p299 = pneg %p293
    %p300 = scmp.eq.s32.totalorder %s22, 3
    %p301 = por %p299, %p300
    %p302 = scmp.ne.s32.totalorder %s294, %s297
    %p303 = scmp.eq.s32.totalorder %s22, 0
    %p304 = por %p302, %p303
    %p305 = scmp.ne.s32.totalorder %s294, %s297
    %p306 = scmp.eq.s32.totalorder %s27, 3
    %p307 = por %p305, %p306
    %p308 = scmp.ne.s32.totalorder %s297, %s298
    %p309 = scmp.eq.s32.totalorder %s27, 0
    %p310 = por %p308, %p309
    %p311 = scmp.ne.s32.totalorder %s297, %s298
    %p312 = scmp.eq.s32.totalorder %s28, 3
    %p313 = por %p311, %p312
    %p315 = scmp.ne.s32.totalorder %s298, %s314
    %p316 = scmp.eq.s32.totalorder %s28, 0
    %p317 = por %p315, %p316
    %s318 = ssub.s32 %s30, %s37
    %p319 = scmp.eq.s32.totalorder %s318, 0
    %s321 = sadd.s32 %s320, 1
    %s322 = scalar_select %p319, %s320, %s321
    %p325 = pneg %p319
    %p326 = scmp.eq.s32.totalorder %s22, 3
    %p327 = por %p325, %p326
    %p328 = scmp.ne.s32.totalorder %s320, %s323
    %p329 = scmp.eq.s32.totalorder %s22, 0
    %p330 = por %p328, %p329
    %p331 = scmp.ne.s32.totalorder %s320, %s323
    %p332 = scmp.eq.s32.totalorder %s27, 3
    %p333 = por %p331, %p332
    %p334 = scmp.ne.s32.totalorder %s323, %s324
    %p335 = scmp.eq.s32.totalorder %s27, 0
    %p336 = por %p334, %p335
    %p337 = scmp.ne.s32.totalorder %s323, %s324
    %p338 = scmp.eq.s32.totalorder %s28, 3
    %p339 = por %p337, %p338
    %p341 = scmp.ne.s32.totalorder %s324, %s340
    %p342 = scmp.eq.s32.totalorder %s28, 0
    %p343 = por %p341, %p342
    %s344 = ssub.s32 %s30, %s37
    %p345 = scmp.eq.s32.totalorder %s344, 0
    %s347 = sadd.s32 %s346, 1
    %s348 = scalar_select %p345, %s346, %s347
    %p351 = pneg %p345
    %p352 = scmp.eq.s32.totalorder %s22, 3
    %p353 = por %p351, %p352
    %p354 = scmp.ne.s32.totalorder %s346, %s349
    %p355 = scmp.eq.s32.totalorder %s22, 0
    %p356 = por %p354, %p355
    %p357 = scmp.ne.s32.totalorder %s346, %s349
    %p358 = scmp.eq.s32.totalorder %s27, 3
    %p359 = por %p357, %p358
    %p360 = scmp.ne.s32.totalorder %s349, %s350
    %p361 = scmp.eq.s32.totalorder %s27, 0
    %p362 = por %p360, %p361
    %p363 = scmp.ne.s32.totalorder %s349, %s350
    %p364 = scmp.eq.s32.totalorder %s28, 3
    %p365 = por %p363, %p364
    %p367 = scmp.ne.s32.totalorder %s350, %s366
    %p368 = scmp.eq.s32.totalorder %s28, 0
    %p369 = por %p367, %p368
    %s370 = ssub.s32 %s30, %s37
    %p371 = scmp.eq.s32.totalorder %s370, 0
    %s373 = sadd.s32 %s372, 1
    %s374 = scalar_select %p371, %s372, %s373
    %p377 = pneg %p371
    %p378 = scmp.eq.s32.totalorder %s22, 3
    %p379 = por %p377, %p378
    %p380 = scmp.ne.s32.totalorder %s372, %s375
    %p381 = scmp.eq.s32.totalorder %s22, 0
    %p382 = por %p380, %p381
    %p383 = scmp.ne.s32.totalorder %s372, %s375
    %p384 = scmp.eq.s32.totalorder %s27, 3
    %p385 = por %p383, %p384
    %p386 = scmp.ne.s32.totalorder %s375, %s376
    %p387 = scmp.eq.s32.totalorder %s27, 0
    %p388 = por %p386, %p387
    %p389 = scmp.ne.s32.totalorder %s375, %s376
    %p390 = scmp.eq.s32.totalorder %s28, 3
    %p391 = por %p389, %p390
    %p393 = scmp.ne.s32.totalorder %s376, %s392
    %p394 = scmp.eq.s32.totalorder %s28, 0
    %p395 = por %p393, %p394
    %s396 = ssub.s32 %s30, %s37
    %p397 = scmp.eq.s32.totalorder %s396, 0
    %s399 = sadd.s32 %s398, 1
    %s400 = scalar_select %p397, %s398, %s399
    %p403 = pneg %p397
    %p404 = scmp.eq.s32.totalorder %s22, 3
    %p405 = por %p403, %p404
    %p406 = scmp.ne.s32.totalorder %s398, %s401
    %p407 = scmp.eq.s32.totalorder %s22, 0
    %p408 = por %p406, %p407
    %p409 = scmp.ne.s32.totalorder %s398, %s401
    %p410 = scmp.eq.s32.totalorder %s27, 3
    %p411 = por %p409, %p410
    %p412 = scmp.ne.s32.totalorder %s401, %s402
    %p413 = scmp.eq.s32.totalorder %s27, 0
    %p414 = por %p412, %p413
    %p415 = scmp.ne.s32.totalorder %s401, %s402
    %p416 = scmp.eq.s32.totalorder %s28, 3
    %p417 = por %p415, %p416
    %p419 = scmp.ne.s32.totalorder %s402, %s418
    %p420 = scmp.eq.s32.totalorder %s28, 0
    %p421 = por %p419, %p420
    %s422 = ssub.s32 %s30, %s37
    %p423 = scmp.eq.s32.totalorder %s422, 0
    %s425 = sadd.s32 %s424, 1
    %s426 = scalar_select %p423, %s424, %s425
    %p429 = pneg %p423
    %p430 = scmp.eq.s32.totalorder %s22, 3
    %p431 = por %p429, %p430
    %p432 = scmp.ne.s32.totalorder %s424, %s427
    %p433 = scmp.eq.s32.totalorder %s22, 0
    %p434 = por %p432, %p433
    %p435 = scmp.ne.s32.totalorder %s424, %s427
    %p436 = scmp.eq.s32.totalorder %s27, 3
    %p437 = por %p435, %p436
    %p438 = scmp.ne.s32.totalorder %s427, %s428
    %p439 = scmp.eq.s32.totalorder %s27, 0
    %p440 = por %p438, %p439
    %p441 = scmp.ne.s32.totalorder %s427, %s428
    %p442 = scmp.eq.s32.totalorder %s28, 3
    %p443 = por %p441, %p442
    %p445 = scmp.ne.s32.totalorder %s428, %s444
    %p446 = scmp.eq.s32.totalorder %s28, 0
    %p447 = por %p445, %p446
    %s448 = ssub.s32 %s29, %s41
    %p449 = scmp.eq.s32.totalorder %s448, 0
    %s451 = sadd.s32 %s450, 1
    %s452 = scalar_select %p449, %s450, %s451
    %p455 = pneg %p449
    %p456 = scmp.eq.s32.totalorder %s22, 3
    %p457 = por %p455, %p456
    %p458 = scmp.ne.s32.totalorder %s450, %s453
    %p459 = scmp.eq.s32.totalorder %s22, 0
    %p460 = por %p458, %p459
    %p461 = scmp.ne.s32.totalorder %s450, %s453
    %p462 = scmp.eq.s32.totalorder %s27, 3
    %p463 = por %p461, %p462
    %p464 = scmp.ne.s32.totalorder %s453, %s454
    %p465 = scmp.eq.s32.totalorder %s27, 0
    %p466 = por %p464, %p465
    %p467 = scmp.ne.s32.totalorder %s453, %s454
    %p468 = scmp.eq.s32.totalorder %s28, 3
    %p469 = por %p467, %p468
    %p471 = scmp.ne.s32.totalorder %s454, %s470
    %p472 = scmp.eq.s32.totalorder %s28, 0
    %p473 = por %p471, %p472
    %p474 = scmp.le.s32.totalorder 1, %s22
    %p475 = scmp.lt.s32.totalorder %s22, 5
    %p476 = pnand %p474, %p475
    %p477 = pneg %p476
    // Predicated region
    $region9: #{classifier_forward.2} parent=5 // pred_check
      _
    $region10: #{classifier_forward.2} parent=5 // pred_check_branch
      %479 = sbr.rel (%p476) target = $region12
    $region11: #{classifier_forward.2} parent=5 // pred_region
      %s480 = ssub.s32 %s22, 1
      // Predicated region
      $region13: #{classifier_forward.2} parent=11 // pred_check
        %p481 = pneg %p81
      $region14: #{classifier_forward.2} parent=11 // pred_check_branch
        %483 = sbr.rel (%p481) target = $region16
      $region15: #{classifier_forward.2} parent=11 // pred_region
        _
      $region16: #{classifier_forward.2} parent=11 // pred_fallthru
        _
      // Predicated region
      $region17: #{classifier_forward.2} parent=11 // pred_check
        %p484 = pneg %p102
      $region18: #{classifier_forward.2} parent=11 // pred_check_branch
        %486 = sbr.rel (%p484) target = $region20
      $region19: #{classifier_forward.2} parent=11 // pred_region
        _
      $region20: #{classifier_forward.2} parent=11 // pred_fallthru
        _
    $region12: #{classifier_forward.2} parent=5 // pred_fallthru
      _
    %p487 = scmp.lt.s32.totalorder %s22, 4
    // Predicated region
    $region21: #{classifier_forward.2} parent=5 // pred_check
      %p488 = pneg %p487
    $region22: #{classifier_forward.2} parent=5 // pred_check_branch
      %490 = sbr.rel (%p488) target = $region24
    $region23: #{classifier_forward.2} parent=5 // pred_region
      // Predicated region
      $region25: #{classifier_forward.2} parent=23 // pred_check
        %p491 = pneg %p54
      $region26: #{classifier_forward.2} parent=23 // pred_check_branch
        %493 = sbr.rel (%p491) target = $region28
      $region27: #{classifier_forward.2} parent=23 // pred_region
        %p494 = scmp.lt.s32.totalorder %s29, 1
        %s495 = scalar_select %p494, %s29, 1
        %s496 = smul.addr %s495, 8
        %s497 = scalar_lea.vmem %s0, %s496
      $region28: #{classifier_forward.2} parent=23 // pred_fallthru
        _
      // Predicated region
      $region29: #{classifier_forward.2} parent=23 // pred_check
        %p498 = pneg %p122
      $region30: #{classifier_forward.2} parent=23 // pred_check_branch
        %500 = sbr.rel (%p498) target = $region32
      $region31: #{classifier_forward.2} parent=23 // pred_region
        %p501 = scmp.lt.s32.totalorder %s30, 1
        %s502 = scalar_select %p501, %s30, 1
        %s503 = smul.addr %s502, 16
        %s504 = smul.addr %s503, 8
        %s505 = scalar_lea.vmem %s3, %s504
      $region32: #{classifier_forward.2} parent=23 // pred_fallthru
        _
      // Predicated region
      $region33: #{classifier_forward.2} parent=23 // pred_check
        %p506 = pneg %p148
      $region34: #{classifier_forward.2} parent=23 // pred_check_branch
        %508 = sbr.rel (%p506) target = $region36
      $region35: #{classifier_forward.2} parent=23 // pred_region
        %p509 = scmp.lt.s32.totalorder %s30, 1
        %s510 = scalar_select %p509, %s30, 1
        %s511 = smul.addr %s510, 16
        %s512 = smul.addr %s511, 8
        %s513 = scalar_lea.vmem %s4, %s512
      $region36: #{classifier_forward.2} parent=23 // pred_fallthru
        _
      // Predicated region
      $region37: #{classifier_forward.2} parent=23 // pred_check
        %p514 = pneg %p174
      $region38: #{classifier_forward.2} parent=23 // pred_check_branch
        %516 = sbr.rel (%p514) target = $region40
      $region39: #{classifier_forward.2} parent=23 // pred_region
        %p517 = scmp.lt.s32.totalorder %s30, 1
        %s518 = scalar_select %p517, %s30, 1
        %s519 = smul.addr %s518, 16
        %s520 = smul.addr %s519, 8
        %s521 = scalar_lea.vmem %s5, %s520
      $region40: #{classifier_forward.2} parent=23 // pred_fallthru
        _
      // Predicated region
      $region41: #{classifier_forward.2} parent=23 // pred_check
        %p522 = pneg %p200
      $region42: #{classifier_forward.2} parent=23 // pred_check_branch
        %524 = sbr.rel (%p522) target = $region44
      $region43: #{classifier_forward.2} parent=23 // pred_region
        %p525 = scmp.lt.s32.totalorder %s30, 1
        %s526 = scalar_select %p525, %s30, 1
        %s527 = smul.addr %s526, 16
        %s528 = smul.addr %s527, 8
        %s529 = scalar_lea.vmem %s6, %s528
      $region44: #{classifier_forward.2} parent=23 // pred_fallthru
        _
      // Predicated region
      $region45: #{classifier_forward.2} parent=23 // pred_check
        %p530 = pneg %p226
      $region46: #{classifier_forward.2} parent=23 // pred_check_branch
        %532 = sbr.rel (%p530) target = $region48
      $region47: #{classifier_forward.2} parent=23 // pred_region
        %p533 = scmp.lt.s32.totalorder %s30, 1
        %s534 = scalar_select %p533, %s30, 1
        %s535 = scalar_lea.vmem %s7, %s534
      $region48: #{classifier_forward.2} parent=23 // pred_fallthru
        _
      // Predicated region
      $region49: #{classifier_forward.2} parent=23 // pred_check
        %p536 = pneg %p252
      $region50: #{classifier_forward.2} parent=23 // pred_check_branch
        %538 = sbr.rel (%p536) target = $region52
      $region51: #{classifier_forward.2} parent=23 // pred_region
        %p539 = scmp.lt.s32.totalorder %s30, 1
        %s540 = scalar_select %p539, %s30, 1
        %s541 = scalar_lea.vmem %s8, %s540
      $region52: #{classifier_forward.2} parent=23 // pred_fallthru
        _
      // Predicated region
      $region53: #{classifier_forward.2} parent=23 // pred_check
        %p542 = pneg %p278
      $region54: #{classifier_forward.2} parent=23 // pred_check_branch
        %544 = sbr.rel (%p542) target = $region56
      $region55: #{classifier_forward.2} parent=23 // pred_region
        %p545 = scmp.lt.s32.totalorder %s30, 1
        %s546 = scalar_select %p545, %s30, 1
        %s547 = scalar_lea.vmem %s9, %s546
      $region56: #{classifier_forward.2} parent=23 // pred_fallthru
        _
      // Predicated region
      $region57: #{classifier_forward.2} parent=23 // pred_check
        %p548 = pneg %p304
      $region58: #{classifier_forward.2} parent=23 // pred_check_branch
        %550 = sbr.rel (%p548) target = $region60
      $region59: #{classifier_forward.2} parent=23 // pred_region
        %p551 = scmp.lt.s32.totalorder %s30, 1
        %s552 = scalar_select %p551, %s30, 1
        %s553 = smul.addr %s552, 64
        %s554 = smul.addr %s553, 8
        %s555 = scalar_lea.vmem %s10, %s554
      $region60: #{classifier_forward.2} parent=23 // pred_fallthru
        _
      // Predicated region
      $region61: #{classifier_forward.2} parent=23 // pred_check
        %p556 = pneg %p330
      $region62: #{classifier_forward.2} parent=23 // pred_check_branch
        %558 = sbr.rel (%p556) target = $region64
      $region63: #{classifier_forward.2} parent=23 // pred_region
        %p559 = scmp.lt.s32.totalorder %s30, 1
        %s560 = scalar_select %p559, %s30, 1
        %s561 = smul.addr %s560, 4
        %s562 = scalar_lea.vmem %s11, %s561
      $region64: #{classifier_forward.2} parent=23 // pred_fallthru
        _
      // Predicated region
      $region65: #{classifier_forward.2} parent=23 // pred_check
        %p563 = pneg %p356
      $region66: #{classifier_forward.2} parent=23 // pred_check_branch
        %565 = sbr.rel (%p563) target = $region68
      $region67: #{classifier_forward.2} parent=23 // pred_region
        %p566 = scmp.lt.s32.totalorder %s30, 1
        %s567 = scalar_select %p566, %s30, 1
        %s568 = smul.addr %s567, 64
        %s569 = smul.addr %s568, 8
        %s570 = scalar_lea.vmem %s12, %s569
      $region68: #{classifier_forward.2} parent=23 // pred_fallthru
        _
      // Predicated region
      $region69: #{classifier_forward.2} parent=23 // pred_check
        %p571 = pneg %p382
      $region70: #{classifier_forward.2} parent=23 // pred_check_branch
        %573 = sbr.rel (%p571) target = $region72
      $region71: #{classifier_forward.2} parent=23 // pred_region
        %p574 = scmp.lt.s32.totalorder %s30, 1
        %s575 = scalar_select %p574, %s30, 1
        %s576 = scalar_lea.vmem %s13, %s575
      $region72: #{classifier_forward.2} parent=23 // pred_fallthru
        _
      // Predicated region
      $region73: #{classifier_forward.2} parent=23 // pred_check
        %p577 = pneg %p408
      $region74: #{classifier_forward.2} parent=23 // pred_check_branch
        %579 = sbr.rel (%p577) target = $region76
      $region75: #{classifier_forward.2} parent=23 // pred_region
        %p580 = scmp.lt.s32.totalorder %s30, 1
        %s581 = scalar_select %p580, %s30, 1
        %s582 = scalar_lea.vmem %s14, %s581
      $region76: #{classifier_forward.2} parent=23 // pred_fallthru
        _
      // Predicated region
      $region77: #{classifier_forward.2} parent=23 // pred_check
        %p583 = pneg %p434
      $region78: #{classifier_forward.2} parent=23 // pred_check_branch
        %585 = sbr.rel (%p583) target = $region80
      $region79: #{classifier_forward.2} parent=23 // pred_region
        %p586 = scmp.lt.s32.totalorder %s30, 1
        %s587 = scalar_select %p586, %s30, 1
        %s588 = scalar_lea.vmem %s15, %s587
      $region80: #{classifier_forward.2} parent=23 // pred_fallthru
        _
    $region24: #{classifier_forward.2} parent=5 // pred_fallthru
      _
    %p589 = scmp.le.s32.totalorder 1, %s22
    %p590 = scmp.lt.s32.totalorder %s22, 5
    %p591 = pnand %p589, %p590
    %p592 = pneg %p591
    // Predicated region
    $region81: #{classifier_forward.2} parent=5 // pred_check
      _
    $region82: #{classifier_forward.2} parent=5 // pred_check_branch
      %594 = sbr.rel (%p591) target = $region84
    $region83: #{classifier_forward.2} parent=5 // pred_region
      %s595 = ssub.s32 %s22, 1
      %p596 = scmp.lt.s32.totalorder %s31, 1
      %s597 = scalar_select %p596, %s31, 1
      %s598 = smul.addr %s597, 8
      %s599 = scalar_lea.vmem %s0, %s598
      %p600 = pneg %p60
      %p601 = pneg %p57
      %p602 = pneg %p81
      %p603 = pneg %p78
      %p604 = pneg %p102
      %p605 = pneg %p99
      %p606 = scmp.lt.s32.totalorder %s32, 1
      %s607 = scalar_select %p606, %s32, 1
      %s608 = smul.addr %s607, 16
      %s609 = smul.addr %s608, 8
      %s610 = scalar_lea.vmem %s3, %s609
      %p611 = pneg %p128
      %p612 = pneg %p125
      %p613 = scmp.lt.s32.totalorder %s32, 1
      %s614 = scalar_select %p613, %s32, 1
      %s615 = smul.addr %s614, 16
      %s616 = smul.addr %s615, 8
      %s617 = scalar_lea.vmem %s4, %s616
      %p618 = pneg %p154
      %p619 = pneg %p151
      %p620 = scmp.lt.s32.totalorder %s32, 1
      %s621 = scalar_select %p620, %s32, 1
      %s622 = smul.addr %s621, 16
      %s623 = smul.addr %s622, 8
      %s624 = scalar_lea.vmem %s5, %s623
      %p625 = pneg %p180
      %p626 = pneg %p177
      %p627 = scmp.lt.s32.totalorder %s32, 1
      %s628 = scalar_select %p627, %s32, 1
      %s629 = smul.addr %s628, 16
      %s630 = smul.addr %s629, 8
      %s631 = scalar_lea.vmem %s6, %s630
      %p632 = pneg %p206
      %p633 = pneg %p203
      %p634 = scmp.lt.s32.totalorder %s32, 1
      %s635 = scalar_select %p634, %s32, 1
      %s636 = scalar_lea.vmem %s7, %s635
      %p637 = pneg %p232
      %p638 = pneg %p229
      %p639 = scmp.lt.s32.totalorder %s32, 1
      %s640 = scalar_select %p639, %s32, 1
      %s641 = scalar_lea.vmem %s8, %s640
      %p642 = pneg %p258
      %p643 = pneg %p255
      %p644 = scmp.lt.s32.totalorder %s32, 1
      %s645 = scalar_select %p644, %s32, 1
      %s646 = scalar_lea.vmem %s9, %s645
      %p647 = pneg %p284
      %p648 = pneg %p281
      %p649 = scmp.lt.s32.totalorder %s32, 1
      %s650 = scalar_select %p649, %s32, 1
      %s651 = smul.addr %s650, 64
      %s652 = smul.addr %s651, 8
      %s653 = scalar_lea.vmem %s10, %s652
      %p654 = pneg %p310
      %p655 = pneg %p307
      %p656 = scmp.lt.s32.totalorder %s32, 1
      %s657 = scalar_select %p656, %s32, 1
      %s658 = smul.addr %s657, 4
      %s659 = scalar_lea.vmem %s11, %s658
      %p660 = pneg %p336
      %p661 = pneg %p333
      %p662 = scmp.lt.s32.totalorder %s32, 1
      %s663 = scalar_select %p662, %s32, 1
      %s664 = smul.addr %s663, 64
      %s665 = smul.addr %s664, 8
      %s666 = scalar_lea.vmem %s12, %s665
      %p667 = pneg %p362
      %p668 = pneg %p359
      %p669 = scmp.lt.s32.totalorder %s32, 1
      %s670 = scalar_select %p669, %s32, 1
      %s671 = scalar_lea.vmem %s13, %s670
      %p672 = pneg %p388
      %p673 = pneg %p385
      %p674 = scmp.lt.s32.totalorder %s32, 1
      %s675 = scalar_select %p674, %s32, 1
      %s676 = scalar_lea.vmem %s14, %s675
      %p677 = pneg %p414
      %p678 = pneg %p411
      %p679 = scmp.lt.s32.totalorder %s32, 1
      %s680 = scalar_select %p679, %s32, 1
      %s681 = scalar_lea.vmem %s15, %s680
      %p682 = pneg %p440
      %p683 = pneg %p437
      %p684 = pneg %p466
      %p685 = pneg %p463
      %p686 = scmp.lt.s32.totalorder %s31, 1
      %s687 = scalar_select %p686, %s31, 1
      %s688 = smul.addr %s687, 8
      %s689 = scalar_lea.vmem %s16, %s688
      %p690 = scmp.lt.s32.totalorder %s31, 1
      %s691 = scalar_select %p690, %s31, 1
      %s692 = smul.addr %s691, 8
      %s693 = scalar_lea.vmem %s0, %s692
      %p694 = scmp.lt.s32.totalorder %s32, 1
      %s695 = scalar_select %p694, %s32, 1
      %s696 = smul.addr %s695, 16
      %s697 = smul.addr %s696, 8
      %s698 = scalar_lea.vmem %s3, %s697
      %p699 = scmp.lt.s32.totalorder %s32, 1
      %s700 = scalar_select %p699, %s32, 1
      %s701 = smul.addr %s700, 16
      %s702 = smul.addr %s701, 8
      %s703 = scalar_lea.vmem %s4, %s702
      %p704 = scmp.lt.s32.totalorder %s32, 1
      %s705 = scalar_select %p704, %s32, 1
      %s706 = smul.addr %s705, 16
      %s707 = smul.addr %s706, 8
      %s708 = scalar_lea.vmem %s5, %s707
      %p709 = scmp.lt.s32.totalorder %s32, 1
      %s710 = scalar_select %p709, %s32, 1
      %s711 = smul.addr %s710, 16
      %s712 = smul.addr %s711, 8
      %s713 = scalar_lea.vmem %s6, %s712
      %p714 = scmp.lt.s32.totalorder %s32, 1
      %s715 = scalar_select %p714, %s32, 1
      %s716 = scalar_lea.vmem %s7, %s715
      %p717 = scmp.lt.s32.totalorder %s32, 1
      %s718 = scalar_select %p717, %s32, 1
      %s719 = scalar_lea.vmem %s8, %s718
      %p720 = scmp.lt.s32.totalorder %s32, 1
      %s721 = scalar_select %p720, %s32, 1
      %s722 = scalar_lea.vmem %s9, %s721
      %p723 = scmp.lt.s32.totalorder %s32, 1
      %s724 = scalar_select %p723, %s32, 1
      %s725 = smul.addr %s724, 64
      %s726 = smul.addr %s725, 8
      %s727 = scalar_lea.vmem %s10, %s726
      %p728 = scmp.lt.s32.totalorder %s32, 1
      %s729 = scalar_select %p728, %s32, 1
      %s730 = smul.addr %s729, 4
      %s731 = scalar_lea.vmem %s11, %s730
      %p732 = scmp.lt.s32.totalorder %s32, 1
      %s733 = scalar_select %p732, %s32, 1
      %s734 = smul.addr %s733, 64
      %s735 = smul.addr %s734, 8
      %s736 = scalar_lea.vmem %s12, %s735
      %p737 = scmp.lt.s32.totalorder %s32, 1
      %s738 = scalar_select %p737, %s32, 1
      %s739 = scalar_lea.vmem %s13, %s738
      %p740 = scmp.lt.s32.totalorder %s32, 1
      %s741 = scalar_select %p740, %s32, 1
      %s742 = scalar_lea.vmem %s14, %s741
      %p743 = scmp.lt.s32.totalorder %s32, 1
      %s744 = scalar_select %p743, %s32, 1
      %s745 = scalar_lea.vmem %s15, %s744
      %p746 = scmp.lt.s32.totalorder %s31, 1
      %s747 = scalar_select %p746, %s31, 1
      %s748 = smul.addr %s747, 8
      %s749 = scalar_lea.vmem %s16, %s748
      %p750 = scmp.eq.s32.totalorder %s32, 0
      // Predicated region
      $region85: #{classifier_forward.2} parent=83 // pred_check
        %p751 = pneg %p750
      $region86: #{classifier_forward.2} parent=83 // pred_check_branch
        %753 = sbr.rel (%p751) target = $region88
      $region87: #{classifier_forward.2} parent=83 // pred_region
        %v754 = vld [vmem:[%s693] sm:$0xff]
        %v755 = vld [vmem:[%s1] sm:$0xff]
        %v756 = vld [vmem:[%s1 + $0x8] sm:$0xff]
        %v757 = vld [vmem:[%s2] sm:$0x1]
        %v759 = vlaneseq
        %v760 = vshrl.u32 %v759, 7
        %v761 = vsub.s32 0, %v760
        %v762 = vrot.slane %v757, %v761
        %vm764 = vcmask 130048
        %v766 = vsel %vm764, %v754, 0
        %768 = vmatprep.subr.mxu0 0.0
        %769 = vmatpush1.msra.mxu0 %v755
        %770 = vmatprep.subr.mxu0 0.0
        %771 = vmatpush1.msra.mxu0 %v756
        %772 = vmatprep.subr.mxu0 0.0
        %773 = vmatpush1.msra.mxu0 0.0
        %774 = vmatprep.subr.mxu0 0.0
        %775 = vmatpush1.msra.mxu0 0.0
        %776 = vmatprep.subr.mxu0 0.0
        %777 = vmatpush1.msra.mxu0 0.0
        %778 = vmatprep.subr.mxu0 0.0
        %779 = vmatpush1.msra.mxu0 0.0
        %780 = vmatprep.subr.mxu0 0.0
        %781 = vmatpush1.msra.mxu0 0.0
        %782 = vmatprep.subr.mxu0 0.0
        %783 = vmatpush1.msra.mxu0 0.0
        %784 = vmatprep.subr.mxu0 0.0
        %785 = vmatpush1.msra.mxu0 0.0
        %786 = vmatprep.subr.mxu0 0.0
        %787 = vmatpush1.msra.mxu0 0.0
        %788 = vmatprep.subr.mxu0 0.0
        %789 = vmatpush1.msra.mxu0 0.0
        %790 = vmatprep.subr.mxu0 0.0
        %791 = vmatpush1.msra.mxu0 0.0
        %792 = vmatprep.subr.mxu0 0.0
        %793 = vmatpush1.msra.mxu0 0.0
        %794 = vmatprep.subr.mxu0 0.0
        %795 = vmatpush1.msra.mxu0 0.0
        %796 = vmatprep.subr.mxu0 0.0
        %797 = vmatpush1.msra.mxu0 0.0
        %798 = vmatprep.subr.mxu0 0.0
        %799 = vmatpush1.msra.mxu0 0.0
        %800 = vmatprep.subr.mxu0 0.0
        %801 = vmatpush1.msra.mxu0 0.0
        %802 = vmatprep.subr.mxu0 0.0
        %803 = vmatpush1.msra.mxu0 0.0
        %804 = vmatprep.subr.mxu0 0.0
        %805 = vmatpush1.msra.mxu0 0.0
        %806 = vmatprep.subr.mxu0 0.0
        %807 = vmatpush1.msra.mxu0 0.0
        %808 = vmatprep.subr.mxu0 0.0
        %809 = vmatpush1.msra.mxu0 0.0
        %810 = vmatprep.subr.mxu0 0.0
        %811 = vmatpush1.msra.mxu0 0.0
        %812 = vmatprep.subr.mxu0 0.0
        %813 = vmatpush1.msra.mxu0 0.0
        %814 = vmatprep.subr.mxu0 0.0
        %815 = vmatpush1.msra.mxu0 0.0
        %816 = vmatprep.subr.mxu0 0.0
        %817 = vmatpush1.msra.mxu0 0.0
        %818 = vmatprep.subr.mxu0 0.0
        %819 = vmatpush1.msra.mxu0 0.0
        %820 = vmatprep.subr.mxu0 0.0
        %821 = vmatpush1.msra.mxu0 0.0
        %822 = vmatprep.subr.mxu0 0.0
        %823 = vmatpush1.msra.mxu0 0.0
        %824 = vmatprep.subr.mxu0 0.0
        %825 = vmatpush1.msra.mxu0 0.0
        %826 = vmatprep.subr.mxu0 0.0
        %827 = vmatpush1.msra.mxu0 0.0
        %828 = vmatprep.subr.mxu0 0.0
        %829 = vmatpush1.msra.mxu0 0.0
        %830 = vmatprep.subr.mxu0 0.0
        %831 = vmatpush1.msra.mxu0 0.0
        %832 = vmatprep.mubr.f32.mxu0 0.0
        %833 = vmatmul.mubr.f32.gmra.mrb[0].mxu0 %v766
        %v834 = vpop.f32.mrb[0].mxu0
        %v835 = vadd.f32 %v762, %v834
        %v836 = vpop.f32.mrb[0].mxu0
        %837 = vdwg.mxu0
        %838 = vst [vmem:[%s749] sm:$0xff] %v835
      $region88: #{classifier_forward.2} parent=83 // pred_fallthru
        _
      %v839 = vld [vmem:[%s749] sm:$0xff]
      %v840 = vld [vmem:[%s698] sm:$0xff]
      %v841 = vld [vmem:[%s698 + $0x8] sm:$0xff]
      %v842 = vld [vmem:[%s698 + $0x10] sm:$0xff]
      %v843 = vld [vmem:[%s698 + $0x18] sm:$0xff]
      %v844 = vld [vmem:[%s698 + $0x20] sm:$0xff]
      %v845 = vld [vmem:[%s698 + $0x28] sm:$0xff]
      %v846 = vld [vmem:[%s698 + $0x30] sm:$0xff]
      %v847 = vld [vmem:[%s698 + $0x38] sm:$0xff]
      %v848 = vld [vmem:[%s698 + $0x40] sm:$0xff]
      %v849 = vld [vmem:[%s698 + $0x48] sm:$0xff]
      %v850 = vld [vmem:[%s698 + $0x50] sm:$0xff]
      %v851 = vld [vmem:[%s698 + $0x58] sm:$0xff]
      %v852 = vld [vmem:[%s698 + $0x60] sm:$0xff]
      %v853 = vld [vmem:[%s698 + $0x68] sm:$0xff]
      %v854 = vld [vmem:[%s698 + $0x70] sm:$0xff]
      %v855 = vld [vmem:[%s698 + $0x78] sm:$0xff]
      %856 = vmatprep.subr.mxu0 0.0
      %857 = vmatpush1.msra.mxu0 %v840
      %858 = vmatprep.subr.mxu0 0.0
      %859 = vmatpush1.msra.mxu0 %v841
      %860 = vmatprep.subr.mxu0 0.0
      %861 = vmatpush1.msra.mxu0 %v842
      %862 = vmatprep.subr.mxu0 0.0
      %863 = vmatpush1.msra.mxu0 %v843
      %864 = vmatprep.subr.mxu0 0.0
      %865 = vmatpush1.msra.mxu0 %v844
      %866 = vmatprep.subr.mxu0 0.0
      %867 = vmatpush1.msra.mxu0 %v845
      %868 = vmatprep.subr.mxu0 0.0
      %869 = vmatpush1.msra.mxu0 %v846
      %870 = vmatprep.subr.mxu0 0.0
      %871 = vmatpush1.msra.mxu0 %v847
      %872 = vmatprep.subr.mxu0 0.0
      %873 = vmatpush1.msra.mxu0 %v848
      %874 = vmatprep.subr.mxu0 0.0
      %875 = vmatpush1.msra.mxu0 %v849
      %876 = vmatprep.subr.mxu0 0.0
      %877 = vmatpush1.msra.mxu0 %v850
      %878 = vmatprep.subr.mxu0 0.0
      %879 = vmatpush1.msra.mxu0 %v851
      %880 = vmatprep.subr.mxu0 0.0
      %881 = vmatpush1.msra.mxu0 %v852
      %882 = vmatprep.subr.mxu0 0.0
      %883 = vmatpush1.msra.mxu0 %v853
      %884 = vmatprep.subr.mxu0 0.0
      %885 = vmatpush1.msra.mxu0 %v854
      %886 = vmatprep.subr.mxu0 0.0
      %887 = vmatpush1.msra.mxu0 %v855
      %888 = vmatprep.subr.mxu0 0.0
      %889 = vmatpush1.msra.mxu0 0.0
      %890 = vmatprep.subr.mxu0 0.0
      %891 = vmatpush1.msra.mxu0 0.0
      %892 = vmatprep.subr.mxu0 0.0
      %893 = vmatpush1.msra.mxu0 0.0
      %894 = vmatprep.subr.mxu0 0.0
      %895 = vmatpush1.msra.mxu0 0.0
      %896 = vmatprep.subr.mxu0 0.0
      %897 = vmatpush1.msra.mxu0 0.0
      %898 = vmatprep.subr.mxu0 0.0
      %899 = vmatpush1.msra.mxu0 0.0
      %900 = vmatprep.subr.mxu0 0.0
      %901 = vmatpush1.msra.mxu0 0.0
      %902 = vmatprep.subr.mxu0 0.0
      %903 = vmatpush1.msra.mxu0 0.0
      %904 = vmatprep.subr.mxu0 0.0
      %905 = vmatpush1.msra.mxu0 0.0
      %906 = vmatprep.subr.mxu0 0.0
      %907 = vmatpush1.msra.mxu0 0.0
      %908 = vmatprep.subr.mxu0 0.0
      %909 = vmatpush1.msra.mxu0 0.0
      %910 = vmatprep.subr.mxu0 0.0
      %911 = vmatpush1.msra.mxu0 0.0
      %912 = vmatprep.subr.mxu0 0.0
      %913 = vmatpush1.msra.mxu0 0.0
      %914 = vmatprep.subr.mxu0 0.0
      %915 = vmatpush1.msra.mxu0 0.0
      %916 = vmatprep.subr.mxu0 0.0
      %917 = vmatpush1.msra.mxu0 0.0
      %918 = vmatprep.subr.mxu0 0.0
      %919 = vmatpush1.msra.mxu0 0.0
      %920 = vmatprep.mubr.f32.mxu0 0.0
      %921 = vmatmul.mubr.f32.gmra.mrb[0].mxu0 %v839
      %v922 = vpop.f32.mrb[0].mxu0
      %v923 = vadd.f32 0.0, %v922
      %v924 = vpop.f32.mrb[0].mxu0
      %925 = vdwg.mxu0
      %v926 = vld [vmem:[%s703] sm:$0xff]
      %v927 = vld [vmem:[%s703 + $0x8] sm:$0xff]
      %v928 = vld [vmem:[%s703 + $0x10] sm:$0xff]
      %v929 = vld [vmem:[%s703 + $0x18] sm:$0xff]
      %v930 = vld [vmem:[%s703 + $0x20] sm:$0xff]
      %v931 = vld [vmem:[%s703 + $0x28] sm:$0xff]
      %v932 = vld [vmem:[%s703 + $0x30] sm:$0xff]
      %v933 = vld [vmem:[%s703 + $0x38] sm:$0xff]
      %v934 = vld [vmem:[%s703 + $0x40] sm:$0xff]
      %v935 = vld [vmem:[%s703 + $0x48] sm:$0xff]
      %v936 = vld [vmem:[%s703 + $0x50] sm:$0xff]
      %v937 = vld [vmem:[%s703 + $0x58] sm:$0xff]
      %v938 = vld [vmem:[%s703 + $0x60] sm:$0xff]
      %v939 = vld [vmem:[%s703 + $0x68] sm:$0xff]
      %v940 = vld [vmem:[%s703 + $0x70] sm:$0xff]
      %v941 = vld [vmem:[%s703 + $0x78] sm:$0xff]
      %942 = vmatprep.subr.mxu0 0.0
      %943 = vmatpush1.msra.mxu0 %v926
      %944 = vmatprep.subr.mxu0 0.0
      %945 = vmatpush1.msra.mxu0 %v927
      %946 = vmatprep.subr.mxu0 0.0
      %947 = vmatpush1.msra.mxu0 %v928
      %948 = vmatprep.subr.mxu0 0.0
      %949 = vmatpush1.msra.mxu0 %v929
      %950 = vmatprep.subr.mxu0 0.0
      %951 = vmatpush1.msra.mxu0 %v930
      %952 = vmatprep.subr.mxu0 0.0
      %953 = vmatpush1.msra.mxu0 %v931
      %954 = vmatprep.subr.mxu0 0.0
      %955 = vmatpush1.msra.mxu0 %v932
      %956 = vmatprep.subr.mxu0 0.0
      %957 = vmatpush1.msra.mxu0 %v933
      %958 = vmatprep.subr.mxu0 0.0
      %959 = vmatpush1.msra.mxu0 %v934
      %960 = vmatprep.subr.mxu0 0.0
      %961 = vmatpush1.msra.mxu0 %v935
      %962 = vmatprep.subr.mxu0 0.0
      %963 = vmatpush1.msra.mxu0 %v936
      %964 = vmatprep.subr.mxu0 0.0
      %965 = vmatpush1.msra.mxu0 %v937
      %966 = vmatprep.subr.mxu0 0.0
      %967 = vmatpush1.msra.mxu0 %v938
      %968 = vmatprep.subr.mxu0 0.0
      %969 = vmatpush1.msra.mxu0 %v939
      %970 = vmatprep.subr.mxu0 0.0
      %971 = vmatpush1.msra.mxu0 %v940
      %972 = vmatprep.subr.mxu0 0.0
      %973 = vmatpush1.msra.mxu0 %v941
      %974 = vmatprep.subr.mxu0 0.0
      %975 = vmatpush1.msra.mxu0 0.0
      %976 = vmatprep.subr.mxu0 0.0
      %977 = vmatpush1.msra.mxu0 0.0
      %978 = vmatprep.subr.mxu0 0.0
      %979 = vmatpush1.msra.mxu0 0.0
      %980 = vmatprep.subr.mxu0 0.0
      %981 = vmatpush1.msra.mxu0 0.0
      %982 = vmatprep.subr.mxu0 0.0
      %983 = vmatpush1.msra.mxu0 0.0
      %984 = vmatprep.subr.mxu0 0.0
      %985 = vmatpush1.msra.mxu0 0.0
      %986 = vmatprep.subr.mxu0 0.0
      %987 = vmatpush1.msra.mxu0 0.0
      %988 = vmatprep.subr.mxu0 0.0
      %989 = vmatpush1.msra.mxu0 0.0
      %990 = vmatprep.subr.mxu0 0.0
      %991 = vmatpush1.msra.mxu0 0.0
      %992 = vmatprep.subr.mxu0 0.0
      %993 = vmatpush1.msra.mxu0 0.0
      %994 = vmatprep.subr.mxu0 0.0
      %995 = vmatpush1.msra.mxu0 0.0
      %996 = vmatprep.subr.mxu0 0.0
      %997 = vmatpush1.msra.mxu0 0.0
      %998 = vmatprep.subr.mxu0 0.0
      %999 = vmatpush1.msra.mxu0 0.0
      %1000 = vmatprep.subr.mxu0 0.0
      %1001 = vmatpush1.msra.mxu0 0.0
      %1002 = vmatprep.subr.mxu0 0.0
      %1003 = vmatpush1.msra.mxu0 0.0
      %1004 = vmatprep.subr.mxu0 0.0
      %1005 = vmatpush1.msra.mxu0 0.0
      %1006 = vmatprep.mubr.f32.mxu0 0.0
      %1007 = vmatmul.mubr.f32.gmra.mrb[0].mxu0 %v839
      %v1008 = vpop.f32.mrb[0].mxu0
      %v1009 = vadd.f32 0.0, %v1008
      %v1010 = vpop.f32.mrb[0].mxu0
      %1011 = vdwg.mxu0
      %v1012 = vld [vmem:[%s708] sm:$0xff]
      %v1013 = vld [vmem:[%s708 + $0x8] sm:$0xff]
      %v1014 = vld [vmem:[%s708 + $0x10] sm:$0xff]
      %v1015 = vld [vmem:[%s708 + $0x18] sm:$0xff]
      %v1016 = vld [vmem:[%s708 + $0x20] sm:$0xff]
      %v1017 = vld [vmem:[%s708 + $0x28] sm:$0xff]
      %v1018 = vld [vmem:[%s708 + $0x30] sm:$0xff]
      %v1019 = vld [vmem:[%s708 + $0x38] sm:$0xff]
      %v1020 = vld [vmem:[%s708 + $0x40] sm:$0xff]
      %v1021 = vld [vmem:[%s708 + $0x48] sm:$0xff]
      %v1022 = vld [vmem:[%s708 + $0x50] sm:$0xff]
      %v1023 = vld [vmem:[%s708 + $0x58] sm:$0xff]
      %v1024 = vld [vmem:[%s708 + $0x60] sm:$0xff]
      %v1025 = vld [vmem:[%s708 + $0x68] sm:$0xff]
      %v1026 = vld [vmem:[%s708 + $0x70] sm:$0xff]
      %v1027 = vld [vmem:[%s708 + $0x78] sm:$0xff]
      %1028 = vmatprep.subr.mxu0 0.0
      %1029 = vmatpush1.msra.mxu0 %v1012
      %1030 = vmatprep.subr.mxu0 0.0
      %1031 = vmatpush1.msra.mxu0 %v1013
      %1032 = vmatprep.subr.mxu0 0.0
      %1033 = vmatpush1.msra.mxu0 %v1014
      %1034 = vmatprep.subr.mxu0 0.0
      %1035 = vmatpush1.msra.mxu0 %v1015
      %1036 = vmatprep.subr.mxu0 0.0
      %1037 = vmatpush1.msra.mxu0 %v1016
      %1038 = vmatprep.subr.mxu0 0.0
      %1039 = vmatpush1.msra.mxu0 %v1017
      %1040 = vmatprep.subr.mxu0 0.0
      %1041 = vmatpush1.msra.mxu0 %v1018
      %1042 = vmatprep.subr.mxu0 0.0
      %1043 = vmatpush1.msra.mxu0 %v1019
      %1044 = vmatprep.subr.mxu0 0.0
      %1045 = vmatpush1.msra.mxu0 %v1020
      %1046 = vmatprep.subr.mxu0 0.0
      %1047 = vmatpush1.msra.mxu0 %v1021
      %1048 = vmatprep.subr.mxu0 0.0
      %1049 = vmatpush1.msra.mxu0 %v1022
      %1050 = vmatprep.subr.mxu0 0.0
      %1051 = vmatpush1.msra.mxu0 %v1023
      %1052 = vmatprep.subr.mxu0 0.0
      %1053 = vmatpush1.msra.mxu0 %v1024
      %1054 = vmatprep.subr.mxu0 0.0
      %1055 = vmatpush1.msra.mxu0 %v1025
      %1056 = vmatprep.subr.mxu0 0.0
      %1057 = vmatpush1.msra.mxu0 %v1026
      %1058 = vmatprep.subr.mxu0 0.0
      %1059 = vmatpush1.msra.mxu0 %v1027
      %1060 = vmatprep.subr.mxu0 0.0
      %1061 = vmatpush1.msra.mxu0 0.0
      %1062 = vmatprep.subr.mxu0 0.0
      %1063 = vmatpush1.msra.mxu0 0.0
      %1064 = vmatprep.subr.mxu0 0.0
      %1065 = vmatpush1.msra.mxu0 0.0
      %1066 = vmatprep.subr.mxu0 0.0
      %1067 = vmatpush1.msra.mxu0 0.0
      %1068 = vmatprep.subr.mxu0 0.0
      %1069 = vmatpush1.msra.mxu0 0.0
      %1070 = vmatprep.subr.mxu0 0.0
      %1071 = vmatpush1.msra.mxu0 0.0
      %1072 = vmatprep.subr.mxu0 0.0
      %1073 = vmatpush1.msra.mxu0 0.0
      %1074 = vmatprep.subr.mxu0 0.0
      %1075 = vmatpush1.msra.mxu0 0.0
      %1076 = vmatprep.subr.mxu0 0.0
      %1077 = vmatpush1.msra.mxu0 0.0
      %1078 = vmatprep.subr.mxu0 0.0
      %1079 = vmatpush1.msra.mxu0 0.0
      %1080 = vmatprep.subr.mxu0 0.0
      %1081 = vmatpush1.msra.mxu0 0.0
      %1082 = vmatprep.subr.mxu0 0.0
      %1083 = vmatpush1.msra.mxu0 0.0
      %1084 = vmatprep.subr.mxu0 0.0
      %1085 = vmatpush1.msra.mxu0 0.0
      %1086 = vmatprep.subr.mxu0 0.0
      %1087 = vmatpush1.msra.mxu0 0.0
      %1088 = vmatprep.subr.mxu0 0.0
      %1089 = vmatpush1.msra.mxu0 0.0
      %1090 = vmatprep.subr.mxu0 0.0
      %1091 = vmatpush1.msra.mxu0 0.0
      %1092 = vmatprep.mubr.f32.mxu0 0.0
      %1093 = vmatmul.mubr.f32.gmra.mrb[0].mxu0 %v839
      %v1094 = vpop.f32.mrb[0].mxu0
      %v1095 = vadd.f32 0.0, %v1094
      %v1096 = vpop.f32.mrb[0].mxu0
      %1097 = vdwg.mxu0
      %1099 = vrot.lane.b32.xlu0 %v923, 96
      %v1100 = vpop.permute.xlu0 %1099
      %1101 = vrot.lane.b32.xlu0 %v923, 64
      %v1102 = vpop.permute.xlu0 %1101
      %1103 = vrot.lane.b32.xlu0 %v923, 32
      %v1104 = vpop.permute.xlu0 %1103
      %1106 = vrot.lane.b32.xlu0 %v1009, 96
      %v1107 = vpop.permute.xlu0 %1106
      %1108 = vrot.lane.b32.xlu0 %v1009, 64
      %v1109 = vpop.permute.xlu0 %1108
      %1110 = vrot.lane.b32.xlu0 %v1009, 32
      %v1111 = vpop.permute.xlu0 %1110
      %1113 = vrot.lane.b32.xlu0 %v1095, 96
      %v1114 = vpop.permute.xlu0 %1113
      %1116 = vrot.lane.b32.xlu0 %v1095, 64
      %v1117 = vpop.permute.xlu0 %1116
      %1119 = vrot.lane.b32.xlu0 %v1095, 32
      %v1120 = vpop.permute.xlu0 %1119
      %vm1122 = vcmask 261120
      %v1123 = vsel %vm1122, %v923, 0
      %v1125 = vsel %vm1122, %v1009, 0
      %1127 = vmatprep.subr.mxu0 0.0
      %1128 = vmatpush1.xpose.msra.mxu0 %v1125
      %1129 = vmatprep.subr.mxu0 0.0
      %1130 = vmatpush1.xpose.msra.mxu0 0.0
      %1131 = vmatprep.subr.mxu0 0.0
      %1132 = vmatpush1.xpose.msra.mxu0 0.0
      %1133 = vmatprep.subr.mxu0 0.0
      %1134 = vmatpush1.xpose.msra.mxu0 0.0
      %1135 = vmatprep.subr.mxu0 0.0
      %1136 = vmatpush1.xpose.msra.mxu0 0.0
      %1137 = vmatprep.subr.mxu0 0.0
      %1138 = vmatpush1.xpose.msra.mxu0 0.0
      %1139 = vmatprep.subr.mxu0 0.0
      %1140 = vmatpush1.xpose.msra.mxu0 0.0
      %1141 = vmatprep.subr.mxu0 0.0
      %1142 = vmatpush1.xpose.msra.mxu0 0.0
      %1143 = vmatprep.subr.mxu0 0.0
      %1144 = vmatpush1.xpose.msra.mxu0 0.0
      %1145 = vmatprep.subr.mxu0 0.0
      %1146 = vmatpush1.xpose.msra.mxu0 0.0
      %1147 = vmatprep.subr.mxu0 0.0
      %1148 = vmatpush1.xpose.msra.mxu0 0.0
      %1149 = vmatprep.subr.mxu0 0.0
      %1150 = vmatpush1.xpose.msra.mxu0 0.0
      %1151 = vmatprep.subr.mxu0 0.0
      %1152 = vmatpush1.xpose.msra.mxu0 0.0
      %1153 = vmatprep.subr.mxu0 0.0
      %1154 = vmatpush1.xpose.msra.mxu0 0.0
      %1155 = vmatprep.subr.mxu0 0.0
      %1156 = vmatpush1.xpose.msra.mxu0 0.0
      %1157 = vmatprep.subr.mxu0 0.0
      %1158 = vmatpush1.xpose.msra.mxu0 0.0
      %1159 = vmatprep.subr.mxu0 0.0
      %1160 = vmatpush1.xpose.msra.mxu0 0.0
      %1161 = vmatprep.subr.mxu0 0.0
      %1162 = vmatpush1.xpose.msra.mxu0 0.0
      %1163 = vmatprep.subr.mxu0 0.0
      %1164 = vmatpush1.xpose.msra.mxu0 0.0
      %1165 = vmatprep.subr.mxu0 0.0
      %1166 = vmatpush1.xpose.msra.mxu0 0.0
      %1167 = vmatprep.subr.mxu0 0.0
      %1168 = vmatpush1.xpose.msra.mxu0 0.0
      %1169 = vmatprep.subr.mxu0 0.0
      %1170 = vmatpush1.xpose.msra.mxu0 0.0
      %1171 = vmatprep.subr.mxu0 0.0
      %1172 = vmatpush1.xpose.msra.mxu0 0.0
      %1173 = vmatprep.subr.mxu0 0.0
      %1174 = vmatpush1.xpose.msra.mxu0 0.0
      %1175 = vmatprep.subr.mxu0 0.0
      %1176 = vmatpush1.xpose.msra.mxu0 0.0
      %1177 = vmatprep.subr.mxu0 0.0
      %1178 = vmatpush1.xpose.msra.mxu0 0.0
      %1179 = vmatprep.subr.mxu0 0.0
      %1180 = vmatpush1.xpose.msra.mxu0 0.0
      %1181 = vmatprep.subr.mxu0 0.0
      %1182 = vmatpush1.xpose.msra.mxu0 0.0
      %1183 = vmatprep.subr.mxu0 0.0
      %1184 = vmatpush1.xpose.msra.mxu0 0.0
      %1185 = vmatprep.subr.mxu0 0.0
      %1186 = vmatpush1.xpose.msra.mxu0 0.0
      %1187 = vmatprep.subr.mxu0 0.0
      %1188 = vmatpush1.xpose.msra.mxu0 0.0
      %1189 = vmatprep.subr.mxu0 0.0
      %1190 = vmatpush1.xpose.msra.mxu0 0.0
      %1191 = vmatprep.mubr.f32.mxu0 0.0
      %1192 = vmatmul.mubr.f32.gmra.mrb[0].mxu0 %v1123
      %v1193 = vpop.f32.mrb[0].mxu0
      %v1194 = vadd.f32 0.0, %v1193
      %v1195 = vpop.f32.mrb[0].mxu0
      %1196 = vdwg.mxu0
      %v1197 = vsel %vm1122, %v1100, 0
      %v1199 = vsel %vm1122, %v1107, 0
      %1201 = vmatprep.subr.mxu0 0.0
      %1202 = vmatpush1.xpose.msra.mxu0 %v1199
      %1203 = vmatprep.subr.mxu0 0.0
      %1204 = vmatpush1.xpose.msra.mxu0 0.0
      %1205 = vmatprep.subr.mxu0 0.0
      %1206 = vmatpush1.xpose.msra.mxu0 0.0
      %1207 = vmatprep.subr.mxu0 0.0
      %1208 = vmatpush1.xpose.msra.mxu0 0.0
      %1209 = vmatprep.subr.mxu0 0.0
      %1210 = vmatpush1.xpose.msra.mxu0 0.0
      %1211 = vmatprep.subr.mxu0 0.0
      %1212 = vmatpush1.xpose.msra.mxu0 0.0
      %1213 = vmatprep.subr.mxu0 0.0
      %1214 = vmatpush1.xpose.msra.mxu0 0.0
      %1215 = vmatprep.subr.mxu0 0.0
      %1216 = vmatpush1.xpose.msra.mxu0 0.0
      %1217 = vmatprep.subr.mxu0 0.0
      %1218 = vmatpush1.xpose.msra.mxu0 0.0
      %1219 = vmatprep.subr.mxu0 0.0
      %1220 = vmatpush1.xpose.msra.mxu0 0.0
      %1221 = vmatprep.subr.mxu0 0.0
      %1222 = vmatpush1.xpose.msra.mxu0 0.0
      %1223 = vmatprep.subr.mxu0 0.0
      %1224 = vmatpush1.xpose.msra.mxu0 0.0
      %1225 = vmatprep.subr.mxu0 0.0
      %1226 = vmatpush1.xpose.msra.mxu0 0.0
      %1227 = vmatprep.subr.mxu0 0.0
      %1228 = vmatpush1.xpose.msra.mxu0 0.0
      %1229 = vmatprep.subr.mxu0 0.0
      %1230 = vmatpush1.xpose.msra.mxu0 0.0
      %1231 = vmatprep.subr.mxu0 0.0
      %1232 = vmatpush1.xpose.msra.mxu0 0.0
      %1233 = vmatprep.subr.mxu0 0.0
      %1234 = vmatpush1.xpose.msra.mxu0 0.0
      %1235 = vmatprep.subr.mxu0 0.0
      %1236 = vmatpush1.xpose.msra.mxu0 0.0
      %1237 = vmatprep.subr.mxu0 0.0
      %1238 = vmatpush1.xpose.msra.mxu0 0.0
      %1239 = vmatprep.subr.mxu0 0.0
      %1240 = vmatpush1.xpose.msra.mxu0 0.0
      %1241 = vmatprep.subr.mxu0 0.0
      %1242 = vmatpush1.xpose.msra.mxu0 0.0
      %1243 = vmatprep.subr.mxu0 0.0
      %1244 = vmatpush1.xpose.msra.mxu0 0.0
      %1245 = vmatprep.subr.mxu0 0.0
      %1246 = vmatpush1.xpose.msra.mxu0 0.0
      %1247 = vmatprep.subr.mxu0 0.0
      %1248 = vmatpush1.xpose.msra.mxu0 0.0
      %1249 = vmatprep.subr.mxu0 0.0
      %1250 = vmatpush1.xpose.msra.mxu0 0.0
      %1251 = vmatprep.subr.mxu0 0.0
      %1252 = vmatpush1.xpose.msra.mxu0 0.0
      %1253 = vmatprep.subr.mxu0 0.0
      %1254 = vmatpush1.xpose.msra.mxu0 0.0
      %1255 = vmatprep.subr.mxu0 0.0
      %1256 = vmatpush1.xpose.msra.mxu0 0.0
      %1257 = vmatprep.subr.mxu0 0.0
      %1258 = vmatpush1.xpose.msra.mxu0 0.0
      %1259 = vmatprep.subr.mxu0 0.0
      %1260 = vmatpush1.xpose.msra.mxu0 0.0
      %1261 = vmatprep.subr.mxu0 0.0
      %1262 = vmatpush1.xpose.msra.mxu0 0.0
      %1263 = vmatprep.subr.mxu0 0.0
      %1264 = vmatpush1.xpose.msra.mxu0 0.0
      %1265 = vmatprep.mubr.f32.mxu0 0.0
      %1266 = vmatmul.mubr.f32.gmra.mrb[0].mxu0 %v1197
      %v1267 = vpop.f32.mrb[0].mxu0
      %v1268 = vadd.f32 0.0, %v1267
      %v1269 = vpop.f32.mrb[0].mxu0
      %1270 = vdwg.mxu0
      %v1271 = vsel %vm1122, %v1102, 0
      %v1273 = vsel %vm1122, %v1109, 0
      %1275 = vmatprep.subr.mxu0 0.0
      %1276 = vmatpush1.xpose.msra.mxu0 %v1273
      %1277 = vmatprep.subr.mxu0 0.0
      %1278 = vmatpush1.xpose.msra.mxu0 0.0
      %1279 = vmatprep.subr.mxu0 0.0
      %1280 = vmatpush1.xpose.msra.mxu0 0.0
      %1281 = vmatprep.subr.mxu0 0.0
      %1282 = vmatpush1.xpose.msra.mxu0 0.0
      %1283 = vmatprep.subr.mxu0 0.0
      %1284 = vmatpush1.xpose.msra.mxu0 0.0
      %1285 = vmatprep.subr.mxu0 0.0
      %1286 = vmatpush1.xpose.msra.mxu0 0.0
      %1287 = vmatprep.subr.mxu0 0.0
      %1288 = vmatpush1.xpose.msra.mxu0 0.0
      %1289 = vmatprep.subr.mxu0 0.0
      %1290 = vmatpush1.xpose.msra.mxu0 0.0
      %1291 = vmatprep.subr.mxu0 0.0
      %1292 = vmatpush1.xpose.msra.mxu0 0.0
      %1293 = vmatprep.subr.mxu0 0.0
      %1294 = vmatpush1.xpose.msra.mxu0 0.0
      %1295 = vmatprep.subr.mxu0 0.0
      %1296 = vmatpush1.xpose.msra.mxu0 0.0
      %1297 = vmatprep.subr.mxu0 0.0
      %1298 = vmatpush1.xpose.msra.mxu0 0.0
      %1299 = vmatprep.subr.mxu0 0.0
      %1300 = vmatpush1.xpose.msra.mxu0 0.0
      %1301 = vmatprep.subr.mxu0 0.0
      %1302 = vmatpush1.xpose.msra.mxu0 0.0
      %1303 = vmatprep.subr.mxu0 0.0
      %1304 = vmatpush1.xpose.msra.mxu0 0.0
      %1305 = vmatprep.subr.mxu0 0.0
      %1306 = vmatpush1.xpose.msra.mxu0 0.0
      %1307 = vmatprep.subr.mxu0 0.0
      %1308 = vmatpush1.xpose.msra.mxu0 0.0
      %1309 = vmatprep.subr.mxu0 0.0
      %1310 = vmatpush1.xpose.msra.mxu0 0.0
      %1311 = vmatprep.subr.mxu0 0.0
      %1312 = vmatpush1.xpose.msra.mxu0 0.0
      %1313 = vmatprep.subr.mxu0 0.0
      %1314 = vmatpush1.xpose.msra.mxu0 0.0
      %1315 = vmatprep.subr.mxu0 0.0
      %1316 = vmatpush1.xpose.msra.mxu0 0.0
      %1317 = vmatprep.subr.mxu0 0.0
      %1318 = vmatpush1.xpose.msra.mxu0 0.0
      %1319 = vmatprep.subr.mxu0 0.0
      %1320 = vmatpush1.xpose.msra.mxu0 0.0
      %1321 = vmatprep.subr.mxu0 0.0
      %1322 = vmatpush1.xpose.msra.mxu0 0.0
      %1323 = vmatprep.subr.mxu0 0.0
      %1324 = vmatpush1.xpose.msra.mxu0 0.0
      %1325 = vmatprep.subr.mxu0 0.0
      %1326 = vmatpush1.xpose.msra.mxu0 0.0
      %1327 = vmatprep.subr.mxu0 0.0
      %1328 = vmatpush1.xpose.msra.mxu0 0.0
      %1329 = vmatprep.subr.mxu0 0.0
      %1330 = vmatpush1.xpose.msra.mxu0 0.0
      %1331 = vmatprep.subr.mxu0 0.0
      %1332 = vmatpush1.xpose.msra.mxu0 0.0
      %1333 = vmatprep.subr.mxu0 0.0
      %1334 = vmatpush1.xpose.msra.mxu0 0.0
      %1335 = vmatprep.subr.mxu0 0.0
      %1336 = vmatpush1.xpose.msra.mxu0 0.0
      %1337 = vmatprep.subr.mxu0 0.0
      %1338 = vmatpush1.xpose.msra.mxu0 0.0
      %1339 = vmatprep.mubr.f32.mxu0 0.0
      %1340 = vmatmul.mubr.f32.gmra.mrb[0].mxu0 %v1271
      %v1341 = vpop.f32.mrb[0].mxu0
      %v1342 = vadd.f32 0.0, %v1341
      %v1343 = vpop.f32.mrb[0].mxu0
      %1344 = vdwg.mxu0
      %v1345 = vsel %vm1122, %v1104, 0
      %v1347 = vsel %vm1122, %v1111, 0
      %1349 = vmatprep.subr.mxu0 0.0
      %1350 = vmatpush1.xpose.msra.mxu0 %v1347
      %1351 = vmatprep.subr.mxu0 0.0
      %1352 = vmatpush1.xpose.msra.mxu0 0.0
      %1353 = vmatprep.subr.mxu0 0.0
      %1354 = vmatpush1.xpose.msra.mxu0 0.0
      %1355 = vmatprep.subr.mxu0 0.0
      %1356 = vmatpush1.xpose.msra.mxu0 0.0
      %1357 = vmatprep.subr.mxu0 0.0
      %1358 = vmatpush1.xpose.msra.mxu0 0.0
      %1359 = vmatprep.subr.mxu0 0.0
      %1360 = vmatpush1.xpose.msra.mxu0 0.0
      %1361 = vmatprep.subr.mxu0 0.0
      %1362 = vmatpush1.xpose.msra.mxu0 0.0
      %1363 = vmatprep.subr.mxu0 0.0
      %1364 = vmatpush1.xpose.msra.mxu0 0.0
      %1365 = vmatprep.subr.mxu0 0.0
      %1366 = vmatpush1.xpose.msra.mxu0 0.0
      %1367 = vmatprep.subr.mxu0 0.0
      %1368 = vmatpush1.xpose.msra.mxu0 0.0
      %1369 = vmatprep.subr.mxu0 0.0
      %1370 = vmatpush1.xpose.msra.mxu0 0.0
      %1371 = vmatprep.subr.mxu0 0.0
      %1372 = vmatpush1.xpose.msra.mxu0 0.0
      %1373 = vmatprep.subr.mxu0 0.0
      %1374 = vmatpush1.xpose.msra.mxu0 0.0
      %1375 = vmatprep.subr.mxu0 0.0
      %1376 = vmatpush1.xpose.msra.mxu0 0.0
      %1377 = vmatprep.subr.mxu0 0.0
      %1378 = vmatpush1.xpose.msra.mxu0 0.0
      %1379 = vmatprep.subr.mxu0 0.0
      %1380 = vmatpush1.xpose.msra.mxu0 0.0
      %1381 = vmatprep.subr.mxu0 0.0
      %1382 = vmatpush1.xpose.msra.mxu0 0.0
      %1383 = vmatprep.subr.mxu0 0.0
      %1384 = vmatpush1.xpose.msra.mxu0 0.0
      %1385 = vmatprep.subr.mxu0 0.0
      %1386 = vmatpush1.xpose.msra.mxu0 0.0
      %1387 = vmatprep.subr.mxu0 0.0
      %1388 = vmatpush1.xpose.msra.mxu0 0.0
      %1389 = vmatprep.subr.mxu0 0.0
      %1390 = vmatpush1.xpose.msra.mxu0 0.0
      %1391 = vmatprep.subr.mxu0 0.0
      %1392 = vmatpush1.xpose.msra.mxu0 0.0
      %1393 = vmatprep.subr.mxu0 0.0
      %1394 = vmatpush1.xpose.msra.mxu0 0.0
      %1395 = vmatprep.subr.mxu0 0.0
      %1396 = vmatpush1.xpose.msra.mxu0 0.0
      %1397 = vmatprep.subr.mxu0 0.0
      %1398 = vmatpush1.xpose.msra.mxu0 0.0
      %1399 = vmatprep.subr.mxu0 0.0
      %1400 = vmatpush1.xpose.msra.mxu0 0.0
      %1401 = vmatprep.subr.mxu0 0.0
      %1402 = vmatpush1.xpose.msra.mxu0 0.0
      %1403 = vmatprep.subr.mxu0 0.0
      %1404 = vmatpush1.xpose.msra.mxu0 0.0
      %1405 = vmatprep.subr.mxu0 0.0
      %1406 = vmatpush1.xpose.msra.mxu0 0.0
      %1407 = vmatprep.subr.mxu0 0.0
      %1408 = vmatpush1.xpose.msra.mxu0 0.0
      %1409 = vmatprep.subr.mxu0 0.0
      %1410 = vmatpush1.xpose.msra.mxu0 0.0
      %1411 = vmatprep.subr.mxu0 0.0
      %1412 = vmatpush1.xpose.msra.mxu0 0.0
      %1413 = vmatprep.mubr.f32.mxu0 0.0
      %1414 = vmatmul.mubr.f32.gmra.mrb[0].mxu0 %v1345
      %v1415 = vpop.f32.mrb[0].mxu0
      %v1416 = vadd.f32 0.0, %v1415
      %v1417 = vpop.f32.mrb[0].mxu0
      %1418 = vdwg.mxu0
      %v1419 = vmul.f32 %v1194, 0.088388346
      %v1420 = vmul.f32 %v1268, 0.088388346
      %v1421 = vmul.f32 %v1342, 0.088388346
      %v1422 = vmul.f32 %v1416, 0.088388346
      %vm1423 = vcmask 64512
      %v1424 = vsel %vm1423, %v1419, -inf
      %1425 = vmax.xlane.f32.xlu0 %v1424
      %v1426 = vpop.xlane.xlu0 %1425
      %v1427 = vsel %vm1423, %v1420, -inf
      %1428 = vmax.xlane.f32.xlu0 %v1427
      %v1429 = vpop.xlane.xlu0 %1428
      %v1430 = vsel %vm1423, %v1421, -inf
      %1431 = vmax.xlane.f32.xlu0 %v1430
      %v1432 = vpop.xlane.xlu0 %1431
      %v1433 = vsel %vm1423, %v1422, -inf
      %1434 = vmax.xlane.f32.xlu0 %v1433
      %v1435 = vpop.xlane.xlu0 %1434
      %v1436 = vsub.f32 %v1419, %v1426
      %v1437 = vsub.f32 %v1420, %v1429
      %v1438 = vsub.f32 %v1421, %v1432
      %v1439 = vsub.f32 %v1422, %v1435
      %v1440 = vmul.f32 %v1436, 1.442695
      %v1441 = vpow.pop %v1440
      %v1442 = vmul.f32 %v1437, 1.442695
      %v1443 = vpow.pop %v1442
      %v1444 = vmul.f32 %v1438, 1.442695
      %v1445 = vpow.pop %v1444
      %v1446 = vmul.f32 %v1439, 1.442695
      %v1447 = vpow.pop %v1446
      %v1448 = vsel %vm1423, %v1441, 0.0
      %1449 = vadd.xlane.f32.xlu0 %v1448
      %v1450 = vpop.xlane.xlu0 %1449
      %v1451 = vsel %vm1423, %v1443, 0.0
      %1452 = vadd.xlane.f32.xlu0 %v1451
      %v1453 = vpop.xlane.xlu0 %1452
      %v1454 = vsel %vm1423, %v1445, 0.0
      %1455 = vadd.xlane.f32.xlu0 %v1454
      %v1456 = vpop.xlane.xlu0 %1455
      %v1457 = vsel %vm1423, %v1447, 0.0
      %1458 = vadd.xlane.f32.xlu0 %v1457
      %v1459 = vpop.xlane.xlu0 %1458
      %v1460 = vrcp.pop %v1450
      %v1461 = vrcp.pop %v1453
      %v1462 = vrcp.pop %v1456
      %v1463 = vrcp.pop %v1459
      %v1464 = vmul.f32 %v1441, %v1460
      %v1465 = vmul.f32 %v1443, %v1461
      %v1466 = vmul.f32 %v1445, %v1462
      %v1467 = vmul.f32 %v1447, %v1463
      %v1469 = vsel %vm1423, %v1464, 0
      %1471 = vmatprep.subr.mxu0 0.0
      %1472 = vmatpush1.msra.mxu0 %v1095
      %1473 = vmatprep.subr.mxu0 0.0
      %1474 = vmatpush1.msra.mxu0 0.0
      %1475 = vmatprep.subr.mxu0 0.0
      %1476 = vmatpush1.msra.mxu0 0.0
      %1477 = vmatprep.subr.mxu0 0.0
      %1478 = vmatpush1.msra.mxu0 0.0
      %1479 = vmatprep.subr.mxu0 0.0
      %1480 = vmatpush1.msra.mxu0 0.0
      %1481 = vmatprep.subr.mxu0 0.0
      %1482 = vmatpush1.msra.mxu0 0.0
      %1483 = vmatprep.subr.mxu0 0.0
      %1484 = vmatpush1.msra.mxu0 0.0
      %1485 = vmatprep.subr.mxu0 0.0
      %1486 = vmatpush1.msra.mxu0 0.0
      %1487 = vmatprep.subr.mxu0 0.0
      %1488 = vmatpush1.msra.mxu0 0.0
      %1489 = vmatprep.subr.mxu0 0.0
      %1490 = vmatpush1.msra.mxu0 0.0
      %1491 = vmatprep.subr.mxu0 0.0
      %1492 = vmatpush1.msra.mxu0 0.0
      %1493 = vmatprep.subr.mxu0 0.0
      %1494 = vmatpush1.msra.mxu0 0.0
      %1495 = vmatprep.subr.mxu0 0.0
      %1496 = vmatpush1.msra.mxu0 0.0
      %1497 = vmatprep.subr.mxu0 0.0
      %1498 = vmatpush1.msra.mxu0 0.0
      %1499 = vmatprep.subr.mxu0 0.0
      %1500 = vmatpush1.msra.mxu0 0.0
      %1501 = vmatprep.subr.mxu0 0.0
      %1502 = vmatpush1.msra.mxu0 0.0
      %1503 = vmatprep.subr.mxu0 0.0
      %1504 = vmatpush1.msra.mxu0 0.0
      %1505 = vmatprep.subr.mxu0 0.0
      %1506 = vmatpush1.msra.mxu0 0.0
      %1507 = vmatprep.subr.mxu0 0.0
      %1508 = vmatpush1.msra.mxu0 0.0
      %1509 = vmatprep.subr.mxu0 0.0
      %1510 = vmatpush1.msra.mxu0 0.0
      %1511 = vmatprep.subr.mxu0 0.0
      %1512 = vmatpush1.msra.mxu0 0.0
      %1513 = vmatprep.subr.mxu0 0.0
      %1514 = vmatpush1.msra.mxu0 0.0
      %1515 = vmatprep.subr.mxu0 0.0
      %1516 = vmatpush1.msra.mxu0 0.0
      %1517 = vmatprep.subr.mxu0 0.0
      %1518 = vmatpush1.msra.mxu0 0.0
      %1519 = vmatprep.subr.mxu0 0.0
      %1520 = vmatpush1.msra.mxu0 0.0
      %1521 = vmatprep.subr.mxu0 0.0
      %1522 = vmatpush1.msra.mxu0 0.0
      %1523 = vmatprep.subr.mxu0 0.0
      %1524 = vmatpush1.msra.mxu0 0.0
      %1525 = vmatprep.subr.mxu0 0.0
      %1526 = vmatpush1.msra.mxu0 0.0
      %1527 = vmatprep.subr.mxu0 0.0
      %1528 = vmatpush1.msra.mxu0 0.0
      %1529 = vmatprep.subr.mxu0 0.0
      %1530 = vmatpush1.msra.mxu0 0.0
      %1531 = vmatprep.subr.mxu0 0.0
      %1532 = vmatpush1.msra.mxu0 0.0
      %1533 = vmatprep.subr.mxu0 0.0
      %1534 = vmatpush1.msra.mxu0 0.0
      %1535 = vmatprep.mubr.f32.mxu0 0.0
      %1536 = vmatmul.mubr.f32.gmra.mrb[0].mxu0 %v1469
      %v1537 = vpop.f32.mrb[0].mxu0
      %v1538 = vadd.f32 0.0, %v1537
      %v1539 = vpop.f32.mrb[0].mxu0
      %1540 = vdwg.mxu0
      %v1542 = vsel %vm1423, %v1465, 0
      %1544 = vmatprep.subr.mxu0 0.0
      %1545 = vmatpush1.msra.mxu0 %v1114
      %1546 = vmatprep.subr.mxu0 0.0
      %1547 = vmatpush1.msra.mxu0 0.0
      %1548 = vmatprep.subr.mxu0 0.0
      %1549 = vmatpush1.msra.mxu0 0.0
      %1550 = vmatprep.subr.mxu0 0.0
      %1551 = vmatpush1.msra.mxu0 0.0
      %1552 = vmatprep.subr.mxu0 0.0
      %1553 = vmatpush1.msra.mxu0 0.0
      %1554 = vmatprep.subr.mxu0 0.0
      %1555 = vmatpush1.msra.mxu0 0.0
      %1556 = vmatprep.subr.mxu0 0.0
      %1557 = vmatpush1.msra.mxu0 0.0
      %1558 = vmatprep.subr.mxu0 0.0
      %1559 = vmatpush1.msra.mxu0 0.0
      %1560 = vmatprep.subr.mxu0 0.0
      %1561 = vmatpush1.msra.mxu0 0.0
      %1562 = vmatprep.subr.mxu0 0.0
      %1563 = vmatpush1.msra.mxu0 0.0
      %1564 = vmatprep.subr.mxu0 0.0
      %1565 = vmatpush1.msra.mxu0 0.0
      %1566 = vmatprep.subr.mxu0 0.0
      %1567 = vmatpush1.msra.mxu0 0.0
      %1568 = vmatprep.subr.mxu0 0.0
      %1569 = vmatpush1.msra.mxu0 0.0
      %1570 = vmatprep.subr.mxu0 0.0
      %1571 = vmatpush1.msra.mxu0 0.0
      %1572 = vmatprep.subr.mxu0 0.0
      %1573 = vmatpush1.msra.mxu0 0.0
      %1574 = vmatprep.subr.mxu0 0.0
      %1575 = vmatpush1.msra.mxu0 0.0
      %1576 = vmatprep.subr.mxu0 0.0
      %1577 = vmatpush1.msra.mxu0 0.0
      %1578 = vmatprep.subr.mxu0 0.0
      %1579 = vmatpush1.msra.mxu0 0.0
      %1580 = vmatprep.subr.mxu0 0.0
      %1581 = vmatpush1.msra.mxu0 0.0
      %1582 = vmatprep.subr.mxu0 0.0
      %1583 = vmatpush1.msra.mxu0 0.0
      %1584 = vmatprep.subr.mxu0 0.0
      %1585 = vmatpush1.msra.mxu0 0.0
      %1586 = vmatprep.subr.mxu0 0.0
      %1587 = vmatpush1.msra.mxu0 0.0
      %1588 = vmatprep.subr.mxu0 0.0
      %1589 = vmatpush1.msra.mxu0 0.0
      %1590 = vmatprep.subr.mxu0 0.0
      %1591 = vmatpush1.msra.mxu0 0.0
      %1592 = vmatprep.subr.mxu0 0.0
      %1593 = vmatpush1.msra.mxu0 0.0
      %1594 = vmatprep.subr.mxu0 0.0
      %1595 = vmatpush1.msra.mxu0 0.0
      %1596 = vmatprep.subr.mxu0 0.0
      %1597 = vmatpush1.msra.mxu0 0.0
      %1598 = vmatprep.subr.mxu0 0.0
      %1599 = vmatpush1.msra.mxu0 0.0
      %1600 = vmatprep.subr.mxu0 0.0
      %1601 = vmatpush1.msra.mxu0 0.0
      %1602 = vmatprep.subr.mxu0 0.0
      %1603 = vmatpush1.msra.mxu0 0.0
      %1604 = vmatprep.subr.mxu0 0.0
      %1605 = vmatpush1.msra.mxu0 0.0
      %1606 = vmatprep.subr.mxu0 0.0
      %1607 = vmatpush1.msra.mxu0 0.0
      %1608 = vmatprep.mubr.f32.mxu0 0.0
      %1609 = vmatmul.mubr.f32.gmra.mrb[0].mxu0 %v1542
      %v1610 = vpop.f32.mrb[0].mxu0
      %v1611 = vadd.f32 0.0, %v1610
      %v1612 = vpop.f32.mrb[0].mxu0
      %1613 = vdwg.mxu0
      %v1615 = vsel %vm1423, %v1466, 0
      %1617 = vmatprep.subr.mxu0 0.0
      %1618 = vmatpush1.msra.mxu0 %v1117
      %1619 = vmatprep.subr.mxu0 0.0
      %1620 = vmatpush1.msra.mxu0 0.0
      %1621 = vmatprep.subr.mxu0 0.0
      %1622 = vmatpush1.msra.mxu0 0.0
      %1623 = vmatprep.subr.mxu0 0.0
      %1624 = vmatpush1.msra.mxu0 0.0
      %1625 = vmatprep.subr.mxu0 0.0
      %1626 = vmatpush1.msra.mxu0 0.0
      %1627 = vmatprep.subr.mxu0 0.0
      %1628 = vmatpush1.msra.mxu0 0.0
      %1629 = vmatprep.subr.mxu0 0.0
      %1630 = vmatpush1.msra.mxu0 0.0
      %1631 = vmatprep.subr.mxu0 0.0
      %1632 = vmatpush1.msra.mxu0 0.0
      %1633 = vmatprep.subr.mxu0 0.0
      %1634 = vmatpush1.msra.mxu0 0.0
      %1635 = vmatprep.subr.mxu0 0.0
      %1636 = vmatpush1.msra.mxu0 0.0
      %1637 = vmatprep.subr.mxu0 0.0
      %1638 = vmatpush1.msra.mxu0 0.0
      %1639 = vmatprep.subr.mxu0 0.0
      %1640 = vmatpush1.msra.mxu0 0.0
      %1641 = vmatprep.subr.mxu0 0.0
      %1642 = vmatpush1.msra.mxu0 0.0
      %1643 = vmatprep.subr.mxu0 0.0
      %1644 = vmatpush1.msra.mxu0 0.0
      %1645 = vmatprep.subr.mxu0 0.0
      %1646 = vmatpush1.msra.mxu0 0.0
      %1647 = vmatprep.subr.mxu0 0.0
      %1648 = vmatpush1.msra.mxu0 0.0
      %1649 = vmatprep.subr.mxu0 0.0
      %1650 = vmatpush1.msra.mxu0 0.0
      %1651 = vmatprep.subr.mxu0 0.0
      %1652 = vmatpush1.msra.mxu0 0.0
      %1653 = vmatprep.subr.mxu0 0.0
      %1654 = vmatpush1.msra.mxu0 0.0
      %1655 = vmatprep.subr.mxu0 0.0
      %1656 = vmatpush1.msra.mxu0 0.0
      %1657 = vmatprep.subr.mxu0 0.0
      %1658 = vmatpush1.msra.mxu0 0.0
      %1659 = vmatprep.subr.mxu0 0.0
      %1660 = vmatpush1.msra.mxu0 0.0
      %1661 = vmatprep.subr.mxu0 0.0
      %1662 = vmatpush1.msra.mxu0 0.0
      %1663 = vmatprep.subr.mxu0 0.0
      %1664 = vmatpush1.msra.mxu0 0.0
      %1665 = vmatprep.subr.mxu0 0.0
      %1666 = vmatpush1.msra.mxu0 0.0
      %1667 = vmatprep.subr.mxu0 0.0
      %1668 = vmatpush1.msra.mxu0 0.0
      %1669 = vmatprep.subr.mxu0 0.0
      %1670 = vmatpush1.msra.mxu0 0.0
      %1671 = vmatprep.subr.mxu0 0.0
      %1672 = vmatpush1.msra.mxu0 0.0
      %1673 = vmatprep.subr.mxu0 0.0
      %1674 = vmatpush1.msra.mxu0 0.0
      %1675 = vmatprep.subr.mxu0 0.0
      %1676 = vmatpush1.msra.mxu0 0.0
      %1677 = vmatprep.subr.mxu0 0.0
      %1678 = vmatpush1.msra.mxu0 0.0
      %1679 = vmatprep.subr.mxu0 0.0
      %1680 = vmatpush1.msra.mxu0 0.0
      %1681 = vmatprep.mubr.f32.mxu0 0.0
      %1682 = vmatmul.mubr.f32.gmra.mrb[0].mxu0 %v1615
      %v1683 = vpop.f32.mrb[0].mxu0
      %v1684 = vadd.f32 0.0, %v1683
      %v1685 = vpop.f32.mrb[0].mxu0
      %1686 = vdwg.mxu0
      %v1688 = vsel %vm1423, %v1467, 0
      %1690 = vmatprep.subr.mxu0 0.0
      %1691 = vmatpush1.msra.mxu0 %v1120
      %1692 = vmatprep.subr.mxu0 0.0
      %1693 = vmatpush1.msra.mxu0 0.0
      %1694 = vmatprep.subr.mxu0 0.0
      %1695 = vmatpush1.msra.mxu0 0.0
      %1696 = vmatprep.subr.mxu0 0.0
      %1697 = vmatpush1.msra.mxu0 0.0
      %1698 = vmatprep.subr.mxu0 0.0
      %1699 = vmatpush1.msra.mxu0 0.0
      %1700 = vmatprep.subr.mxu0 0.0
      %1701 = vmatpush1.msra.mxu0 0.0
      %1702 = vmatprep.subr.mxu0 0.0
      %1703 = vmatpush1.msra.mxu0 0.0
      %1704 = vmatprep.subr.mxu0 0.0
      %1705 = vmatpush1.msra.mxu0 0.0
      %1706 = vmatprep.subr.mxu0 0.0
      %1707 = vmatpush1.msra.mxu0 0.0
      %1708 = vmatprep.subr.mxu0 0.0
      %1709 = vmatpush1.msra.mxu0 0.0
      %1710 = vmatprep.subr.mxu0 0.0
      %1711 = vmatpush1.msra.mxu0 0.0
      %1712 = vmatprep.subr.mxu0 0.0
      %1713 = vmatpush1.msra.mxu0 0.0
      %1714 = vmatprep.subr.mxu0 0.0
      %1715 = vmatpush1.msra.mxu0 0.0
      %1716 = vmatprep.subr.mxu0 0.0
      %1717 = vmatpush1.msra.mxu0 0.0
      %1718 = vmatprep.subr.mxu0 0.0
      %1719 = vmatpush1.msra.mxu0 0.0
      %1720 = vmatprep.subr.mxu0 0.0
      %1721 = vmatpush1.msra.mxu0 0.0
      %1722 = vmatprep.subr.mxu0 0.0
      %1723 = vmatpush1.msra.mxu0 0.0
      %1724 = vmatprep.subr.mxu0 0.0
      %1725 = vmatpush1.msra.mxu0 0.0
      %1726 = vmatprep.subr.mxu0 0.0
      %1727 = vmatpush1.msra.mxu0 0.0
      %1728 = vmatprep.subr.mxu0 0.0
      %1729 = vmatpush1.msra.mxu0 0.0
      %1730 = vmatprep.subr.mxu0 0.0
      %1731 = vmatpush1.msra.mxu0 0.0
      %1732 = vmatprep.subr.mxu0 0.0
      %1733 = vmatpush1.msra.mxu0 0.0
      %1734 = vmatprep.subr.mxu0 0.0
      %1735 = vmatpush1.msra.mxu0 0.0
      %1736 = vmatprep.subr.mxu0 0.0
      %1737 = vmatpush1.msra.mxu0 0.0
      %1738 = vmatprep.subr.mxu0 0.0
      %1739 = vmatpush1.msra.mxu0 0.0
      %1740 = vmatprep.subr.mxu0 0.0
      %1741 = vmatpush1.msra.mxu0 0.0
      %1742 = vmatprep.subr.mxu0 0.0
      %1743 = vmatpush1.msra.mxu0 0.0
      %1744 = vmatprep.subr.mxu0 0.0
      %1745 = vmatpush1.msra.mxu0 0.0
      %1746 = vmatprep.subr.mxu0 0.0
      %1747 = vmatpush1.msra.mxu0 0.0
      %1748 = vmatprep.subr.mxu0 0.0
      %1749 = vmatpush1.msra.mxu0 0.0
      %1750 = vmatprep.subr.mxu0 0.0
      %1751 = vmatpush1.msra.mxu0 0.0
      %1752 = vmatprep.subr.mxu0 0.0
      %1753 = vmatpush1.msra.mxu0 0.0
      %1754 = vmatprep.mubr.f32.mxu0 0.0
      %1755 = vmatmul.mubr.f32.gmra.mrb[0].mxu0 %v1688
      %v1756 = vpop.f32.mrb[0].mxu0
      %v1757 = vadd.f32 0.0, %v1756
      %v1758 = vpop.f32.mrb[0].mxu0
      %1759 = vdwg.mxu0
      %v1760 = vld [vmem:[%s713] sm:$0xff]
      %v1761 = vld [vmem:[%s713 + $0x8] sm:$0xff]
      %v1762 = vld [vmem:[%s713 + $0x10] sm:$0xff]
      %v1763 = vld [vmem:[%s713 + $0x18] sm:$0xff]
      %v1764 = vld [vmem:[%s713 + $0x20] sm:$0xff]
      %v1765 = vld [vmem:[%s713 + $0x28] sm:$0xff]
      %v1766 = vld [vmem:[%s713 + $0x30] sm:$0xff]
      %v1767 = vld [vmem:[%s713 + $0x38] sm:$0xff]
      %v1768 = vld [vmem:[%s713 + $0x40] sm:$0xff]
      %v1769 = vld [vmem:[%s713 + $0x48] sm:$0xff]
      %v1770 = vld [vmem:[%s713 + $0x50] sm:$0xff]
      %v1771 = vld [vmem:[%s713 + $0x58] sm:$0xff]
      %v1772 = vld [vmem:[%s713 + $0x60] sm:$0xff]
      %v1773 = vld [vmem:[%s713 + $0x68] sm:$0xff]
      %v1774 = vld [vmem:[%s713 + $0x70] sm:$0xff]
      %v1775 = vld [vmem:[%s713 + $0x78] sm:$0xff]
      %v1777 = vsel %vm1122, %v1538, 0
      %1779 = vmatprep.subr.mxu0 0.0
      %1780 = vmatpush1.msra.mxu0 %v1760
      %1781 = vmatprep.subr.mxu0 0.0
      %1782 = vmatpush1.msra.mxu0 %v1761
      %1783 = vmatprep.subr.mxu0 0.0
      %1784 = vmatpush1.msra.mxu0 %v1762
      %1785 = vmatprep.subr.mxu0 0.0
      %1786 = vmatpush1.msra.mxu0 %v1763
      %1787 = vmatprep.subr.mxu0 0.0
      %1788 = vmatpush1.msra.mxu0 0.0
      %1789 = vmatprep.subr.mxu0 0.0
      %1790 = vmatpush1.msra.mxu0 0.0
      %1791 = vmatprep.subr.mxu0 0.0
      %1792 = vmatpush1.msra.mxu0 0.0
      %1793 = vmatprep.subr.mxu0 0.0
      %1794 = vmatpush1.msra.mxu0 0.0
      %1795 = vmatprep.subr.mxu0 0.0
      %1796 = vmatpush1.msra.mxu0 0.0
      %1797 = vmatprep.subr.mxu0 0.0
      %1798 = vmatpush1.msra.mxu0 0.0
      %1799 = vmatprep.subr.mxu0 0.0
      %1800 = vmatpush1.msra.mxu0 0.0
      %1801 = vmatprep.subr.mxu0 0.0
      %1802 = vmatpush1.msra.mxu0 0.0
      %1803 = vmatprep.subr.mxu0 0.0
      %1804 = vmatpush1.msra.mxu0 0.0
      %1805 = vmatprep.subr.mxu0 0.0
      %1806 = vmatpush1.msra.mxu0 0.0
      %1807 = vmatprep.subr.mxu0 0.0
      %1808 = vmatpush1.msra.mxu0 0.0
      %1809 = vmatprep.subr.mxu0 0.0
      %1810 = vmatpush1.msra.mxu0 0.0
      %1811 = vmatprep.subr.mxu0 0.0
      %1812 = vmatpush1.msra.mxu0 0.0
      %1813 = vmatprep.subr.mxu0 0.0
      %1814 = vmatpush1.msra.mxu0 0.0
      %1815 = vmatprep.subr.mxu0 0.0
      %1816 = vmatpush1.msra.mxu0 0.0
      %1817 = vmatprep.subr.mxu0 0.0
      %1818 = vmatpush1.msra.mxu0 0.0
      %1819 = vmatprep.subr.mxu0 0.0
      %1820 = vmatpush1.msra.mxu0 0.0
      %1821 = vmatprep.subr.mxu0 0.0
      %1822 = vmatpush1.msra.mxu0 0.0
      %1823 = vmatprep.subr.mxu0 0.0
      %1824 = vmatpush1.msra.mxu0 0.0
      %1825 = vmatprep.subr.mxu0 0.0
      %1826 = vmatpush1.msra.mxu0 0.0
      %1827 = vmatprep.subr.mxu0 0.0
      %1828 = vmatpush1.msra.mxu0 0.0
      %1829 = vmatprep.subr.mxu0 0.0
      %1830 = vmatpush1.msra.mxu0 0.0
      %1831 = vmatprep.subr.mxu0 0.0
      %1832 = vmatpush1.msra.mxu0 0.0
      %1833 = vmatprep.subr.mxu0 0.0
      %1834 = vmatpush1.msra.mxu0 0.0
      %1835 = vmatprep.subr.mxu0 0.0
      %1836 = vmatpush1.msra.mxu0 0.0
      %1837 = vmatprep.subr.mxu0 0.0
      %1838 = vmatpush1.msra.mxu0 0.0
      %1839 = vmatprep.subr.mxu0 0.0
      %1840 = vmatpush1.msra.mxu0 0.0
      %1841 = vmatprep.subr.mxu0 0.0
      %1842 = vmatpush1.msra.mxu0 0.0
      %1843 = vmatprep.mubr.f32.mxu0 0.0
      %1844 = vmatmul.mubr.f32.gmra.mrb[0].mxu0 %v1777
      %v1845 = vpop.f32.mrb[0].mxu0
      %v1846 = vadd.f32 0.0, %v1845
      %v1847 = vpop.f32.mrb[0].mxu0
      %1848 = vdwg.mxu0
      %v1850 = vsel %vm1122, %v1611, 0
      %1852 = vmatprep.subr.mxu0 0.0
      %1853 = vmatpush1.msra.mxu0 %v1764
      %1854 = vmatprep.subr.mxu0 0.0
      %1855 = vmatpush1.msra.mxu0 %v1765
      %1856 = vmatprep.subr.mxu0 0.0
      %1857 = vmatpush1.msra.mxu0 %v1766
      %1858 = vmatprep.subr.mxu0 0.0
      %1859 = vmatpush1.msra.mxu0 %v1767
      %1860 = vmatprep.subr.mxu0 0.0
      %1861 = vmatpush1.msra.mxu0 0.0
      %1862 = vmatprep.subr.mxu0 0.0
      %1863 = vmatpush1.msra.mxu0 0.0
      %1864 = vmatprep.subr.mxu0 0.0
      %1865 = vmatpush1.msra.mxu0 0.0
      %1866 = vmatprep.subr.mxu0 0.0
      %1867 = vmatpush1.msra.mxu0 0.0
      %1868 = vmatprep.subr.mxu0 0.0
      %1869 = vmatpush1.msra.mxu0 0.0
      %1870 = vmatprep.subr.mxu0 0.0
      %1871 = vmatpush1.msra.mxu0 0.0
      %1872 = vmatprep.subr.mxu0 0.0
      %1873 = vmatpush1.msra.mxu0 0.0
      %1874 = vmatprep.subr.mxu0 0.0
      %1875 = vmatpush1.msra.mxu0 0.0
      %1876 = vmatprep.subr.mxu0 0.0
      %1877 = vmatpush1.msra.mxu0 0.0
      %1878 = vmatprep.subr.mxu0 0.0
      %1879 = vmatpush1.msra.mxu0 0.0
      %1880 = vmatprep.subr.mxu0 0.0
      %1881 = vmatpush1.msra.mxu0 0.0
      %1882 = vmatprep.subr.mxu0 0.0
      %1883 = vmatpush1.msra.mxu0 0.0
      %1884 = vmatprep.subr.mxu0 0.0
      %1885 = vmatpush1.msra.mxu0 0.0
      %1886 = vmatprep.subr.mxu0 0.0
      %1887 = vmatpush1.msra.mxu0 0.0
      %1888 = vmatprep.subr.mxu0 0.0
      %1889 = vmatpush1.msra.mxu0 0.0
      %1890 = vmatprep.subr.mxu0 0.0
      %1891 = vmatpush1.msra.mxu0 0.0
      %1892 = vmatprep.subr.mxu0 0.0
      %1893 = vmatpush1.msra.mxu0 0.0
      %1894 = vmatprep.subr.mxu0 0.0
      %1895 = vmatpush1.msra.mxu0 0.0
      %1896 = vmatprep.subr.mxu0 0.0
      %1897 = vmatpush1.msra.mxu0 0.0
      %1898 = vmatprep.subr.mxu0 0.0
      %1899 = vmatpush1.msra.mxu0 0.0
      %1900 = vmatprep.subr.mxu0 0.0
      %1901 = vmatpush1.msra.mxu0 0.0
      %1902 = vmatprep.subr.mxu0 0.0
      %1903 = vmatpush1.msra.mxu0 0.0
      %1904 = vmatprep.subr.mxu0 0.0
      %1905 = vmatpush1.msra.mxu0 0.0
      %1906 = vmatprep.subr.mxu0 0.0
      %1907 = vmatpush1.msra.mxu0 0.0
      %1908 = vmatprep.subr.mxu0 0.0
      %1909 = vmatpush1.msra.mxu0 0.0
      %1910 = vmatprep.subr.mxu0 0.0
      %1911 = vmatpush1.msra.mxu0 0.0
      %1912 = vmatprep.subr.mxu0 0.0
      %1913 = vmatpush1.msra.mxu0 0.0
      %1914 = vmatprep.subr.mxu0 0.0
      %1915 = vmatpush1.msra.mxu0 0.0
      %1916 = vmatprep.mubr.f32.mxu0 0.0
      %1917 = vmatmul.mubr.f32.gmra.mrb[0].mxu0 %v1850
      %v1918 = vpop.f32.mrb[0].mxu0
      %v1919 = vadd.f32 0.0, %v1918
      %v1920 = vpop.f32.mrb[0].mxu0
      %1921 = vdwg.mxu0
      %v1923 = vsel %vm1122, %v1684, 0
      %1925 = vmatprep.subr.mxu0 0.0
      %1926 = vmatpush1.msra.mxu0 %v1768
      %1927 = vmatprep.subr.mxu0 0.0
      %1928 = vmatpush1.msra.mxu0 %v1769
      %1929 = vmatprep.subr.mxu0 0.0
      %1930 = vmatpush1.msra.mxu0 %v1770
      %1931 = vmatprep.subr.mxu0 0.0
      %1932 = vmatpush1.msra.mxu0 %v1771
      %1933 = vmatprep.subr.mxu0 0.0
      %1934 = vmatpush1.msra.mxu0 0.0
      %1935 = vmatprep.subr.mxu0 0.0
      %1936 = vmatpush1.msra.mxu0 0.0
      %1937 = vmatprep.subr.mxu0 0.0
      %1938 = vmatpush1.msra.mxu0 0.0
      %1939 = vmatprep.subr.mxu0 0.0
      %1940 = vmatpush1.msra.mxu0 0.0
      %1941 = vmatprep.subr.mxu0 0.0
      %1942 = vmatpush1.msra.mxu0 0.0
      %1943 = vmatprep.subr.mxu0 0.0
      %1944 = vmatpush1.msra.mxu0 0.0
      %1945 = vmatprep.subr.mxu0 0.0
      %1946 = vmatpush1.msra.mxu0 0.0
      %1947 = vmatprep.subr.mxu0 0.0
      %1948 = vmatpush1.msra.mxu0 0.0
      %1949 = vmatprep.subr.mxu0 0.0
      %1950 = vmatpush1.msra.mxu0 0.0
      %1951 = vmatprep.subr.mxu0 0.0
      %1952 = vmatpush1.msra.mxu0 0.0
      %1953 = vmatprep.subr.mxu0 0.0
      %1954 = vmatpush1.msra.mxu0 0.0
      %1955 = vmatprep.subr.mxu0 0.0
      %1956 = vmatpush1.msra.mxu0 0.0
      %1957 = vmatprep.subr.mxu0 0.0
      %1958 = vmatpush1.msra.mxu0 0.0
      %1959 = vmatprep.subr.mxu0 0.0
      %1960 = vmatpush1.msra.mxu0 0.0
      %1961 = vmatprep.subr.mxu0 0.0
      %1962 = vmatpush1.msra.mxu0 0.0
      %1963 = vmatprep.subr.mxu0 0.0
      %1964 = vmatpush1.msra.mxu0 0.0
      %1965 = vmatprep.subr.mxu0 0.0
      %1966 = vmatpush1.msra.mxu0 0.0
      %1967 = vmatprep.subr.mxu0 0.0
      %1968 = vmatpush1.msra.mxu0 0.0
      %1969 = vmatprep.subr.mxu0 0.0
      %1970 = vmatpush1.msra.mxu0 0.0
      %1971 = vmatprep.subr.mxu0 0.0
      %1972 = vmatpush1.msra.mxu0 0.0
      %1973 = vmatprep.subr.mxu0 0.0
      %1974 = vmatpush1.msra.mxu0 0.0
      %1975 = vmatprep.subr.mxu0 0.0
      %1976 = vmatpush1.msra.mxu0 0.0
      %1977 = vmatprep.subr.mxu0 0.0
      %1978 = vmatpush1.msra.mxu0 0.0
      %1979 = vmatprep.subr.mxu0 0.0
      %1980 = vmatpush1.msra.mxu0 0.0
      %1981 = vmatprep.subr.mxu0 0.0
      %1982 = vmatpush1.msra.mxu0 0.0
      %1983 = vmatprep.subr.mxu0 0.0
      %1984 = vmatpush1.msra.mxu0 0.0
      %1985 = vmatprep.subr.mxu0 0.0
      %1986 = vmatpush1.msra.mxu0 0.0
      %1987 = vmatprep.subr.mxu0 0.0
      %1988 = vmatpush1.msra.mxu0 0.0
      %1989 = vmatprep.mubr.f32.mxu0 0.0
      %1990 = vmatmul.mubr.f32.gmra.mrb[0].mxu0 %v1923
      %v1991 = vpop.f32.mrb[0].mxu0
      %v1992 = vadd.f32 0.0, %v1991
      %v1993 = vpop.f32.mrb[0].mxu0
      %1994 = vdwg.mxu0
      %v1996 = vsel %vm1122, %v1757, 0
      %1998 = vmatprep.subr.mxu0 0.0
      %1999 = vmatpush1.msra.mxu0 %v1772
      %2000 = vmatprep.subr.mxu0 0.0
      %2001 = vmatpush1.msra.mxu0 %v1773
      %2002 = vmatprep.subr.mxu0 0.0
      %2003 = vmatpush1.msra.mxu0 %v1774
      %2004 = vmatprep.subr.mxu0 0.0
      %2005 = vmatpush1.msra.mxu0 %v1775
      %2006 = vmatprep.subr.mxu0 0.0
      %2007 = vmatpush1.msra.mxu0 0.0
      %2008 = vmatprep.subr.mxu0 0.0
      %2009 = vmatpush1.msra.mxu0 0.0
      %2010 = vmatprep.subr.mxu0 0.0
      %2011 = vmatpush1.msra.mxu0 0.0
      %2012 = vmatprep.subr.mxu0 0.0
      %2013 = vmatpush1.msra.mxu0 0.0
      %2014 = vmatprep.subr.mxu0 0.0
      %2015 = vmatpush1.msra.mxu0 0.0
      %2016 = vmatprep.subr.mxu0 0.0
      %2017 = vmatpush1.msra.mxu0 0.0
      %2018 = vmatprep.subr.mxu0 0.0
      %2019 = vmatpush1.msra.mxu0 0.0
      %2020 = vmatprep.subr.mxu0 0.0
      %2021 = vmatpush1.msra.mxu0 0.0
      %2022 = vmatprep.subr.mxu0 0.0
      %2023 = vmatpush1.msra.mxu0 0.0
      %2024 = vmatprep.subr.mxu0 0.0
      %2025 = vmatpush1.msra.mxu0 0.0
      %2026 = vmatprep.subr.mxu0 0.0
      %2027 = vmatpush1.msra.mxu0 0.0
      %2028 = vmatprep.subr.mxu0 0.0
      %2029 = vmatpush1.msra.mxu0 0.0
      %2030 = vmatprep.subr.mxu0 0.0
      %2031 = vmatpush1.msra.mxu0 0.0
      %2032 = vmatprep.subr.mxu0 0.0
      %2033 = vmatpush1.msra.mxu0 0.0
      %2034 = vmatprep.subr.mxu0 0.0
      %2035 = vmatpush1.msra.mxu0 0.0
      %2036 = vmatprep.subr.mxu0 0.0
      %2037 = vmatpush1.msra.mxu0 0.0
      %2038 = vmatprep.subr.mxu0 0.0
      %2039 = vmatpush1.msra.mxu0 0.0
      %2040 = vmatprep.subr.mxu0 0.0
      %2041 = vmatpush1.msra.mxu0 0.0
      %2042 = vmatprep.subr.mxu0 0.0
      %2043 = vmatpush1.msra.mxu0 0.0
      %2044 = vmatprep.subr.mxu0 0.0
      %2045 = vmatpush1.msra.mxu0 0.0
      %2046 = vmatprep.subr.mxu0 0.0
      %2047 = vmatpush1.msra.mxu0 0.0
      %2048 = vmatprep.subr.mxu0 0.0
      %2049 = vmatpush1.msra.mxu0 0.0
      %2050 = vmatprep.subr.mxu0 0.0
      %2051 = vmatpush1.msra.mxu0 0.0
      %2052 = vmatprep.subr.mxu0 0.0
      %2053 = vmatpush1.msra.mxu0 0.0
      %2054 = vmatprep.subr.mxu0 0.0
      %2055 = vmatpush1.msra.mxu0 0.0
      %2056 = vmatprep.subr.mxu0 0.0
      %2057 = vmatpush1.msra.mxu0 0.0
      %2058 = vmatprep.subr.mxu0 0.0
      %2059 = vmatpush1.msra.mxu0 0.0
      %2060 = vmatprep.subr.mxu0 0.0
      %2061 = vmatpush1.msra.mxu0 0.0
      %2062 = vmatprep.mubr.f32.mxu0 0.0
      %2063 = vmatmul.mubr.f32.gmra.mrb[0].mxu0 %v1996
      %v2064 = vpop.f32.mrb[0].mxu0
      %v2065 = vadd.f32 0.0, %v2064
      %v2066 = vpop.f32.mrb[0].mxu0
      %2067 = vdwg.mxu0
      %v2068 = vadd.f32 %v1846, %v1919
      %v2069 = vadd.f32 %v2068, %v1992
      %v2070 = vadd.f32 %v2069, %v2065
      %v2071 = vld [vmem:[%s716] sm:$0x1]
      %v2073 = vlaneseq
      %v2074 = vshrl.u32 %v2073, 7
      %v2075 = vsub.s32 0, %v2074
      %v2076 = vrot.slane %v2071, %v2075
      %v2078 = vadd.f32 %v2070, %v2076
      %v2079 = vadd.f32 %v2078, %v839
      %v2080 = vld [vmem:[%s719] sm:$0x1]
      %v2081 = vld [vmem:[%s722] sm:$0x1]
      %2082 = vadd.xlane.f32.xlu0 %v2079
      %v2083 = vpop.xlane.xlu0 %2082
      %v2084 = vrcp.pop 128.0
      %v2085 = vmul.f32 %v2083, %v2084
      %v2086 = vsub.f32 %v2079, %v2085
      %v2087 = vmul.f32 %v2086, %v2086
      %2088 = vadd.xlane.f32.xlu0 %v2087
      %v2089 = vpop.xlane.xlu0 %2088
      %v2090 = vmul.f32 %v2089, %v2084
      %v2091 = vadd.f32 %v2090, 1e-05
      %v2092 = vrsqrt.pop %v2091
      %v2093 = vmul.f32 %v2086, %v2092
      %v2095 = vlaneseq
      %v2096 = vshrl.u32 %v2095, 7
      %v2097 = vsub.s32 0, %v2096
      %v2098 = vrot.slane %v2080, %v2097
      %v2100 = vmul.f32 %v2093, %v2098
      %v2102 = vlaneseq
      %v2103 = vshrl.u32 %v2102, 7
      %v2104 = vsub.s32 0, %v2103
      %v2105 = vrot.slane %v2081, %v2104
      %v2107 = vadd.f32 %v2100, %v2105
      %v2108 = vld [vmem:[%s727] sm:$0xff]
      %v2109 = vld [vmem:[%s727 + $0x8] sm:$0xff]
      %v2110 = vld [vmem:[%s727 + $0x10] sm:$0xff]
      %v2111 = vld [vmem:[%s727 + $0x18] sm:$0xff]
      %v2112 = vld [vmem:[%s727 + $0x20] sm:$0xff]
      %v2113 = vld [vmem:[%s727 + $0x28] sm:$0xff]
      %v2114 = vld [vmem:[%s727 + $0x30] sm:$0xff]
      %v2115 = vld [vmem:[%s727 + $0x38] sm:$0xff]
      %v2116 = vld [vmem:[%s727 + $0x40] sm:$0xff]
      %v2117 = vld [vmem:[%s727 + $0x48] sm:$0xff]
      %v2118 = vld [vmem:[%s727 + $0x50] sm:$0xff]
      %v2119 = vld [vmem:[%s727 + $0x58] sm:$0xff]
      %v2120 = vld [vmem:[%s727 + $0x60] sm:$0xff]
      %v2121 = vld [vmem:[%s727 + $0x68] sm:$0xff]
      %v2122 = vld [vmem:[%s727 + $0x70] sm:$0xff]
      %v2123 = vld [vmem:[%s727 + $0x78] sm:$0xff]
      %v2124 = vld [vmem:[%s727 + $0x80] sm:$0xff]
      %v2125 = vld [vmem:[%s727 + $0x88] sm:$0xff]
      %v2126 = vld [vmem:[%s727 + $0x90] sm:$0xff]
      %v2127 = vld [vmem:[%s727 + $0x98] sm:$0xff]
      %v2128 = vld [vmem:[%s727 + $0xa0] sm:$0xff]
      %v2129 = vld [vmem:[%s727 + $0xa8] sm:$0xff]
      %v2130 = vld [vmem:[%s727 + $0xb0] sm:$0xff]
      %v2131 = vld [vmem:[%s727 + $0xb8] sm:$0xff]
      %v2132 = vld [vmem:[%s727 + $0xc0] sm:$0xff]
      %v2133 = vld [vmem:[%s727 + $0xc8] sm:$0xff]
      %v2134 = vld [vmem:[%s727 + $0xd0] sm:$0xff]
      %v2135 = vld [vmem:[%s727 + $0xd8] sm:$0xff]
      %v2136 = vld [vmem:[%s727 + $0xe0] sm:$0xff]
      %v2137 = vld [vmem:[%s727 + $0xe8] sm:$0xff]
      %v2138 = vld [vmem:[%s727 + $0xf0] sm:$0xff]
      %v2139 = vld [vmem:[%s727 + $0xf8] sm:$0xff]
      %v2140 = vld [vmem:[%s727 + $0x100] sm:$0xff]
      %v2141 = vld [vmem:[%s727 + $0x108] sm:$0xff]
      %v2142 = vld [vmem:[%s727 + $0x110] sm:$0xff]
      %v2143 = vld [vmem:[%s727 + $0x118] sm:$0xff]
      %v2144 = vld [vmem:[%s727 + $0x120] sm:$0xff]
      %v2145 = vld [vmem:[%s727 + $0x128] sm:$0xff]
      %v2146 = vld [vmem:[%s727 + $0x130] sm:$0xff]
      %v2147 = vld [vmem:[%s727 + $0x138] sm:$0xff]
      %v2148 = vld [vmem:[%s727 + $0x140] sm:$0xff]
      %v2149 = vld [vmem:[%s727 + $0x148] sm:$0xff]
      %v2150 = vld [vmem:[%s727 + $0x150] sm:$0xff]
      %v2151 = vld [vmem:[%s727 + $0x158] sm:$0xff]
      %v2152 = vld [vmem:[%s727 + $0x160] sm:$0xff]
      %v2153 = vld [vmem:[%s727 + $0x168] sm:$0xff]
      %v2154 = vld [vmem:[%s727 + $0x170] sm:$0xff]
      %v2155 = vld [vmem:[%s727 + $0x178] sm:$0xff]
      %v2156 = vld [vmem:[%s727 + $0x180] sm:$0xff]
      %v2157 = vld [vmem:[%s727 + $0x188] sm:$0xff]
      %v2158 = vld [vmem:[%s727 + $0x190] sm:$0xff]
      %v2159 = vld [vmem:[%s727 + $0x198] sm:$0xff]
      %v2160 = vld [vmem:[%s727 + $0x1a0] sm:$0xff]
      %v2161 = vld [vmem:[%s727 + $0x1a8] sm:$0xff]
      %v2162 = vld [vmem:[%s727 + $0x1b0] sm:$0xff]
      %v2163 = vld [vmem:[%s727 + $0x1b8] sm:$0xff]
      %v2164 = vld [vmem:[%s727 + $0x1c0] sm:$0xff]
      %v2165 = vld [vmem:[%s727 + $0x1c8] sm:$0xff]
      %v2166 = vld [vmem:[%s727 + $0x1d0] sm:$0xff]
      %v2167 = vld [vmem:[%s727 + $0x1d8] sm:$0xff]
      %v2168 = vld [vmem:[%s727 + $0x1e0] sm:$0xff]
      %v2169 = vld [vmem:[%s727 + $0x1e8] sm:$0xff]
      %v2170 = vld [vmem:[%s727 + $0x1f0] sm:$0xff]
      %v2171 = vld [vmem:[%s727 + $0x1f8] sm:$0xff]
      %v2172 = vld [vmem:[%s731] sm:$0xf]
      %v2174 = vlaneseq
      %v2175 = vshrl.u32 %v2174, 7
      %v2176 = vsub.s32 0, %v2175
      %v2177 = vrot.slane %v2172, %v2176
      %v2178 = vlaneseq
      %v2179 = vshrl.u32 %v2178, 7
      %v2180 = vsub.s32 1, %v2179
      %v2181 = vrot.slane %v2172, %v2180
      %v2182 = vlaneseq
      %v2183 = vshrl.u32 %v2182, 7
      %v2184 = vsub.s32 2, %v2183
      %v2185 = vrot.slane %v2172, %v2184
      %v2186 = vlaneseq
      %v2187 = vshrl.u32 %v2186, 7
      %v2188 = vsub.s32 3, %v2187
      %v2189 = vrot.slane %v2172, %v2188
      %2194 = vmatprep.subr.mxu0 %v2109
      %2195 = vmatpush1.msra.mxu0 %v2108
      %2196 = vmatprep.subr.mxu0 %v2113
      %2197 = vmatpush1.msra.mxu0 %v2112
      %2198 = vmatprep.subr.mxu0 %v2117
      %2199 = vmatpush1.msra.mxu0 %v2116
      %2200 = vmatprep.subr.mxu0 %v2121
      %2201 = vmatpush1.msra.mxu0 %v2120
      %2202 = vmatprep.subr.mxu0 %v2125
      %2203 = vmatpush1.msra.mxu0 %v2124
      %2204 = vmatprep.subr.mxu0 %v2129
      %2205 = vmatpush1.msra.mxu0 %v2128
      %2206 = vmatprep.subr.mxu0 %v2133
      %2207 = vmatpush1.msra.mxu0 %v2132
      %2208 = vmatprep.subr.mxu0 %v2137
      %2209 = vmatpush1.msra.mxu0 %v2136
      %2210 = vmatprep.subr.mxu0 %v2141
      %2211 = vmatpush1.msra.mxu0 %v2140
      %2212 = vmatprep.subr.mxu0 %v2145
      %2213 = vmatpush1.msra.mxu0 %v2144
      %2214 = vmatprep.subr.mxu0 %v2149
      %2215 = vmatpush1.msra.mxu0 %v2148
      %2216 = vmatprep.subr.mxu0 %v2153
      %2217 = vmatpush1.msra.mxu0 %v2152
      %2218 = vmatprep.subr.mxu0 %v2157
      %2219 = vmatpush1.msra.mxu0 %v2156
      %2220 = vmatprep.subr.mxu0 %v2161
      %2221 = vmatpush1.msra.mxu0 %v2160
      %2222 = vmatprep.subr.mxu0 %v2165
      %2223 = vmatpush1.msra.mxu0 %v2164
      %2224 = vmatprep.subr.mxu0 %v2169
      %2225 = vmatpush1.msra.mxu0 %v2168
      %2226 = vmatprep.subr.mxu0 0.0
      %2227 = vmatpush1.msra.mxu0 0.0
      %2228 = vmatprep.subr.mxu0 0.0
      %2229 = vmatpush1.msra.mxu0 0.0
      %2230 = vmatprep.subr.mxu0 0.0
      %2231 = vmatpush1.msra.mxu0 0.0
      %2232 = vmatprep.subr.mxu0 0.0
      %2233 = vmatpush1.msra.mxu0 0.0
      %2234 = vmatprep.subr.mxu0 0.0
      %2235 = vmatpush1.msra.mxu0 0.0
      %2236 = vmatprep.subr.mxu0 0.0
      %2237 = vmatpush1.msra.mxu0 0.0
      %2238 = vmatprep.subr.mxu0 0.0
      %2239 = vmatpush1.msra.mxu0 0.0
      %2240 = vmatprep.subr.mxu0 0.0
      %2241 = vmatpush1.msra.mxu0 0.0
      %2242 = vmatprep.subr.mxu0 0.0
      %2243 = vmatpush1.msra.mxu0 0.0
      %2244 = vmatprep.subr.mxu0 0.0
      %2245 = vmatpush1.msra.mxu0 0.0
      %2246 = vmatprep.subr.mxu0 0.0
      %2247 = vmatpush1.msra.mxu0 0.0
      %2248 = vmatprep.subr.mxu0 0.0
      %2249 = vmatpush1.msra.mxu0 0.0
      %2250 = vmatprep.subr.mxu0 0.0
      %2251 = vmatpush1.msra.mxu0 0.0
      %2252 = vmatprep.subr.mxu0 0.0
      %2253 = vmatpush1.msra.mxu0 0.0
      %2254 = vmatprep.subr.mxu0 0.0
      %2255 = vmatpush1.msra.mxu0 0.0
      %2256 = vmatprep.subr.mxu0 0.0
      %2257 = vmatpush1.msra.mxu0 0.0
      %2258 = vmatprep.mubr.f32.mxu0 0.0
      %2259 = vmatmul.mubr.f32.gmra.mrb[0].mxu0 %v2107
      %v2260 = vpop.f32.mrb[0].mxu0
      %v2261 = vadd.f32 %v2177, %v2260
      %v2262 = vpop.f32.mrb[0].mxu0
      %v2263 = vadd.f32 %v2181, %v2262
      %2264 = vdwg.mxu0
      %2265 = vmatprep.subr.mxu0 %v2111
      %2266 = vmatpush1.msra.mxu0 %v2110
      %2267 = vmatprep.subr.mxu0 %v2115
      %2268 = vmatpush1.msra.mxu0 %v2114
      %2269 = vmatprep.subr.mxu0 %v2119
      %2270 = vmatpush1.msra.mxu0 %v2118
      %2271 = vmatprep.subr.mxu0 %v2123
      %2272 = vmatpush1.msra.mxu0 %v2122
      %2273 = vmatprep.subr.mxu0 %v2127
      %2274 = vmatpush1.msra.mxu0 %v2126
      %2275 = vmatprep.subr.mxu0 %v2131
      %2276 = vmatpush1.msra.mxu0 %v2130
      %2277 = vmatprep.subr.mxu0 %v2135
      %2278 = vmatpush1.msra.mxu0 %v2134
      %2279 = vmatprep.subr.mxu0 %v2139
      %2280 = vmatpush1.msra.mxu0 %v2138
      %2281 = vmatprep.subr.mxu0 %v2143
      %2282 = vmatpush1.msra.mxu0 %v2142
      %2283 = vmatprep.subr.mxu0 %v2147
      %2284 = vmatpush1.msra.mxu0 %v2146
      %2285 = vmatprep.subr.mxu0 %v2151
      %2286 = vmatpush1.msra.mxu0 %v2150
      %2287 = vmatprep.subr.mxu0 %v2155
      %2288 = vmatpush1.msra.mxu0 %v2154
      %2289 = vmatprep.subr.mxu0 %v2159
      %2290 = vmatpush1.msra.mxu0 %v2158
      %2291 = vmatprep.subr.mxu0 %v2163
      %2292 = vmatpush1.msra.mxu0 %v2162
      %2293 = vmatprep.subr.mxu0 %v2167
      %2294 = vmatpush1.msra.mxu0 %v2166
      %2295 = vmatprep.subr.mxu0 %v2171
      %2296 = vmatpush1.msra.mxu0 %v2170
      %2297 = vmatprep.subr.mxu0 0.0
      %2298 = vmatpush1.msra.mxu0 0.0
      %2299 = vmatprep.subr.mxu0 0.0
      %2300 = vmatpush1.msra.mxu0 0.0
      %2301 = vmatprep.subr.mxu0 0.0
      %2302 = vmatpush1.msra.mxu0 0.0
      %2303 = vmatprep.subr.mxu0 0.0
      %2304 = vmatpush1.msra.mxu0 0.0
      %2305 = vmatprep.subr.mxu0 0.0
      %2306 = vmatpush1.msra.mxu0 0.0
      %2307 = vmatprep.subr.mxu0 0.0
      %2308 = vmatpush1.msra.mxu0 0.0
      %2309 = vmatprep.subr.mxu0 0.0
      %2310 = vmatpush1.msra.mxu0 0.0
      %2311 = vmatprep.subr.mxu0 0.0
      %2312 = vmatpush1.msra.mxu0 0.0
      %2313 = vmatprep.subr.mxu0 0.0
      %2314 = vmatpush1.msra.mxu0 0.0
      %2315 = vmatprep.subr.mxu0 0.0
      %2316 = vmatpush1.msra.mxu0 0.0
      %2317 = vmatprep.subr.mxu0 0.0
      %2318 = vmatpush1.msra.mxu0 0.0
      %2319 = vmatprep.subr.mxu0 0.0
      %2320 = vmatpush1.msra.mxu0 0.0
      %2321 = vmatprep.subr.mxu0 0.0
      %2322 = vmatpush1.msra.mxu0 0.0
      %2323 = vmatprep.subr.mxu0 0.0
      %2324 = vmatpush1.msra.mxu0 0.0
      %2325 = vmatprep.subr.mxu0 0.0
      %2326 = vmatpush1.msra.mxu0 0.0
      %2327 = vmatprep.subr.mxu0 0.0
      %2328 = vmatpush1.msra.mxu0 0.0
      %2329 = vmatprep.mubr.f32.mxu0 0.0
      %2330 = vmatmul.mubr.f32.gmra.mrb[0].mxu0 %v2107
      %v2331 = vpop.f32.mrb[0].mxu0
      %v2332 = vadd.f32 %v2185, %v2331
      %v2333 = vpop.f32.mrb[0].mxu0
      %v2334 = vadd.f32 %v2189, %v2333
      %2335 = vdwg.mxu0
      %v2336 = vmax.f32 %v2261, 0.0
      %v2337 = vmax.f32 %v2263, 0.0
      %v2338 = vmax.f32 %v2332, 0.0
      %v2339 = vmax.f32 %v2334, 0.0
      %v2340 = vld [vmem:[%s736] sm:$0xff]
      %v2341 = vld [vmem:[%s736 + $0x8] sm:$0xff]
      %v2342 = vld [vmem:[%s736 + $0x10] sm:$0xff]
      %v2343 = vld [vmem:[%s736 + $0x18] sm:$0xff]
      %v2344 = vld [vmem:[%s736 + $0x20] sm:$0xff]
      %v2345 = vld [vmem:[%s736 + $0x28] sm:$0xff]
      %v2346 = vld [vmem:[%s736 + $0x30] sm:$0xff]
      %v2347 = vld [vmem:[%s736 + $0x38] sm:$0xff]
      %v2348 = vld [vmem:[%s736 + $0x40] sm:$0xff]
      %v2349 = vld [vmem:[%s736 + $0x48] sm:$0xff]
      %v2350 = vld [vmem:[%s736 + $0x50] sm:$0xff]
      %v2351 = vld [vmem:[%s736 + $0x58] sm:$0xff]
      %v2352 = vld [vmem:[%s736 + $0x60] sm:$0xff]
      %v2353 = vld [vmem:[%s736 + $0x68] sm:$0xff]
      %v2354 = vld [vmem:[%s736 + $0x70] sm:$0xff]
      %v2355 = vld [vmem:[%s736 + $0x78] sm:$0xff]
      %v2356 = vld [vmem:[%s736 + $0x80] sm:$0xff]
      %v2357 = vld [vmem:[%s736 + $0x88] sm:$0xff]
      %v2358 = vld [vmem:[%s736 + $0x90] sm:$0xff]
      %v2359 = vld [vmem:[%s736 + $0x98] sm:$0xff]
      %v2360 = vld [vmem:[%s736 + $0xa0] sm:$0xff]
      %v2361 = vld [vmem:[%s736 + $0xa8] sm:$0xff]
      %v2362 = vld [vmem:[%s736 + $0xb0] sm:$0xff]
      %v2363 = vld [vmem:[%s736 + $0xb8] sm:$0xff]
      %v2364 = vld [vmem:[%s736 + $0xc0] sm:$0xff]
      %v2365 = vld [vmem:[%s736 + $0xc8] sm:$0xff]
      %v2366 = vld [vmem:[%s736 + $0xd0] sm:$0xff]
      %v2367 = vld [vmem:[%s736 + $0xd8] sm:$0xff]
      %v2368 = vld [vmem:[%s736 + $0xe0] sm:$0xff]
      %v2369 = vld [vmem:[%s736 + $0xe8] sm:$0xff]
      %v2370 = vld [vmem:[%s736 + $0xf0] sm:$0xff]
      %v2371 = vld [vmem:[%s736 + $0xf8] sm:$0xff]
      %v2372 = vld [vmem:[%s736 + $0x100] sm:$0xff]
      %v2373 = vld [vmem:[%s736 + $0x108] sm:$0xff]
      %v2374 = vld [vmem:[%s736 + $0x110] sm:$0xff]
      %v2375 = vld [vmem:[%s736 + $0x118] sm:$0xff]
      %v2376 = vld [vmem:[%s736 + $0x120] sm:$0xff]
      %v2377 = vld [vmem:[%s736 + $0x128] sm:$0xff]
      %v2378 = vld [vmem:[%s736 + $0x130] sm:$0xff]
      %v2379 = vld [vmem:[%s736 + $0x138] sm:$0xff]
      %v2380 = vld [vmem:[%s736 + $0x140] sm:$0xff]
      %v2381 = vld [vmem:[%s736 + $0x148] sm:$0xff]
      %v2382 = vld [vmem:[%s736 + $0x150] sm:$0xff]
      %v2383 = vld [vmem:[%s736 + $0x158] sm:$0xff]
      %v2384 = vld [vmem:[%s736 + $0x160] sm:$0xff]
      %v2385 = vld [vmem:[%s736 + $0x168] sm:$0xff]
      %v2386 = vld [vmem:[%s736 + $0x170] sm:$0xff]
      %v2387 = vld [vmem:[%s736 + $0x178] sm:$0xff]
      %v2388 = vld [vmem:[%s736 + $0x180] sm:$0xff]
      %v2389 = vld [vmem:[%s736 + $0x188] sm:$0xff]
      %v2390 = vld [vmem:[%s736 + $0x190] sm:$0xff]
      %v2391 = vld [vmem:[%s736 + $0x198] sm:$0xff]
      %v2392 = vld [vmem:[%s736 + $0x1a0] sm:$0xff]
      %v2393 = vld [vmem:[%s736 + $0x1a8] sm:$0xff]
      %v2394 = vld [vmem:[%s736 + $0x1b0] sm:$0xff]
      %v2395 = vld [vmem:[%s736 + $0x1b8] sm:$0xff]
      %v2396 = vld [vmem:[%s736 + $0x1c0] sm:$0xff]
      %v2397 = vld [vmem:[%s736 + $0x1c8] sm:$0xff]
      %v2398 = vld [vmem:[%s736 + $0x1d0] sm:$0xff]
      %v2399 = vld [vmem:[%s736 + $0x1d8] sm:$0xff]
      %v2400 = vld [vmem:[%s736 + $0x1e0] sm:$0xff]
      %v2401 = vld [vmem:[%s736 + $0x1e8] sm:$0xff]
      %v2402 = vld [vmem:[%s736 + $0x1f0] sm:$0xff]
      %v2403 = vld [vmem:[%s736 + $0x1f8] sm:$0xff]
      %v2404 = vld [vmem:[%s739] sm:$0x1]
      %v2406 = vlaneseq
      %v2407 = vshrl.u32 %v2406, 7
      %v2408 = vsub.s32 0, %v2407
      %v2409 = vrot.slane %v2404, %v2408
      %2411 = vmatprep.subr.mxu0 0.0
      %2412 = vmatpush1.msra.mxu0 %v2340
      %2413 = vmatprep.subr.mxu0 0.0
      %2414 = vmatpush1.msra.mxu0 %v2341
      %2415 = vmatprep.subr.mxu0 0.0
      %2416 = vmatpush1.msra.mxu0 %v2342
      %2417 = vmatprep.subr.mxu0 0.0
      %2418 = vmatpush1.msra.mxu0 %v2343
      %2419 = vmatprep.subr.mxu0 0.0
      %2420 = vmatpush1.msra.mxu0 %v2344
      %2421 = vmatprep.subr.mxu0 0.0
      %2422 = vmatpush1.msra.mxu0 %v2345
      %2423 = vmatprep.subr.mxu0 0.0
      %2424 = vmatpush1.msra.mxu0 %v2346
      %2425 = vmatprep.subr.mxu0 0.0
      %2426 = vmatpush1.msra.mxu0 %v2347
      %2427 = vmatprep.subr.mxu0 0.0
      %2428 = vmatpush1.msra.mxu0 %v2348
      %2429 = vmatprep.subr.mxu0 0.0
      %2430 = vmatpush1.msra.mxu0 %v2349
      %2431 = vmatprep.subr.mxu0 0.0
      %2432 = vmatpush1.msra.mxu0 %v2350
      %2433 = vmatprep.subr.mxu0 0.0
      %2434 = vmatpush1.msra.mxu0 %v2351
      %2435 = vmatprep.subr.mxu0 0.0
      %2436 = vmatpush1.msra.mxu0 %v2352
      %2437 = vmatprep.subr.mxu0 0.0
      %2438 = vmatpush1.msra.mxu0 %v2353
      %2439 = vmatprep.subr.mxu0 0.0
      %2440 = vmatpush1.msra.mxu0 %v2354
      %2441 = vmatprep.subr.mxu0 0.0
      %2442 = vmatpush1.msra.mxu0 %v2355
      %2443 = vmatprep.subr.mxu0 0.0
      %2444 = vmatpush1.msra.mxu0 %v2356
      %2445 = vmatprep.subr.mxu0 0.0
      %2446 = vmatpush1.msra.mxu0 %v2357
      %2447 = vmatprep.subr.mxu0 0.0
      %2448 = vmatpush1.msra.mxu0 %v2358
      %2449 = vmatprep.subr.mxu0 0.0
      %2450 = vmatpush1.msra.mxu0 %v2359
      %2451 = vmatprep.subr.mxu0 0.0
      %2452 = vmatpush1.msra.mxu0 %v2360
      %2453 = vmatprep.subr.mxu0 0.0
      %2454 = vmatpush1.msra.mxu0 %v2361
      %2455 = vmatprep.subr.mxu0 0.0
      %2456 = vmatpush1.msra.mxu0 %v2362
      %2457 = vmatprep.subr.mxu0 0.0
      %2458 = vmatpush1.msra.mxu0 %v2363
      %2459 = vmatprep.subr.mxu0 0.0
      %2460 = vmatpush1.msra.mxu0 %v2364
      %2461 = vmatprep.subr.mxu0 0.0
      %2462 = vmatpush1.msra.mxu0 %v2365
      %2463 = vmatprep.subr.mxu0 0.0
      %2464 = vmatpush1.msra.mxu0 %v2366
      %2465 = vmatprep.subr.mxu0 0.0
      %2466 = vmatpush1.msra.mxu0 %v2367
      %2467 = vmatprep.subr.mxu0 0.0
      %2468 = vmatpush1.msra.mxu0 %v2368
      %2469 = vmatprep.subr.mxu0 0.0
      %2470 = vmatpush1.msra.mxu0 %v2369
      %2471 = vmatprep.subr.mxu0 0.0
      %2472 = vmatpush1.msra.mxu0 %v2370
      %2473 = vmatprep.subr.mxu0 0.0
      %2474 = vmatpush1.msra.mxu0 %v2371
      %2475 = vmatprep.mubr.f32.mxu0 %v2337
      %2476 = vmatmul.mubr.f32.gmra.mrb[0].mxu0 %v2336
      %v2477 = vpop.f32.mrb[0].mxu0
      %v2478 = vadd.f32 %v2409, %v2477
      %v2479 = vpop.f32.mrb[0].mxu0
      %2480 = vdwg.mxu0
      %2481 = vmatprep.subr.mxu0 0.0
      %2482 = vmatpush1.msra.mxu0 %v2372
      %2483 = vmatprep.subr.mxu0 0.0
      %2484 = vmatpush1.msra.mxu0 %v2373
      %2485 = vmatprep.subr.mxu0 0.0
      %2486 = vmatpush1.msra.mxu0 %v2374
      %2487 = vmatprep.subr.mxu0 0.0
      %2488 = vmatpush1.msra.mxu0 %v2375
      %2489 = vmatprep.subr.mxu0 0.0
      %2490 = vmatpush1.msra.mxu0 %v2376
      %2491 = vmatprep.subr.mxu0 0.0
      %2492 = vmatpush1.msra.mxu0 %v2377
      %2493 = vmatprep.subr.mxu0 0.0
      %2494 = vmatpush1.msra.mxu0 %v2378
      %2495 = vmatprep.subr.mxu0 0.0
      %2496 = vmatpush1.msra.mxu0 %v2379
      %2497 = vmatprep.subr.mxu0 0.0
      %2498 = vmatpush1.msra.mxu0 %v2380
      %2499 = vmatprep.subr.mxu0 0.0
      %2500 = vmatpush1.msra.mxu0 %v2381
      %2501 = vmatprep.subr.mxu0 0.0
      %2502 = vmatpush1.msra.mxu0 %v2382
      %2503 = vmatprep.subr.mxu0 0.0
      %2504 = vmatpush1.msra.mxu0 %v2383
      %2505 = vmatprep.subr.mxu0 0.0
      %2506 = vmatpush1.msra.mxu0 %v2384
      %2507 = vmatprep.subr.mxu0 0.0
      %2508 = vmatpush1.msra.mxu0 %v2385
      %2509 = vmatprep.subr.mxu0 0.0
      %2510 = vmatpush1.msra.mxu0 %v2386
      %2511 = vmatprep.subr.mxu0 0.0
      %2512 = vmatpush1.msra.mxu0 %v2387
      %2513 = vmatprep.subr.mxu0 0.0
      %2514 = vmatpush1.msra.mxu0 %v2388
      %2515 = vmatprep.subr.mxu0 0.0
      %2516 = vmatpush1.msra.mxu0 %v2389
      %2517 = vmatprep.subr.mxu0 0.0
      %2518 = vmatpush1.msra.mxu0 %v2390
      %2519 = vmatprep.subr.mxu0 0.0
      %2520 = vmatpush1.msra.mxu0 %v2391
      %2521 = vmatprep.subr.mxu0 0.0
      %2522 = vmatpush1.msra.mxu0 %v2392
      %2523 = vmatprep.subr.mxu0 0.0
      %2524 = vmatpush1.msra.mxu0 %v2393
      %2525 = vmatprep.subr.mxu0 0.0
      %2526 = vmatpush1.msra.mxu0 %v2394
      %2527 = vmatprep.subr.mxu0 0.0
      %2528 = vmatpush1.msra.mxu0 %v2395
      %2529 = vmatprep.subr.mxu0 0.0
      %2530 = vmatpush1.msra.mxu0 %v2396
      %2531 = vmatprep.subr.mxu0 0.0
      %2532 = vmatpush1.msra.mxu0 %v2397
      %2533 = vmatprep.subr.mxu0 0.0
      %2534 = vmatpush1.msra.mxu0 %v2398
      %2535 = vmatprep.subr.mxu0 0.0
      %2536 = vmatpush1.msra.mxu0 %v2399
      %2537 = vmatprep.subr.mxu0 0.0
      %2538 = vmatpush1.msra.mxu0 %v2400
      %2539 = vmatprep.subr.mxu0 0.0
      %2540 = vmatpush1.msra.mxu0 %v2401
      %2541 = vmatprep.subr.mxu0 0.0
      %2542 = vmatpush1.msra.mxu0 %v2402
      %2543 = vmatprep.subr.mxu0 0.0
      %2544 = vmatpush1.msra.mxu0 %v2403
      %2545 = vmatprep.mubr.f32.mxu0 %v2339
      %2546 = vmatmul.mubr.f32.gmra.mrb[0].mxu0 %v2338
      %v2547 = vpop.f32.mrb[0].mxu0
      %v2548 = vadd.f32 %v2478, %v2547
      %v2549 = vpop.f32.mrb[0].mxu0
      %2550 = vdwg.mxu0
      %v2551 = vadd.f32 %v2548, %v2107
      %v2552 = vld [vmem:[%s742] sm:$0x1]
      %v2553 = vld [vmem:[%s745] sm:$0x1]
      %2554 = vadd.xlane.f32.xlu0 %v2551
      %v2555 = vpop.xlane.xlu0 %2554
      %v2556 = vmul.f32 %v2555, %v2084
      %v2557 = vsub.f32 %v2551, %v2556
      %v2558 = vmul.f32 %v2557, %v2557
      %2559 = vadd.xlane.f32.xlu0 %v2558
      %v2560 = vpop.xlane.xlu0 %2559
      %v2561 = vmul.f32 %v2560, %v2084
      %v2562 = vadd.f32 %v2561, 1e-05
      %v2563 = vrsqrt.pop %v2562
      %v2564 = vmul.f32 %v2557, %v2563
      %v2566 = vlaneseq
      %v2567 = vshrl.u32 %v2566, 7
      %v2568 = vsub.s32 0, %v2567
      %v2569 = vrot.slane %v2552, %v2568
      %v2571 = vmul.f32 %v2564, %v2569
      %v2573 = vlaneseq
      %v2574 = vshrl.u32 %v2573, 7
      %v2575 = vsub.s32 0, %v2574
      %v2576 = vrot.slane %v2553, %v2575
      %v2578 = vadd.f32 %v2571, %v2576
      %2579 = vst [vmem:[%s749] sm:$0xff] %v2578
      %p2580 = scmp.lt.s32.totalorder %s31, 1
      %s2581 = scalar_select %p2580, %s31, 1
      %s2582 = smul.addr %s2581, 8
      %s2583 = scalar_lea.vmem %s16, %s2582
      // Predicated region
      $region89: #{classifier_forward.2} parent=83 // pred_check
        %p2584 = pneg %p463
      $region90: #{classifier_forward.2} parent=83 // pred_check_branch
        %2586 = sbr.rel (%p2584) target = $region92
      $region91: #{classifier_forward.2} parent=83 // pred_region
        _
      $region92: #{classifier_forward.2} parent=83 // pred_fallthru
        _
    $region84: #{classifier_forward.2} parent=5 // pred_fallthru
      _
    %p2587 = scmp.le.s32.totalorder 2, %s22
    // Predicated region
    $region93: #{classifier_forward.2} parent=5 // pred_check
      %p2588 = pneg %p2587
    $region94: #{classifier_forward.2} parent=5 // pred_check_branch
      %2590 = sbr.rel (%p2588) target = $region96
    $region95: #{classifier_forward.2} parent=5 // pred_region
      %s2591 = ssub.s32 %s22, 2
      // Predicated region
      $region97: #{classifier_forward.2} parent=95 // pred_check
        %p2592 = pneg %p469
      $region98: #{classifier_forward.2} parent=95 // pred_check_branch
        %2594 = sbr.rel (%p2592) target = $region100
      $region99: #{classifier_forward.2} parent=95 // pred_region
        %p2595 = scmp.lt.s32.totalorder %s33, 1
        %s2596 = scalar_select %p2595, %s33, 1
        %s2597 = smul.addr %s2596, 8
        %s2598 = scalar_lea.vmem %s16, %s2597
      $region100: #{classifier_forward.2} parent=95 // pred_fallthru
        _
    $region96: #{classifier_forward.2} parent=5 // pred_fallthru
      _
  $region6: #{classifier_forward.2} parent=0 // loop_footer
    %s26 = sadd.s32 1, %s22
  $region7: #{classifier_forward.2} parent=0 // loop_footer_branch
    %21 = sbr.rel target = $region3
  $region8: #{classifier_forward.2} parent=0 // loop_exit
    _

</llo_original>
